<compile_context>
chip_gen: v5e
topology: v5e:2x2
jax: 0.10.0
libtpu: 0.0.40
codegen_flags: <defaults>
</compile_context>

<pallas_src>
import jax
import jax.numpy as jnp
from jax.experimental import pallas as pl
from jax.experimental.pallas import tpu as pltpu


NUM_MU_ITERS = 10
EPS = 1e-8


def _make_chain_kernel(num_layers, n_iters):
    """Kernel over one (m, tn) column tile of X; runs the whole layer chain."""

    def kernel(x_ref, *refs):
        dict_refs = refs[: 2 * num_layers]    # [AT_0, ATA_0, AT_1, ATA_1, ...] (bf16)
        out_refs = refs[2 * num_layers:]      # [S_0, S_1, ...]

        x = x_ref[...].astype(jnp.float32)    # (m, tn) f32
        for li in range(num_layers):
            at = dict_refs[2 * li][...]        # (k, m)  bf16, pre-transposed
            ata = dict_refs[2 * li + 1][...]   # (k, k)  bf16, precomputed Gram

            # A^T X : bf16 operands, f32 accumulation on the MXU (no in-kernel
            # transpose, no f32-emulated multi-pass matmul).
            atx = jnp.dot(at, x.astype(jnp.bfloat16),
                          preferred_element_type=jnp.float32)

            # Nonnegative init, then fixed-count Lee-Seung multiplicative
            # updates:  S <- S * (A^T X) / (A^T A S + eps)
            s0 = jnp.maximum(atx, EPS)

            def mu_step(_, s, atx=atx, ata=ata):
                denom = jnp.dot(ata, s.astype(jnp.bfloat16),
                                preferred_element_type=jnp.float32) + EPS
                # EUP approx reciprocal (separate VLIW slot, ~free) plus one
                # Newton step restores ~f32 accuracy with 2 extra VPU mults.
                r = pl.reciprocal(denom, approx=True)
                r = r * (2.0 - denom * r)
                return s * atx * r

            s = jax.lax.fori_loop(0, n_iters, mu_step, s0, unroll=True)

            out_refs[li][...] = s.astype(out_refs[li].dtype)
            x = s  # next layer consumes this code, all in VMEM/registers

    return kernel


def _vmem_capacity_bytes():
    try:
        return int(pltpu.get_tpu_info().vmem_capacity_bytes)
    except Exception:
        return 64 << 20   # conservative fallback (v7x per-TensorCore size)


def _pick_tile(m, ks, n):
    """Pick the lane-dense sample-tile width tn and the scoped-VMEM limit."""
    cap = _vmem_capacity_bytes()
    # v7x: 64 MiB VMEM per TensorCore, 2 TCs per chip.  v5e/v6e: 128 MiB, 1 TC.
    # (Heuristic keyed off the reported per-core capacity.)
    two_core = cap <= (64 << 20) + (1 << 20)
    vmem_limit = int(min((cap * 3) // 4, 64 << 20))
    target_tn = 2048 if two_core else 4096

    m_list = [m] + list(ks[:-1])
    # Grid-invariant bf16 dictionaries (AT_i, ATA_i), double-buffered.
    dict_bytes = 2 * 2 * sum(k * mi + k * k for k, mi in zip(ks, m_list))
    # Per-sample-column f32 bytes: 2x double-buffered X tile, 2x double-
    # buffered S_i output tiles, ~3 live (k_i, tn) temporaries per layer
    # (atx, s, denom) from the unrolled MU loop.
    per_col_bytes = 4 * (2 * m + 5 * sum(ks))

    usable = int(0.7 * vmem_limit) - dict_bytes          # ~30% headroom
    if usable > per_col_bytes * 128:
        tn_fit = max(128, ((usable // per_col_bytes) // 128) * 128)
    else:
        tn_fit = 128
    tn = min(target_tn, tn_fit)

    n_up = ((n + 127) // 128) * 128
    tn = min(tn, n_up)

    if two_core:
        # v7x: aim for >=4 grid steps (>=2 per TensorCore) so both cores get
        # work and the BlockSpec pipeline can hide the X-tile DMA -- but never
        # shrink tn below 1024 to get there.
        min_tn = min(1024, n_up)
        if n_up // 4 >= min_tn:
            want_steps = 4
        elif n_up // 2 >= min_tn:
            want_steps = 2
        else:
            want_steps = 1
        if want_steps > 1:
            tn = min(tn, max(min_tn, ((n_up // want_steps) // 128) * 128))
    # v5e/v6e: single TC -- splitting only halves the independent lane work
    # per MXU push and adds per-grid-step overhead; keep the biggest tile that
    # fits (pipelining across steps happens naturally once n_up > target_tn).
    return tn, vmem_limit


def _cost_estimate(m, ks, n_pad, n_iters, grid_steps):
    m_list = [m] + list(ks[:-1])
    matmul_flops = 2 * n_pad * sum(k * mi + n_iters * k * k
                                   for k, mi in zip(ks, m_list))
    elementwise_flops = 6 * n_iters * n_pad * sum(ks)
    dict_bytes = 2 * sum(k * mi + k * k for k, mi in zip(ks, m_list))
    return pl.CostEstimate(
        flops=int(matmul_flops + elementwise_flops),
        transcendentals=int(n_iters * n_pad * sum(ks)),
        bytes_accessed=int(4 * n_pad * (m + sum(ks)) + grid_steps * dict_bytes),
    )


def nmfnet_forward(X, A_list, *, tn=None, n_iters=NUM_MU_ITERS):
    """Reproduces nmfNET.forward: chain all layers, return the betalist.

    X: (m, n) nonnegative data.  A_list[i]: (layers[i], layers[i+1]).
    Returns [S_0, S_1, ...] with S_i of shape (layers[i+1], n).
    """
    m, n = X.shape
    num_layers = len(A_list)
    ks = []
    prev = m
    for A in A_list:
        assert A.shape[0] == prev, (A.shape, prev)
        ks.append(A.shape[1])
        prev = A.shape[1]

    # Grid-invariant per-layer operands, computed ONCE in the wrapper and cast
    # to bf16 (native single-pass MXU operand type; accumulation stays f32).
    AT_list = [A.T.astype(jnp.bfloat16) for A in A_list]          # (k_i, m_i)
    ATA_list = [(A.T @ A).astype(jnp.bfloat16) for A in A_list]   # (k_i, k_i)

    tn_auto, vmem_limit = _pick_tile(m, ks, n)
    if tn is None:
        tn = tn_auto

    n_pad = int(pl.cdiv(n, tn)) * tn
    Xp = X if n_pad == n else jnp.pad(X, ((0, 0), (0, n_pad - n)))

    grid_steps = n_pad // tn
    grid = (grid_steps,)

    in_specs = [pl.BlockSpec((m, tn), lambda j: (0, j))]      # X column tile
    operands = [Xp]
    for AT, ATA in zip(AT_list, ATA_list):
        in_specs.append(pl.BlockSpec(AT.shape, lambda j: (0, 0)))   # full A^T
        in_specs.append(pl.BlockSpec(ATA.shape, lambda j: (0, 0)))  # full A^T A
        operands += [AT, ATA]

    out_specs = tuple(pl.BlockSpec((k, tn), lambda j: (0, j)) for k in ks)
    out_shapes = tuple(jax.ShapeDtypeStruct((k, n_pad), X.dtype) for k in ks)

    betas = pl.pallas_call(
        _make_chain_kernel(num_layers, n_iters),
        out_shape=out_shapes,
        grid_spec=pltpu.PrefetchScalarGridSpec(
            num_scalar_prefetch=0,
            grid=grid,
            in_specs=in_specs,
            out_specs=out_specs,
        ),
        compiler_params=pltpu.CompilerParams(
            dimension_semantics=("parallel",),
            vmem_limit_bytes=vmem_limit,
        ),
        cost_estimate=_cost_estimate(m, ks, n_pad, n_iters, grid_steps),
    )(*operands)

    if n_pad != n:
        betas = tuple(b[:, :n] for b in betas)
    return list(betas)


def _nmfnet_reference(X, A_list, n_iters=NUM_MU_ITERS):
    """Pure-JAX reference of the same fixed-iteration MU chain (same bf16
    MXU operands / f32 accumulation / f32 elementwise math as the kernel)."""
    betas = []
    x = X.astype(jnp.float32)
    for A in A_list:
        at = A.T.astype(jnp.bfloat16)
        ata = (A.T @ A).astype(jnp.bfloat16)
        atx = jnp.dot(at, x.astype(jnp.bfloat16),
                      preferred_element_type=jnp.float32)
        s = jnp.maximum(atx, EPS)
        for _ in range(n_iters):
            denom = jnp.dot(ata, s.astype(jnp.bfloat16),
                            preferred_element_type=jnp.float32) + EPS
            s = s * atx / denom
        betas.append(s.astype(X.dtype))
        x = s
    return betas


if __name__ == "__main__":
    # Small deterministic problem: layers = [32, 16, 8], n_samples = 1000
    # (not a multiple of 128, to exercise the padding path).
    layers = [32, 16, 8]
    n_samples = 1000

    key = jax.random.PRNGKey(0)
    kx, k0, k1 = jax.random.split(key, 3)

    # NMF operates on nonnegative data / dictionaries.
    X = jnp.abs(jax.random.normal(kx, (layers[0], n_samples), dtype=jnp.float32))
    A_list = [
        jnp.abs(jax.random.normal(k0, (layers[0], layers[1]), dtype=jnp.float32)),
        jnp.abs(jax.random.normal(k1, (layers[1], layers[2]), dtype=jnp.float32)),
    ]

    betalist = nmfnet_forward(X, A_list)
    for b in betalist:
        jax.block_until_ready(b)

    # Sanity check against a pure-JAX reference of the same computation.
    ref_list = _nmfnet_reference(X, A_list)
    for beta, ref in zip(betalist, ref_list):
        assert beta.shape == ref.shape, (beta.shape, ref.shape)
        assert jnp.allclose(beta, ref, rtol=1e-3, atol=1e-3), "mismatch vs reference"

    print("KERNEL_OK")
</pallas_src>

<mosaic_0001>
module attributes {stable_mosaic.version = 11 : i64} {
  func.func @kernel(%arg0: i32, %arg1: memref<32x1024xf32, #tpu.memory_space<vmem>>, %arg2: memref<16x32xbf16, #tpu.memory_space<vmem>>, %arg3: memref<16x16xbf16, #tpu.memory_space<vmem>>, %arg4: memref<8x16xbf16, #tpu.memory_space<vmem>>, %arg5: memref<8x8xbf16, #tpu.memory_space<vmem>>, %arg6: memref<16x1024xf32, #tpu.memory_space<vmem>>, %arg7: memref<8x1024xf32, #tpu.memory_space<vmem>>) attributes {dimension_semantics = [#tpu.dimension_semantics<parallel>], iteration_bounds = array<i64: 1>, scalar_prefetch = 0 : i64, scratch_operands = 0 : i64, tpu.core_type = #tpu.core_type<tc>, window_params = [{transform_indices = @transform_0, window_bounds = array<i64: 32, 1024>}, {pipeline_mode = #tpu.pipeline_mode<synchronous>, transform_indices = @transform_1, window_bounds = array<i64: 16, 32>}, {pipeline_mode = #tpu.pipeline_mode<synchronous>, transform_indices = @transform_2, window_bounds = array<i64: 16, 16>}, {pipeline_mode = #tpu.pipeline_mode<synchronous>, transform_indices = @transform_3, window_bounds = array<i64: 8, 16>}, {pipeline_mode = #tpu.pipeline_mode<synchronous>, transform_indices = @transform_4, window_bounds = array<i64: 8, 8>}, {transform_indices = @transform_5, window_bounds = array<i64: 16, 1024>}, {transform_indices = @transform_6, window_bounds = array<i64: 8, 1024>}]} {
    %c0 = arith.constant 0 : index
    %c0_0 = arith.constant 0 : index
    %0 = vector.load %arg1[%c0, %c0_0] : memref<32x1024xf32, #tpu.memory_space<vmem>>, vector<32x1024xf32>
    %c0_1 = arith.constant 0 : index
    %c0_2 = arith.constant 0 : index
    %1 = vector.load %arg2[%c0_1, %c0_2] : memref<16x32xbf16, #tpu.memory_space<vmem>>, vector<16x32xbf16>
    %c0_3 = arith.constant 0 : index
    %c0_4 = arith.constant 0 : index
    %2 = vector.load %arg3[%c0_3, %c0_4] : memref<16x16xbf16, #tpu.memory_space<vmem>>, vector<16x16xbf16>
    %3 = arith.truncf %0 : vector<32x1024xf32> to vector<32x1024xbf16>
    %cst = arith.constant dense<0.000000e+00> : vector<16x1024xf32>
    %4 = tpu.matmul %1, %3, %cst {dimension_numbers = #tpu.dot_dimension_numbers<[1], [0], [0], [1], [0, 0, 1, 1], [], []>} : vector<16x32xbf16>, vector<32x1024xbf16>, vector<16x1024xf32> -> vector<16x1024xf32>
    %cst_5 = arith.constant 9.99999993E-9 : f32
    %5 = vector.broadcast %cst_5 : f32 to vector<16x1024xf32>
    %6 = arith.maximumf %4, %5 : vector<16x1024xf32>
    %c0_i32 = arith.constant 0 : i32
    %7 = arith.truncf %6 : vector<16x1024xf32> to vector<16x1024xbf16>
    %cst_6 = arith.constant dense<0.000000e+00> : vector<16x1024xf32>
    %8 = tpu.matmul %2, %7, %cst_6 {dimension_numbers = #tpu.dot_dimension_numbers<[1], [0], [0], [1], [0, 0, 1, 1], [], []>} : vector<16x16xbf16>, vector<16x1024xbf16>, vector<16x1024xf32> -> vector<16x1024xf32>
    %cst_7 = arith.constant 9.99999993E-9 : f32
    %9 = vector.broadcast %cst_7 : f32 to vector<16x1024xf32>
    %10 = arith.addf %8, %9 : vector<16x1024xf32>
    %11 = tpu.reciprocal %10 {approx = true} : vector<16x1024xf32> -> vector<16x1024xf32>
    %12 = arith.mulf %10, %11 : vector<16x1024xf32>
    %cst_8 = arith.constant 2.000000e+00 : f32
    %13 = vector.broadcast %cst_8 : f32 to vector<16x1024xf32>
    %14 = arith.subf %13, %12 : vector<16x1024xf32>
    %15 = arith.mulf %11, %14 : vector<16x1024xf32>
    %16 = arith.mulf %6, %4 : vector<16x1024xf32>
    %17 = arith.mulf %16, %15 : vector<16x1024xf32>
    %c1_i32 = arith.constant 1 : i32
    %18 = arith.truncf %17 : vector<16x1024xf32> to vector<16x1024xbf16>
    %cst_9 = arith.constant dense<0.000000e+00> : vector<16x1024xf32>
    %19 = tpu.matmul %2, %18, %cst_9 {dimension_numbers = #tpu.dot_dimension_numbers<[1], [0], [0], [1], [0, 0, 1, 1], [], []>} : vector<16x16xbf16>, vector<16x1024xbf16>, vector<16x1024xf32> -> vector<16x1024xf32>
    %cst_10 = arith.constant 9.99999993E-9 : f32
    %20 = vector.broadcast %cst_10 : f32 to vector<16x1024xf32>
    %21 = arith.addf %19, %20 : vector<16x1024xf32>
    %22 = tpu.reciprocal %21 {approx = true} : vector<16x1024xf32> -> vector<16x1024xf32>
    %23 = arith.mulf %21, %22 : vector<16x1024xf32>
    %cst_11 = arith.constant 2.000000e+00 : f32
    %24 = vector.broadcast %cst_11 : f32 to vector<16x1024xf32>
    %25 = arith.subf %24, %23 : vector<16x1024xf32>
    %26 = arith.mulf %22, %25 : vector<16x1024xf32>
    %27 = arith.mulf %17, %4 : vector<16x1024xf32>
    %28 = arith.mulf %27, %26 : vector<16x1024xf32>
    %c2_i32 = arith.constant 2 : i32
    %29 = arith.truncf %28 : vector<16x1024xf32> to vector<16x1024xbf16>
    %cst_12 = arith.constant dense<0.000000e+00> : vector<16x1024xf32>
    %30 = tpu.matmul %2, %29, %cst_12 {dimension_numbers = #tpu.dot_dimension_numbers<[1], [0], [0], [1], [0, 0, 1, 1], [], []>} : vector<16x16xbf16>, vector<16x1024xbf16>, vector<16x1024xf32> -> vector<16x1024xf32>
    %cst_13 = arith.constant 9.99999993E-9 : f32
    %31 = vector.broadcast %cst_13 : f32 to vector<16x1024xf32>
    %32 = arith.addf %30, %31 : vector<16x1024xf32>
    %33 = tpu.reciprocal %32 {approx = true} : vector<16x1024xf32> -> vector<16x1024xf32>
    %34 = arith.mulf %32, %33 : vector<16x1024xf32>
    %cst_14 = arith.constant 2.000000e+00 : f32
    %35 = vector.broadcast %cst_14 : f32 to vector<16x1024xf32>
    %36 = arith.subf %35, %34 : vector<16x1024xf32>
    %37 = arith.mulf %33, %36 : vector<16x1024xf32>
    %38 = arith.mulf %28, %4 : vector<16x1024xf32>
    %39 = arith.mulf %38, %37 : vector<16x1024xf32>
    %c3_i32 = arith.constant 3 : i32
    %40 = arith.truncf %39 : vector<16x1024xf32> to vector<16x1024xbf16>
    %cst_15 = arith.constant dense<0.000000e+00> : vector<16x1024xf32>
    %41 = tpu.matmul %2, %40, %cst_15 {dimension_numbers = #tpu.dot_dimension_numbers<[1], [0], [0], [1], [0, 0, 1, 1], [], []>} : vector<16x16xbf16>, vector<16x1024xbf16>, vector<16x1024xf32> -> vector<16x1024xf32>
    %cst_16 = arith.constant 9.99999993E-9 : f32
    %42 = vector.broadcast %cst_16 : f32 to vector<16x1024xf32>
    %43 = arith.addf %41, %42 : vector<16x1024xf32>
    %44 = tpu.reciprocal %43 {approx = true} : vector<16x1024xf32> -> vector<16x1024xf32>
    %45 = arith.mulf %43, %44 : vector<16x1024xf32>
    %cst_17 = arith.constant 2.000000e+00 : f32
    %46 = vector.broadcast %cst_17 : f32 to vector<16x1024xf32>
    %47 = arith.subf %46, %45 : vector<16x1024xf32>
    %48 = arith.mulf %44, %47 : vector<16x1024xf32>
    %49 = arith.mulf %39, %4 : vector<16x1024xf32>
    %50 = arith.mulf %49, %48 : vector<16x1024xf32>
    %c4_i32 = arith.constant 4 : i32
    %51 = arith.truncf %50 : vector<16x1024xf32> to vector<16x1024xbf16>
    %cst_18 = arith.constant dense<0.000000e+00> : vector<16x1024xf32>
    %52 = tpu.matmul %2, %51, %cst_18 {dimension_numbers = #tpu.dot_dimension_numbers<[1], [0], [0], [1], [0, 0, 1, 1], [], []>} : vector<16x16xbf16>, vector<16x1024xbf16>, vector<16x1024xf32> -> vector<16x1024xf32>
    %cst_19 = arith.constant 9.99999993E-9 : f32
    %53 = vector.broadcast %cst_19 : f32 to vector<16x1024xf32>
    %54 = arith.addf %52, %53 : vector<16x1024xf32>
    %55 = tpu.reciprocal %54 {approx = true} : vector<16x1024xf32> -> vector<16x1024xf32>
    %56 = arith.mulf %54, %55 : vector<16x1024xf32>
    %cst_20 = arith.constant 2.000000e+00 : f32
    %57 = vector.broadcast %cst_20 : f32 to vector<16x1024xf32>
    %58 = arith.subf %57, %56 : vector<16x1024xf32>
    %59 = arith.mulf %55, %58 : vector<16x1024xf32>
    %60 = arith.mulf %50, %4 : vector<16x1024xf32>
    %61 = arith.mulf %60, %59 : vector<16x1024xf32>
    %c5_i32 = arith.constant 5 : i32
    %62 = arith.truncf %61 : vector<16x1024xf32> to vector<16x1024xbf16>
    %cst_21 = arith.constant dense<0.000000e+00> : vector<16x1024xf32>
    %63 = tpu.matmul %2, %62, %cst_21 {dimension_numbers = #tpu.dot_dimension_numbers<[1], [0], [0], [1], [0, 0, 1, 1], [], []>} : vector<16x16xbf16>, vector<16x1024xbf16>, vector<16x1024xf32> -> vector<16x1024xf32>
    %cst_22 = arith.constant 9.99999993E-9 : f32
    %64 = vector.broadcast %cst_22 : f32 to vector<16x1024xf32>
    %65 = arith.addf %63, %64 : vector<16x1024xf32>
    %66 = tpu.reciprocal %65 {approx = true} : vector<16x1024xf32> -> vector<16x1024xf32>
    %67 = arith.mulf %65, %66 : vector<16x1024xf32>
    %cst_23 = arith.constant 2.000000e+00 : f32
    %68 = vector.broadcast %cst_23 : f32 to vector<16x1024xf32>
    %69 = arith.subf %68, %67 : vector<16x1024xf32>
    %70 = arith.mulf %66, %69 : vector<16x1024xf32>
    %71 = arith.mulf %61, %4 : vector<16x1024xf32>
    %72 = arith.mulf %71, %70 : vector<16x1024xf32>
    %c6_i32 = arith.constant 6 : i32
    %73 = arith.truncf %72 : vector<16x1024xf32> to vector<16x1024xbf16>
    %cst_24 = arith.constant dense<0.000000e+00> : vector<16x1024xf32>
    %74 = tpu.matmul %2, %73, %cst_24 {dimension_numbers = #tpu.dot_dimension_numbers<[1], [0], [0], [1], [0, 0, 1, 1], [], []>} : vector<16x16xbf16>, vector<16x1024xbf16>, vector<16x1024xf32> -> vector<16x1024xf32>
    %cst_25 = arith.constant 9.99999993E-9 : f32
    %75 = vector.broadcast %cst_25 : f32 to vector<16x1024xf32>
    %76 = arith.addf %74, %75 : vector<16x1024xf32>
    %77 = tpu.reciprocal %76 {approx = true} : vector<16x1024xf32> -> vector<16x1024xf32>
    %78 = arith.mulf %76, %77 : vector<16x1024xf32>
    %cst_26 = arith.constant 2.000000e+00 : f32
    %79 = vector.broadcast %cst_26 : f32 to vector<16x1024xf32>
    %80 = arith.subf %79, %78 : vector<16x1024xf32>
    %81 = arith.mulf %77, %80 : vector<16x1024xf32>
    %82 = arith.mulf %72, %4 : vector<16x1024xf32>
    %83 = arith.mulf %82, %81 : vector<16x1024xf32>
    %c7_i32 = arith.constant 7 : i32
    %84 = arith.truncf %83 : vector<16x1024xf32> to vector<16x1024xbf16>
    %cst_27 = arith.constant dense<0.000000e+00> : vector<16x1024xf32>
    %85 = tpu.matmul %2, %84, %cst_27 {dimension_numbers = #tpu.dot_dimension_numbers<[1], [0], [0], [1], [0, 0, 1, 1], [], []>} : vector<16x16xbf16>, vector<16x1024xbf16>, vector<16x1024xf32> -> vector<16x1024xf32>
    %cst_28 = arith.constant 9.99999993E-9 : f32
    %86 = vector.broadcast %cst_28 : f32 to vector<16x1024xf32>
    %87 = arith.addf %85, %86 : vector<16x1024xf32>
    %88 = tpu.reciprocal %87 {approx = true} : vector<16x1024xf32> -> vector<16x1024xf32>
    %89 = arith.mulf %87, %88 : vector<16x1024xf32>
    %cst_29 = arith.constant 2.000000e+00 : f32
    %90 = vector.broadcast %cst_29 : f32 to vector<16x1024xf32>
    %91 = arith.subf %90, %89 : vector<16x1024xf32>
    %92 = arith.mulf %88, %91 : vector<16x1024xf32>
    %93 = arith.mulf %83, %4 : vector<16x1024xf32>
    %94 = arith.mulf %93, %92 : vector<16x1024xf32>
    %c8_i32 = arith.constant 8 : i32
    %95 = arith.truncf %94 : vector<16x1024xf32> to vector<16x1024xbf16>
    %cst_30 = arith.constant dense<0.000000e+00> : vector<16x1024xf32>
    %96 = tpu.matmul %2, %95, %cst_30 {dimension_numbers = #tpu.dot_dimension_numbers<[1], [0], [0], [1], [0, 0, 1, 1], [], []>} : vector<16x16xbf16>, vector<16x1024xbf16>, vector<16x1024xf32> -> vector<16x1024xf32>
    %cst_31 = arith.constant 9.99999993E-9 : f32
    %97 = vector.broadcast %cst_31 : f32 to vector<16x1024xf32>
    %98 = arith.addf %96, %97 : vector<16x1024xf32>
    %99 = tpu.reciprocal %98 {approx = true} : vector<16x1024xf32> -> vector<16x1024xf32>
    %100 = arith.mulf %98, %99 : vector<16x1024xf32>
    %cst_32 = arith.constant 2.000000e+00 : f32
    %101 = vector.broadcast %cst_32 : f32 to vector<16x1024xf32>
    %102 = arith.subf %101, %100 : vector<16x1024xf32>
    %103 = arith.mulf %99, %102 : vector<16x1024xf32>
    %104 = arith.mulf %94, %4 : vector<16x1024xf32>
    %105 = arith.mulf %104, %103 : vector<16x1024xf32>
    %c9_i32 = arith.constant 9 : i32
    %106 = arith.truncf %105 : vector<16x1024xf32> to vector<16x1024xbf16>
    %cst_33 = arith.constant dense<0.000000e+00> : vector<16x1024xf32>
    %107 = tpu.matmul %2, %106, %cst_33 {dimension_numbers = #tpu.dot_dimension_numbers<[1], [0], [0], [1], [0, 0, 1, 1], [], []>} : vector<16x16xbf16>, vector<16x1024xbf16>, vector<16x1024xf32> -> vector<16x1024xf32>
    %cst_34 = arith.constant 9.99999993E-9 : f32
    %108 = vector.broadcast %cst_34 : f32 to vector<16x1024xf32>
    %109 = arith.addf %107, %108 : vector<16x1024xf32>
    %110 = tpu.reciprocal %109 {approx = true} : vector<16x1024xf32> -> vector<16x1024xf32>
    %111 = arith.mulf %109, %110 : vector<16x1024xf32>
    %cst_35 = arith.constant 2.000000e+00 : f32
    %112 = vector.broadcast %cst_35 : f32 to vector<16x1024xf32>
    %113 = arith.subf %112, %111 : vector<16x1024xf32>
    %114 = arith.mulf %110, %113 : vector<16x1024xf32>
    %115 = arith.mulf %105, %4 : vector<16x1024xf32>
    %116 = arith.mulf %115, %114 : vector<16x1024xf32>
    %c0_36 = arith.constant 0 : index
    %c0_37 = arith.constant 0 : index
    %117 = vector.load %arg6[%c0_36, %c0_37] : memref<16x1024xf32, #tpu.memory_space<vmem>>, vector<16x1024xf32>
    tpu.vector_store %arg6[%c0_36, %c0_37], %116 {strides = array<i32>} : memref<16x1024xf32, #tpu.memory_space<vmem>>, vector<16x1024xf32>,
    %c0_38 = arith.constant 0 : index
    %c0_39 = arith.constant 0 : index
    %118 = vector.load %arg4[%c0_38, %c0_39] : memref<8x16xbf16, #tpu.memory_space<vmem>>, vector<8x16xbf16>
    %c0_40 = arith.constant 0 : index
    %c0_41 = arith.constant 0 : index
    %119 = vector.load %arg5[%c0_40, %c0_41] : memref<8x8xbf16, #tpu.memory_space<vmem>>, vector<8x8xbf16>
    %120 = arith.truncf %116 : vector<16x1024xf32> to vector<16x1024xbf16>
    %cst_42 = arith.constant dense<0.000000e+00> : vector<8x1024xf32>
    %121 = tpu.matmul %118, %120, %cst_42 {dimension_numbers = #tpu.dot_dimension_numbers<[1], [0], [0], [1], [0, 0, 1, 1], [], []>} : vector<8x16xbf16>, vector<16x1024xbf16>, vector<8x1024xf32> -> vector<8x1024xf32>
    %cst_43 = arith.constant 9.99999993E-9 : f32
    %122 = vector.broadcast %cst_43 : f32 to vector<8x1024xf32>
    %123 = arith.maximumf %121, %122 : vector<8x1024xf32>
    %c0_i32_44 = arith.constant 0 : i32
    %124 = arith.truncf %123 : vector<8x1024xf32> to vector<8x1024xbf16>
    %cst_45 = arith.constant dense<0.000000e+00> : vector<8x1024xf32>
    %125 = tpu.matmul %119, %124, %cst_45 {dimension_numbers = #tpu.dot_dimension_numbers<[1], [0], [0], [1], [0, 0, 1, 1], [], []>} : vector<8x8xbf16>, vector<8x1024xbf16>, vector<8x1024xf32> -> vector<8x1024xf32>
    %cst_46 = arith.constant 9.99999993E-9 : f32
    %126 = vector.broadcast %cst_46 : f32 to vector<8x1024xf32>
    %127 = arith.addf %125, %126 : vector<8x1024xf32>
    %128 = tpu.reciprocal %127 {approx = true} : vector<8x1024xf32> -> vector<8x1024xf32>
    %129 = arith.mulf %127, %128 : vector<8x1024xf32>
    %cst_47 = arith.constant 2.000000e+00 : f32
    %130 = vector.broadcast %cst_47 : f32 to vector<8x1024xf32>
    %131 = arith.subf %130, %129 : vector<8x1024xf32>
    %132 = arith.mulf %128, %131 : vector<8x1024xf32>
    %133 = arith.mulf %123, %121 : vector<8x1024xf32>
    %134 = arith.mulf %133, %132 : vector<8x1024xf32>
    %c1_i32_48 = arith.constant 1 : i32
    %135 = arith.truncf %134 : vector<8x1024xf32> to vector<8x1024xbf16>
    %cst_49 = arith.constant dense<0.000000e+00> : vector<8x1024xf32>
    %136 = tpu.matmul %119, %135, %cst_49 {dimension_numbers = #tpu.dot_dimension_numbers<[1], [0], [0], [1], [0, 0, 1, 1], [], []>} : vector<8x8xbf16>, vector<8x1024xbf16>, vector<8x1024xf32> -> vector<8x1024xf32>
    %cst_50 = arith.constant 9.99999993E-9 : f32
    %137 = vector.broadcast %cst_50 : f32 to vector<8x1024xf32>
    %138 = arith.addf %136, %137 : vector<8x1024xf32>
    %139 = tpu.reciprocal %138 {approx = true} : vector<8x1024xf32> -> vector<8x1024xf32>
    %140 = arith.mulf %138, %139 : vector<8x1024xf32>
    %cst_51 = arith.constant 2.000000e+00 : f32
    %141 = vector.broadcast %cst_51 : f32 to vector<8x1024xf32>
    %142 = arith.subf %141, %140 : vector<8x1024xf32>
    %143 = arith.mulf %139, %142 : vector<8x1024xf32>
    %144 = arith.mulf %134, %121 : vector<8x1024xf32>
    %145 = arith.mulf %144, %143 : vector<8x1024xf32>
    %c2_i32_52 = arith.constant 2 : i32
    %146 = arith.truncf %145 : vector<8x1024xf32> to vector<8x1024xbf16>
    %cst_53 = arith.constant dense<0.000000e+00> : vector<8x1024xf32>
    %147 = tpu.matmul %119, %146, %cst_53 {dimension_numbers = #tpu.dot_dimension_numbers<[1], [0], [0], [1], [0, 0, 1, 1], [], []>} : vector<8x8xbf16>, vector<8x1024xbf16>, vector<8x1024xf32> -> vector<8x1024xf32>
    %cst_54 = arith.constant 9.99999993E-9 : f32
    %148 = vector.broadcast %cst_54 : f32 to vector<8x1024xf32>
    %149 = arith.addf %147, %148 : vector<8x1024xf32>
    %150 = tpu.reciprocal %149 {approx = true} : vector<8x1024xf32> -> vector<8x1024xf32>
    %151 = arith.mulf %149, %150 : vector<8x1024xf32>
    %cst_55 = arith.constant 2.000000e+00 : f32
    %152 = vector.broadcast %cst_55 : f32 to vector<8x1024xf32>
    %153 = arith.subf %152, %151 : vector<8x1024xf32>
    %154 = arith.mulf %150, %153 : vector<8x1024xf32>
    %155 = arith.mulf %145, %121 : vector<8x1024xf32>
    %156 = arith.mulf %155, %154 : vector<8x1024xf32>
    %c3_i32_56 = arith.constant 3 : i32
    %157 = arith.truncf %156 : vector<8x1024xf32> to vector<8x1024xbf16>
    %cst_57 = arith.constant dense<0.000000e+00> : vector<8x1024xf32>
    %158 = tpu.matmul %119, %157, %cst_57 {dimension_numbers = #tpu.dot_dimension_numbers<[1], [0], [0], [1], [0, 0, 1, 1], [], []>} : vector<8x8xbf16>, vector<8x1024xbf16>, vector<8x1024xf32> -> vector<8x1024xf32>
    %cst_58 = arith.constant 9.99999993E-9 : f32
    %159 = vector.broadcast %cst_58 : f32 to vector<8x1024xf32>
    %160 = arith.addf %158, %159 : vector<8x1024xf32>
    %161 = tpu.reciprocal %160 {approx = true} : vector<8x1024xf32> -> vector<8x1024xf32>
    %162 = arith.mulf %160, %161 : vector<8x1024xf32>
    %cst_59 = arith.constant 2.000000e+00 : f32
    %163 = vector.broadcast %cst_59 : f32 to vector<8x1024xf32>
    %164 = arith.subf %163, %162 : vector<8x1024xf32>
    %165 = arith.mulf %161, %164 : vector<8x1024xf32>
    %166 = arith.mulf %156, %121 : vector<8x1024xf32>
    %167 = arith.mulf %166, %165 : vector<8x1024xf32>
    %c4_i32_60 = arith.constant 4 : i32
    %168 = arith.truncf %167 : vector<8x1024xf32> to vector<8x1024xbf16>
    %cst_61 = arith.constant dense<0.000000e+00> : vector<8x1024xf32>
    %169 = tpu.matmul %119, %168, %cst_61 {dimension_numbers = #tpu.dot_dimension_numbers<[1], [0], [0], [1], [0, 0, 1, 1], [], []>} : vector<8x8xbf16>, vector<8x1024xbf16>, vector<8x1024xf32> -> vector<8x1024xf32>
    %cst_62 = arith.constant 9.99999993E-9 : f32
    %170 = vector.broadcast %cst_62 : f32 to vector<8x1024xf32>
    %171 = arith.addf %169, %170 : vector<8x1024xf32>
    %172 = tpu.reciprocal %171 {approx = true} : vector<8x1024xf32> -> vector<8x1024xf32>
    %173 = arith.mulf %171, %172 : vector<8x1024xf32>
    %cst_63 = arith.constant 2.000000e+00 : f32
    %174 = vector.broadcast %cst_63 : f32 to vector<8x1024xf32>
    %175 = arith.subf %174, %173 : vector<8x1024xf32>
    %176 = arith.mulf %172, %175 : vector<8x1024xf32>
    %177 = arith.mulf %167, %121 : vector<8x1024xf32>
    %178 = arith.mulf %177, %176 : vector<8x1024xf32>
    %c5_i32_64 = arith.constant 5 : i32
    %179 = arith.truncf %178 : vector<8x1024xf32> to vector<8x1024xbf16>
    %cst_65 = arith.constant dense<0.000000e+00> : vector<8x1024xf32>
    %180 = tpu.matmul %119, %179, %cst_65 {dimension_numbers = #tpu.dot_dimension_numbers<[1], [0], [0], [1], [0, 0, 1, 1], [], []>} : vector<8x8xbf16>, vector<8x1024xbf16>, vector<8x1024xf32> -> vector<8x1024xf32>
    %cst_66 = arith.constant 9.99999993E-9 : f32
    %181 = vector.broadcast %cst_66 : f32 to vector<8x1024xf32>
    %182 = arith.addf %180, %181 : vector<8x1024xf32>
    %183 = tpu.reciprocal %182 {approx = true} : vector<8x1024xf32> -> vector<8x1024xf32>
    %184 = arith.mulf %182, %183 : vector<8x1024xf32>
    %cst_67 = arith.constant 2.000000e+00 : f32
    %185 = vector.broadcast %cst_67 : f32 to vector<8x1024xf32>
    %186 = arith.subf %185, %184 : vector<8x1024xf32>
    %187 = arith.mulf %183, %186 : vector<8x1024xf32>
    %188 = arith.mulf %178, %121 : vector<8x1024xf32>
    %189 = arith.mulf %188, %187 : vector<8x1024xf32>
    %c6_i32_68 = arith.constant 6 : i32
    %190 = arith.truncf %189 : vector<8x1024xf32> to vector<8x1024xbf16>
    %cst_69 = arith.constant dense<0.000000e+00> : vector<8x1024xf32>
    %191 = tpu.matmul %119, %190, %cst_69 {dimension_numbers = #tpu.dot_dimension_numbers<[1], [0], [0], [1], [0, 0, 1, 1], [], []>} : vector<8x8xbf16>, vector<8x1024xbf16>, vector<8x1024xf32> -> vector<8x1024xf32>
    %cst_70 = arith.constant 9.99999993E-9 : f32
    %192 = vector.broadcast %cst_70 : f32 to vector<8x1024xf32>
    %193 = arith.addf %191, %192 : vector<8x1024xf32>
    %194 = tpu.reciprocal %193 {approx = true} : vector<8x1024xf32> -> vector<8x1024xf32>
    %195 = arith.mulf %193, %194 : vector<8x1024xf32>
    %cst_71 = arith.constant 2.000000e+00 : f32
    %196 = vector.broadcast %cst_71 : f32 to vector<8x1024xf32>
    %197 = arith.subf %196, %195 : vector<8x1024xf32>
    %198 = arith.mulf %194, %197 : vector<8x1024xf32>
    %199 = arith.mulf %189, %121 : vector<8x1024xf32>
    %200 = arith.mulf %199, %198 : vector<8x1024xf32>
    %c7_i32_72 = arith.constant 7 : i32
    %201 = arith.truncf %200 : vector<8x1024xf32> to vector<8x1024xbf16>
    %cst_73 = arith.constant dense<0.000000e+00> : vector<8x1024xf32>
    %202 = tpu.matmul %119, %201, %cst_73 {dimension_numbers = #tpu.dot_dimension_numbers<[1], [0], [0], [1], [0, 0, 1, 1], [], []>} : vector<8x8xbf16>, vector<8x1024xbf16>, vector<8x1024xf32> -> vector<8x1024xf32>
    %cst_74 = arith.constant 9.99999993E-9 : f32
    %203 = vector.broadcast %cst_74 : f32 to vector<8x1024xf32>
    %204 = arith.addf %202, %203 : vector<8x1024xf32>
    %205 = tpu.reciprocal %204 {approx = true} : vector<8x1024xf32> -> vector<8x1024xf32>
    %206 = arith.mulf %204, %205 : vector<8x1024xf32>
    %cst_75 = arith.constant 2.000000e+00 : f32
    %207 = vector.broadcast %cst_75 : f32 to vector<8x1024xf32>
    %208 = arith.subf %207, %206 : vector<8x1024xf32>
    %209 = arith.mulf %205, %208 : vector<8x1024xf32>
    %210 = arith.mulf %200, %121 : vector<8x1024xf32>
    %211 = arith.mulf %210, %209 : vector<8x1024xf32>
    %c8_i32_76 = arith.constant 8 : i32
    %212 = arith.truncf %211 : vector<8x1024xf32> to vector<8x1024xbf16>
    %cst_77 = arith.constant dense<0.000000e+00> : vector<8x1024xf32>
    %213 = tpu.matmul %119, %212, %cst_77 {dimension_numbers = #tpu.dot_dimension_numbers<[1], [0], [0], [1], [0, 0, 1, 1], [], []>} : vector<8x8xbf16>, vector<8x1024xbf16>, vector<8x1024xf32> -> vector<8x1024xf32>
    %cst_78 = arith.constant 9.99999993E-9 : f32
    %214 = vector.broadcast %cst_78 : f32 to vector<8x1024xf32>
    %215 = arith.addf %213, %214 : vector<8x1024xf32>
    %216 = tpu.reciprocal %215 {approx = true} : vector<8x1024xf32> -> vector<8x1024xf32>
    %217 = arith.mulf %215, %216 : vector<8x1024xf32>
    %cst_79 = arith.constant 2.000000e+00 : f32
    %218 = vector.broadcast %cst_79 : f32 to vector<8x1024xf32>
    %219 = arith.subf %218, %217 : vector<8x1024xf32>
    %220 = arith.mulf %216, %219 : vector<8x1024xf32>
    %221 = arith.mulf %211, %121 : vector<8x1024xf32>
    %222 = arith.mulf %221, %220 : vector<8x1024xf32>
    %c9_i32_80 = arith.constant 9 : i32
    %223 = arith.truncf %222 : vector<8x1024xf32> to vector<8x1024xbf16>
    %cst_81 = arith.constant dense<0.000000e+00> : vector<8x1024xf32>
    %224 = tpu.matmul %119, %223, %cst_81 {dimension_numbers = #tpu.dot_dimension_numbers<[1], [0], [0], [1], [0, 0, 1, 1], [], []>} : vector<8x8xbf16>, vector<8x1024xbf16>, vector<8x1024xf32> -> vector<8x1024xf32>
    %cst_82 = arith.constant 9.99999993E-9 : f32
    %225 = vector.broadcast %cst_82 : f32 to vector<8x1024xf32>
    %226 = arith.addf %224, %225 : vector<8x1024xf32>
    %227 = tpu.reciprocal %226 {approx = true} : vector<8x1024xf32> -> vector<8x1024xf32>
    %228 = arith.mulf %226, %227 : vector<8x1024xf32>
    %cst_83 = arith.constant 2.000000e+00 : f32
    %229 = vector.broadcast %cst_83 : f32 to vector<8x1024xf32>
    %230 = arith.subf %229, %228 : vector<8x1024xf32>
    %231 = arith.mulf %227, %230 : vector<8x1024xf32>
    %232 = arith.mulf %222, %121 : vector<8x1024xf32>
    %233 = arith.mulf %232, %231 : vector<8x1024xf32>
    %c0_84 = arith.constant 0 : index
    %c0_85 = arith.constant 0 : index
    %234 = vector.load %arg7[%c0_84, %c0_85] : memref<8x1024xf32, #tpu.memory_space<vmem>>, vector<8x1024xf32>
    tpu.vector_store %arg7[%c0_84, %c0_85], %233 {strides = array<i32>} : memref<8x1024xf32, #tpu.memory_space<vmem>>, vector<8x1024xf32>,
    return
  }
  func.func @transform_0(%arg0: i32) -> (i32, i32) {
    %c0_i32 = arith.constant 0 : i32
    %c0_i32_0 = arith.constant 0 : i32
    return %c0_i32, %arg0 : i32, i32
  }
  func.func @transform_1(%arg0: i32) -> (i32, i32) {
    %c0_i32 = arith.constant 0 : i32
    %c0_i32_0 = arith.constant 0 : i32
    %c0_i32_1 = arith.constant 0 : i32
    return %c0_i32, %c0_i32_0 : i32, i32
  }
  func.func @transform_2(%arg0: i32) -> (i32, i32) {
    %c0_i32 = arith.constant 0 : i32
    %c0_i32_0 = arith.constant 0 : i32
    %c0_i32_1 = arith.constant 0 : i32
    return %c0_i32, %c0_i32_0 : i32, i32
  }
  func.func @transform_3(%arg0: i32) -> (i32, i32) {
    %c0_i32 = arith.constant 0 : i32
    %c0_i32_0 = arith.constant 0 : i32
    %c0_i32_1 = arith.constant 0 : i32
    return %c0_i32, %c0_i32_0 : i32, i32
  }
  func.func @transform_4(%arg0: i32) -> (i32, i32) {
    %c0_i32 = arith.constant 0 : i32
    %c0_i32_0 = arith.constant 0 : i32
    %c0_i32_1 = arith.constant 0 : i32
    return %c0_i32, %c0_i32_0 : i32, i32
  }
  func.func @transform_5(%arg0: i32) -> (i32, i32) {
    %c0_i32 = arith.constant 0 : i32
    %c0_i32_0 = arith.constant 0 : i32
    return %c0_i32, %arg0 : i32, i32
  }
  func.func @transform_6(%arg0: i32) -> (i32, i32) {
    %c0_i32 = arith.constant 0 : i32
    %c0_i32_0 = arith.constant 0 : i32
    return %c0_i32, %arg0 : i32, i32
  }
}

</mosaic_0001>

<llo_original>
// kernel: tpu_custom_call.1
$region0: #{tpu_custom_call.1}
  #allocation0 [shape = 'u32[]', space=smem, size = 0x4, offset = 0x4, fixed_abs, tag = 'smem constant byte address 0x4 - core index']
  #allocation1 [shape = 'u32[72,128]{1,0:T(1,128)}', space=vmem, size = 0x9000, scoped, tag = 'internal scratch']
  %s0 = inlined_call_operand.hbm [shape: f32[32,1024], index: 0, kind: input, shape index: {}]
  %s1 = inlined_call_operand.hbm [shape: bf16[16,32], index: 1, kind: input, shape index: {}]
  %s2 = inlined_call_operand.hbm [shape: bf16[16,16], index: 2, kind: input, shape index: {}]
  %s3 = inlined_call_operand.hbm [shape: bf16[8,16], index: 3, kind: input, shape index: {}]
  %s4 = inlined_call_operand.hbm [shape: bf16[8,8], index: 4, kind: input, shape index: {}]
  %s5 = inlined_call_operand.hbm [shape: f32[16,1024], index: 5, kind: output, shape index: {0}]
  %s6 = inlined_call_operand.hbm [shape: f32[8,1024], index: 6, kind: output, shape index: {1}]
  %7 = xla_tuple %s5, %s6
  %s8 = sld [smem:[#allocation0]]
  $region58: #{tpu_custom_call.1} parent=0
    _
  %s10 = ssub.s32 1, %s8
  %s11 = scalar_select 0, %s10, %s8
  $region1: #{tpu_custom_call.1} parent=0
    #allocation2 [shape = 'u8[131072]{0}', space=vmem, size = 0x20000, scoped, tag = 'input window, operand 0, single buffered']
    #allocation3 [shape = 's32[1]{0}', space=sflag, size = 0x4, scoped, tag = 'scoped memory for tpu_custom_call.1']
    #allocation4 [shape = 's32[1]{0}', space=sflag, size = 0x4, scoped, tag = 'scoped memory for tpu_custom_call.1']
    #allocation5 [shape = 'u8[4096]{0}', space=vmem, size = 0x1000, scoped, tag = 'input window, operand 1, single buffered']
    #allocation6 [shape = 's32[1]{0}', space=sflag, size = 0x4, scoped, tag = 'scoped memory for tpu_custom_call.1']
    #allocation7 [shape = 'u8[4096]{0}', space=vmem, size = 0x1000, scoped, tag = 'input window, operand 2, single buffered']
    #allocation8 [shape = 'u8[2048]{0}', space=vmem, size = 0x800, scoped, tag = 'input window, operand 3, single buffered']
    #allocation9 [shape = 's32[1]{0}', space=sflag, size = 0x4, scoped, tag = 'scoped memory for tpu_custom_call.1']
    #allocation10 [shape = 'u8[2048]{0}', space=vmem, size = 0x800, scoped, tag = 'input window, operand 4, single buffered']
    #allocation11 [shape = 'u8[65536]{0}', space=vmem, size = 0x10000, scoped, tag = 'output window, operand 0, single buffered']
    #allocation12 [shape = 'u8[32768]{0}', space=vmem, size = 0x8000, scoped, tag = 'output window, operand 1, single buffered']
    #allocation13 [shape = 's32[1]{0}', space=sflag, size = 0x4, scoped, tag = 'scoped memory for tpu_custom_call.1']
    %12 = vsyncpa [#allocation3], 0
    %13 = vsyncpa [#allocation6], 0
    %14 = vsyncpa [#allocation9], 0
    %15 = vsyncpa [#allocation4], 0
    %16 = vsyncpa [#allocation13], 0
    // Predicated region
    $region2: #{tpu_custom_call.1} parent=1 // pred_check
      _
    $region3: #{tpu_custom_call.1} parent=1 // pred_check_branch
      %18 = sbr.rel (0) target = $region5
    $region4: #{tpu_custom_call.1} parent=1 // pred_region
      %20 = vsyncadd [#allocation3], 0
      %s21 = sshll.u32 %s0, 4
      %s22 = int_to_ptr.hbm [resolvable:$true] %s21
      %s23 = sshll.u32 [#allocation2], 4
      %s24 = int_to_ptr.vmem [resolvable:$true] %s23
      %29 = dma.hbm_to_vmem [thread:$0]  %s22, 4096, %s24, [#allocation3], 1024, 1024, 64
    $region5: #{tpu_custom_call.1} parent=1 // pred_fallthru
      _
    // Predicated region
    $region6: #{tpu_custom_call.1} parent=1 // pred_check
      _
    $region7: #{tpu_custom_call.1} parent=1 // pred_check_branch
      %31 = sbr.rel (0) target = $region9
    $region8: #{tpu_custom_call.1} parent=1 // pred_region
      %33 = vsyncadd [#allocation6], 0
      %s34 = sshll.u32 %s1, 4
      %s35 = int_to_ptr.hbm [resolvable:$true] %s34
      %s36 = sshll.u32 [#allocation5], 4
      %s37 = int_to_ptr.vmem [resolvable:$true] %s36
      %42 = dma.hbm_to_vmem [thread:$0]  %s35, 128, %s37, [#allocation6], 64, 64, 4
    $region9: #{tpu_custom_call.1} parent=1 // pred_fallthru
      _
    // Predicated region
    $region10: #{tpu_custom_call.1} parent=1 // pred_check
      _
    $region11: #{tpu_custom_call.1} parent=1 // pred_check_branch
      %44 = sbr.rel (0) target = $region13
    $region12: #{tpu_custom_call.1} parent=1 // pred_region
      %46 = vsyncadd [#allocation6], 0
      %s47 = sshll.u32 %s2, 4
      %s48 = int_to_ptr.hbm [resolvable:$true] %s47
      %s49 = sshll.u32 [#allocation7], 4
      %s50 = int_to_ptr.vmem [resolvable:$true] %s49
      %55 = dma.hbm_to_vmem [thread:$0]  %s48, 128, %s50, [#allocation6], 64, 64, 4
    $region13: #{tpu_custom_call.1} parent=1 // pred_fallthru
      _
    // Predicated region
    $region14: #{tpu_custom_call.1} parent=1 // pred_check
      _
    $region15: #{tpu_custom_call.1} parent=1 // pred_check_branch
      %57 = sbr.rel (0) target = $region17
    $region16: #{tpu_custom_call.1} parent=1 // pred_region
      %59 = vsyncadd [#allocation9], 0
      %s61 = sshll.u32 %s3, 4
      %s62 = int_to_ptr.hbm [resolvable:$true] %s61
      %s63 = sshll.u32 [#allocation8], 4
      %s64 = int_to_ptr.vmem [resolvable:$true] %s63
      %66 = dma.hbm_to_vmem [thread:$0]  %s62, 64, %s64, [#allocation9]
    $region17: #{tpu_custom_call.1} parent=1 // pred_fallthru
      _
    // Predicated region
    $region18: #{tpu_custom_call.1} parent=1 // pred_check
      _
    $region19: #{tpu_custom_call.1} parent=1 // pred_check_branch
      %68 = sbr.rel (0) target = $region21
    $region20: #{tpu_custom_call.1} parent=1 // pred_region
      %70 = vsyncadd [#allocation9], 0
      %s72 = sshll.u32 %s4, 4
      %s73 = int_to_ptr.hbm [resolvable:$true] %s72
      %s74 = sshll.u32 [#allocation10], 4
      %s75 = int_to_ptr.vmem [resolvable:$true] %s74
      %77 = dma.hbm_to_vmem [thread:$0]  %s73, 64, %s75, [#allocation9]
    $region21: #{tpu_custom_call.1} parent=1 // pred_fallthru
      _
    // Predicated region
    $region22: #{tpu_custom_call.1} parent=1 // pred_check
      _
    $region23: #{tpu_custom_call.1} parent=1 // pred_check_branch
      %79 = sbr.rel (0) target = $region25
    $region24: #{tpu_custom_call.1} parent=1 // pred_region
      %81 = dma.done [#allocation3], 4096
    $region25: #{tpu_custom_call.1} parent=1 // pred_fallthru
      _
    // Predicated region
    $region26: #{tpu_custom_call.1} parent=1 // pred_check
      _
    $region27: #{tpu_custom_call.1} parent=1 // pred_check_branch
      %83 = sbr.rel (0) target = $region29
    $region28: #{tpu_custom_call.1} parent=1 // pred_region
      %85 = dma.done [#allocation6], 128
    $region29: #{tpu_custom_call.1} parent=1 // pred_fallthru
      _
    // Predicated region
    $region30: #{tpu_custom_call.1} parent=1 // pred_check
      _
    $region31: #{tpu_custom_call.1} parent=1 // pred_check_branch
      %87 = sbr.rel (0) target = $region33
    $region32: #{tpu_custom_call.1} parent=1 // pred_region
      %89 = dma.done [#allocation6], 128
    $region33: #{tpu_custom_call.1} parent=1 // pred_fallthru
      _
    // Predicated region
    $region34: #{tpu_custom_call.1} parent=1 // pred_check
      _
    $region35: #{tpu_custom_call.1} parent=1 // pred_check_branch
      %91 = sbr.rel (0) target = $region37
    $region36: #{tpu_custom_call.1} parent=1 // pred_region
      %93 = dma.done [#allocation9], 64
    $region37: #{tpu_custom_call.1} parent=1 // pred_fallthru
      _
    // Predicated region
    $region38: #{tpu_custom_call.1} parent=1 // pred_check
      _
    $region39: #{tpu_custom_call.1} parent=1 // pred_check_branch
      %95 = sbr.rel (0) target = $region41
    $region40: #{tpu_custom_call.1} parent=1 // pred_region
      %97 = dma.done [#allocation9], 64
    $region41: #{tpu_custom_call.1} parent=1 // pred_fallthru
      _
    %v99 = vld [vmem:[#allocation2] sm:$0xff]
    %v100 = vld [vmem:[#allocation2 + $0x8] sm:$0xff]
    %v101 = vld [vmem:[#allocation2 + $0x10] sm:$0xff]
    %v102 = vld [vmem:[#allocation2 + $0x18] sm:$0xff]
    %v103 = vld [vmem:[#allocation2 + $0x20] sm:$0xff]
    %v104 = vld [vmem:[#allocation2 + $0x28] sm:$0xff]
    %v105 = vld [vmem:[#allocation2 + $0x30] sm:$0xff]
    %v106 = vld [vmem:[#allocation2 + $0x38] sm:$0xff]
    %v107 = vld [vmem:[#allocation2 + $0x40] sm:$0xff]
    %v108 = vld [vmem:[#allocation2 + $0x48] sm:$0xff]
    %v109 = vld [vmem:[#allocation2 + $0x50] sm:$0xff]
    %v110 = vld [vmem:[#allocation2 + $0x58] sm:$0xff]
    %v111 = vld [vmem:[#allocation2 + $0x60] sm:$0xff]
    %v112 = vld [vmem:[#allocation2 + $0x68] sm:$0xff]
    %v113 = vld [vmem:[#allocation2 + $0x70] sm:$0xff]
    %v114 = vld [vmem:[#allocation2 + $0x78] sm:$0xff]
    %v115 = vld [vmem:[#allocation2 + $0x80] sm:$0xff]
    %v116 = vld [vmem:[#allocation2 + $0x88] sm:$0xff]
    %v117 = vld [vmem:[#allocation2 + $0x90] sm:$0xff]
    %v118 = vld [vmem:[#allocation2 + $0x98] sm:$0xff]
    %v119 = vld [vmem:[#allocation2 + $0xa0] sm:$0xff]
    %v120 = vld [vmem:[#allocation2 + $0xa8] sm:$0xff]
    %v121 = vld [vmem:[#allocation2 + $0xb0] sm:$0xff]
    %v122 = vld [vmem:[#allocation2 + $0xb8] sm:$0xff]
    %v123 = vld [vmem:[#allocation2 + $0xc0] sm:$0xff]
    %v124 = vld [vmem:[#allocation2 + $0xc8] sm:$0xff]
    %v125 = vld [vmem:[#allocation2 + $0xd0] sm:$0xff]
    %v126 = vld [vmem:[#allocation2 + $0xd8] sm:$0xff]
    %v127 = vld [vmem:[#allocation2 + $0xe0] sm:$0xff]
    %v128 = vld [vmem:[#allocation2 + $0xe8] sm:$0xff]
    %v129 = vld [vmem:[#allocation2 + $0xf0] sm:$0xff]
    %v130 = vld [vmem:[#allocation2 + $0xf8] sm:$0xff]
    %v131 = vld [vmem:[#allocation5] sm:$0xf]
    %v132 = vld [vmem:[#allocation5 + $0x4] sm:$0xf]
    %v133 = vld [vmem:[#allocation7] sm:$0xf]
    %v134 = vld [vmem:[#allocation7 + $0x4] sm:$0xf]
    %v135 = vpack.c.bf16 %v107, %v99
    %v136 = vpack.c.bf16 %v108, %v100
    %v137 = vpack.c.bf16 %v109, %v101
    %v138 = vpack.c.bf16 %v110, %v102
    %v139 = vpack.c.bf16 %v111, %v103
    %v140 = vpack.c.bf16 %v112, %v104
    %v141 = vpack.c.bf16 %v113, %v105
    %v142 = vpack.c.bf16 %v114, %v106
    %v143 = vpack.c.bf16 %v123, %v115
    %v144 = vpack.c.bf16 %v124, %v116
    %v145 = vpack.c.bf16 %v125, %v117
    %v146 = vpack.c.bf16 %v126, %v118
    %v147 = vpack.c.bf16 %v127, %v119
    %v148 = vpack.c.bf16 %v128, %v120
    %v149 = vpack.c.bf16 %v129, %v121
    %v150 = vpack.c.bf16 %v130, %v122
    %v153 = vunpack.c.l.b16 %v131
    %v154 = vunpack.c.l.b16 %v132
    %v155 = vpack.c.b16 %v154, %v153
    %vm156 = vcmask 261120
    %v158 = vsel %vm156, %v155, 0
    %160 = vmatpush.bf16.msra.mxu0 0
    %161 = vmatpush.bf16.msra.mxu0 0
    %162 = vmatpush.bf16.msra.mxu0 0
    %163 = vmatpush.bf16.msra.mxu0 0
    %164 = vmatpush.bf16.msra.mxu0 0
    %165 = vmatpush.bf16.msra.mxu0 0
    %166 = vmatpush.bf16.msra.mxu0 %v143
    %167 = vmatpush.bf16.msra.mxu0 %v135
    %168 = vmatmul.bf16.gmra.mxu0 %v158
    %v169 = vpop.f32.mrf.mxu0
    %v170 = vadd.f32 0.0, %v169
    %v171 = vpop.f32.mrf.mxu0
    %v172 = vadd.f32 0.0, %v171
    %173 = vdwg.mxu0
    %174 = vmatpush.bf16.msra.mxu0 0
    %175 = vmatpush.bf16.msra.mxu0 0
    %176 = vmatpush.bf16.msra.mxu0 0
    %177 = vmatpush.bf16.msra.mxu0 0
    %178 = vmatpush.bf16.msra.mxu0 0
    %179 = vmatpush.bf16.msra.mxu0 0
    %180 = vmatpush.bf16.msra.mxu0 %v144
    %181 = vmatpush.bf16.msra.mxu0 %v136
    %182 = vmatmul.bf16.gmra.mxu0 %v158
    %v183 = vpop.f32.mrf.mxu0
    %v184 = vadd.f32 0.0, %v183
    %v185 = vpop.f32.mrf.mxu0
    %v186 = vadd.f32 0.0, %v185
    %187 = vdwg.mxu0
    %188 = vmatpush.bf16.msra.mxu0 0
    %189 = vmatpush.bf16.msra.mxu0 0
    %190 = vmatpush.bf16.msra.mxu0 0
    %191 = vmatpush.bf16.msra.mxu0 0
    %192 = vmatpush.bf16.msra.mxu0 0
    %193 = vmatpush.bf16.msra.mxu0 0
    %194 = vmatpush.bf16.msra.mxu0 %v145
    %195 = vmatpush.bf16.msra.mxu0 %v137
    %196 = vmatmul.bf16.gmra.mxu0 %v158
    %v197 = vpop.f32.mrf.mxu0
    %v198 = vadd.f32 0.0, %v197
    %v199 = vpop.f32.mrf.mxu0
    %v200 = vadd.f32 0.0, %v199
    %201 = vdwg.mxu0
    %202 = vmatpush.bf16.msra.mxu0 0
    %203 = vmatpush.bf16.msra.mxu0 0
    %204 = vmatpush.bf16.msra.mxu0 0
    %205 = vmatpush.bf16.msra.mxu0 0
    %206 = vmatpush.bf16.msra.mxu0 0
    %207 = vmatpush.bf16.msra.mxu0 0
    %208 = vmatpush.bf16.msra.mxu0 %v146
    %209 = vmatpush.bf16.msra.mxu0 %v138
    %210 = vmatmul.bf16.gmra.mxu0 %v158
    %v211 = vpop.f32.mrf.mxu0
    %v212 = vadd.f32 0.0, %v211
    %v213 = vpop.f32.mrf.mxu0
    %v214 = vadd.f32 0.0, %v213
    %215 = vdwg.mxu0
    %216 = vmatpush.bf16.msra.mxu0 0
    %217 = vmatpush.bf16.msra.mxu0 0
    %218 = vmatpush.bf16.msra.mxu0 0
    %219 = vmatpush.bf16.msra.mxu0 0
    %220 = vmatpush.bf16.msra.mxu0 0
    %221 = vmatpush.bf16.msra.mxu0 0
    %222 = vmatpush.bf16.msra.mxu0 %v147
    %223 = vmatpush.bf16.msra.mxu0 %v139
    %224 = vmatmul.bf16.gmra.mxu0 %v158
    %v225 = vpop.f32.mrf.mxu0
    %v226 = vadd.f32 0.0, %v225
    %v227 = vpop.f32.mrf.mxu0
    %v228 = vadd.f32 0.0, %v227
    %229 = vdwg.mxu0
    %230 = vmatpush.bf16.msra.mxu0 0
    %231 = vmatpush.bf16.msra.mxu0 0
    %232 = vmatpush.bf16.msra.mxu0 0
    %233 = vmatpush.bf16.msra.mxu0 0
    %234 = vmatpush.bf16.msra.mxu0 0
    %235 = vmatpush.bf16.msra.mxu0 0
    %236 = vmatpush.bf16.msra.mxu0 %v148
    %237 = vmatpush.bf16.msra.mxu0 %v140
    %238 = vmatmul.bf16.gmra.mxu0 %v158
    %v239 = vpop.f32.mrf.mxu0
    %v240 = vadd.f32 0.0, %v239
    %v241 = vpop.f32.mrf.mxu0
    %v242 = vadd.f32 0.0, %v241
    %243 = vdwg.mxu0
    %244 = vmatpush.bf16.msra.mxu0 0
    %245 = vmatpush.bf16.msra.mxu0 0
    %246 = vmatpush.bf16.msra.mxu0 0
    %247 = vmatpush.bf16.msra.mxu0 0
    %248 = vmatpush.bf16.msra.mxu0 0
    %249 = vmatpush.bf16.msra.mxu0 0
    %250 = vmatpush.bf16.msra.mxu0 %v149
    %251 = vmatpush.bf16.msra.mxu0 %v141
    %252 = vmatmul.bf16.gmra.mxu0 %v158
    %v253 = vpop.f32.mrf.mxu0
    %v254 = vadd.f32 0.0, %v253
    %v255 = vpop.f32.mrf.mxu0
    %v256 = vadd.f32 0.0, %v255
    %257 = vdwg.mxu0
    %258 = vmatpush.bf16.msra.mxu0 0
    %259 = vmatpush.bf16.msra.mxu0 0
    %260 = vmatpush.bf16.msra.mxu0 0
    %261 = vmatpush.bf16.msra.mxu0 0
    %262 = vmatpush.bf16.msra.mxu0 0
    %263 = vmatpush.bf16.msra.mxu0 0
    %264 = vmatpush.bf16.msra.mxu0 %v150
    %265 = vmatpush.bf16.msra.mxu0 %v142
    %266 = vmatmul.bf16.gmra.mxu0 %v158
    %v267 = vpop.f32.mrf.mxu0
    %v268 = vadd.f32 0.0, %v267
    %v269 = vpop.f32.mrf.mxu0
    %v270 = vadd.f32 0.0, %v269
    %271 = vdwg.mxu0
    %v272 = vmax.f32 %v170, 1e-08
    %v273 = vmax.f32 %v184, 1e-08
    %v274 = vmax.f32 %v198, 1e-08
    %v275 = vmax.f32 %v212, 1e-08
    %v276 = vmax.f32 %v226, 1e-08
    %v277 = vmax.f32 %v240, 1e-08
    %v278 = vmax.f32 %v254, 1e-08
    %v279 = vmax.f32 %v268, 1e-08
    %v280 = vmax.f32 %v172, 1e-08
    %v281 = vmax.f32 %v186, 1e-08
    %v282 = vmax.f32 %v200, 1e-08
    %v283 = vmax.f32 %v214, 1e-08
    %v284 = vmax.f32 %v228, 1e-08
    %v285 = vmax.f32 %v242, 1e-08
    %v286 = vmax.f32 %v256, 1e-08
    %v287 = vmax.f32 %v270, 1e-08
    %v288 = vpack.c.bf16 %v280, %v272
    %v289 = vpack.c.bf16 %v281, %v273
    %v290 = vpack.c.bf16 %v282, %v274
    %v291 = vpack.c.bf16 %v283, %v275
    %v292 = vpack.c.bf16 %v284, %v276
    %v293 = vpack.c.bf16 %v285, %v277
    %v294 = vpack.c.bf16 %v286, %v278
    %v295 = vpack.c.bf16 %v287, %v279
    %v298 = vunpack.c.l.b16 %v133
    %v299 = vunpack.c.l.b16 %v134
    %v300 = vpack.c.b16 %v299, %v298
    %vm301 = vcmask 130048
    %v303 = vsel %vm301, %v300, 0
    %305 = vmatpush.bf16.msra.mxu0 0
    %306 = vmatpush.bf16.msra.mxu0 0
    %307 = vmatpush.bf16.msra.mxu0 0
    %308 = vmatpush.bf16.msra.mxu0 0
    %309 = vmatpush.bf16.msra.mxu0 0
    %310 = vmatpush.bf16.msra.mxu0 0
    %311 = vmatpush.bf16.msra.mxu0 0
    %312 = vmatpush.bf16.msra.mxu0 %v288
    %313 = vmatmul.bf16.gmra.mxu0 %v303
    %v314 = vpop.f32.mrf.mxu0
    %v315 = vadd.f32 1e-08, %v314
    %v316 = vpop.f32.mrf.mxu0
    %v317 = vadd.f32 1e-08, %v316
    %318 = vdwg.mxu0
    %319 = vmatpush.bf16.msra.mxu0 0
    %320 = vmatpush.bf16.msra.mxu0 0
    %321 = vmatpush.bf16.msra.mxu0 0
    %322 = vmatpush.bf16.msra.mxu0 0
    %323 = vmatpush.bf16.msra.mxu0 0
    %324 = vmatpush.bf16.msra.mxu0 0
    %325 = vmatpush.bf16.msra.mxu0 0
    %326 = vmatpush.bf16.msra.mxu0 %v289
    %327 = vmatmul.bf16.gmra.mxu0 %v303
    %v328 = vpop.f32.mrf.mxu0
    %v329 = vadd.f32 1e-08, %v328
    %v330 = vpop.f32.mrf.mxu0
    %v331 = vadd.f32 1e-08, %v330
    %332 = vdwg.mxu0
    %333 = vmatpush.bf16.msra.mxu0 0
    %334 = vmatpush.bf16.msra.mxu0 0
    %335 = vmatpush.bf16.msra.mxu0 0
    %336 = vmatpush.bf16.msra.mxu0 0
    %337 = vmatpush.bf16.msra.mxu0 0
    %338 = vmatpush.bf16.msra.mxu0 0
    %339 = vmatpush.bf16.msra.mxu0 0
    %340 = vmatpush.bf16.msra.mxu0 %v290
    %341 = vmatmul.bf16.gmra.mxu0 %v303
    %v342 = vpop.f32.mrf.mxu0
    %v343 = vadd.f32 1e-08, %v342
    %v344 = vpop.f32.mrf.mxu0
    %v345 = vadd.f32 1e-08, %v344
    %346 = vdwg.mxu0
    %347 = vmatpush.bf16.msra.mxu0 0
    %348 = vmatpush.bf16.msra.mxu0 0
    %349 = vmatpush.bf16.msra.mxu0 0
    %350 = vmatpush.bf16.msra.mxu0 0
    %351 = vmatpush.bf16.msra.mxu0 0
    %352 = vmatpush.bf16.msra.mxu0 0
    %353 = vmatpush.bf16.msra.mxu0 0
    %354 = vmatpush.bf16.msra.mxu0 %v291
    %355 = vmatmul.bf16.gmra.mxu0 %v303
    %v356 = vpop.f32.mrf.mxu0
    %v357 = vadd.f32 1e-08, %v356
    %v358 = vpop.f32.mrf.mxu0
    %v359 = vadd.f32 1e-08, %v358
    %360 = vdwg.mxu0
    %361 = vmatpush.bf16.msra.mxu0 0
    %362 = vmatpush.bf16.msra.mxu0 0
    %363 = vmatpush.bf16.msra.mxu0 0
    %364 = vmatpush.bf16.msra.mxu0 0
    %365 = vmatpush.bf16.msra.mxu0 0
    %366 = vmatpush.bf16.msra.mxu0 0
    %367 = vmatpush.bf16.msra.mxu0 0
    %368 = vmatpush.bf16.msra.mxu0 %v292
    %369 = vmatmul.bf16.gmra.mxu0 %v303
    %v370 = vpop.f32.mrf.mxu0
    %v371 = vadd.f32 1e-08, %v370
    %v372 = vpop.f32.mrf.mxu0
    %v373 = vadd.f32 1e-08, %v372
    %374 = vdwg.mxu0
    %375 = vmatpush.bf16.msra.mxu0 0
    %376 = vmatpush.bf16.msra.mxu0 0
    %377 = vmatpush.bf16.msra.mxu0 0
    %378 = vmatpush.bf16.msra.mxu0 0
    %379 = vmatpush.bf16.msra.mxu0 0
    %380 = vmatpush.bf16.msra.mxu0 0
    %381 = vmatpush.bf16.msra.mxu0 0
    %382 = vmatpush.bf16.msra.mxu0 %v293
    %383 = vmatmul.bf16.gmra.mxu0 %v303
    %v384 = vpop.f32.mrf.mxu0
    %v385 = vadd.f32 1e-08, %v384
    %v386 = vpop.f32.mrf.mxu0
    %v387 = vadd.f32 1e-08, %v386
    %388 = vdwg.mxu0
    %389 = vmatpush.bf16.msra.mxu0 0
    %390 = vmatpush.bf16.msra.mxu0 0
    %391 = vmatpush.bf16.msra.mxu0 0
    %392 = vmatpush.bf16.msra.mxu0 0
    %393 = vmatpush.bf16.msra.mxu0 0
    %394 = vmatpush.bf16.msra.mxu0 0
    %395 = vmatpush.bf16.msra.mxu0 0
    %396 = vmatpush.bf16.msra.mxu0 %v294
    %397 = vmatmul.bf16.gmra.mxu0 %v303
    %v398 = vpop.f32.mrf.mxu0
    %v399 = vadd.f32 1e-08, %v398
    %v400 = vpop.f32.mrf.mxu0
    %v401 = vadd.f32 1e-08, %v400
    %402 = vdwg.mxu0
    %403 = vmatpush.bf16.msra.mxu0 0
    %404 = vmatpush.bf16.msra.mxu0 0
    %405 = vmatpush.bf16.msra.mxu0 0
    %406 = vmatpush.bf16.msra.mxu0 0
    %407 = vmatpush.bf16.msra.mxu0 0
    %408 = vmatpush.bf16.msra.mxu0 0
    %409 = vmatpush.bf16.msra.mxu0 0
    %410 = vmatpush.bf16.msra.mxu0 %v295
    %411 = vmatmul.bf16.gmra.mxu0 %v303
    %v412 = vpop.f32.mrf.mxu0
    %v413 = vadd.f32 1e-08, %v412
    %v414 = vpop.f32.mrf.mxu0
    %v415 = vadd.f32 1e-08, %v414
    %416 = vdwg.mxu0
    %v417 = vrcp.pop %v315
    %v418 = vrcp.pop %v329
    %v419 = vrcp.pop %v343
    %v420 = vrcp.pop %v357
    %v421 = vrcp.pop %v371
    %v422 = vrcp.pop %v385
    %v423 = vrcp.pop %v399
    %v424 = vrcp.pop %v413
    %v425 = vrcp.pop %v317
    %v426 = vrcp.pop %v331
    %v427 = vrcp.pop %v345
    %v428 = vrcp.pop %v359
    %v429 = vrcp.pop %v373
    %v430 = vrcp.pop %v387
    %v431 = vrcp.pop %v401
    %v432 = vrcp.pop %v415
    %v433 = vmul.f32 %v315, %v417
    %v434 = vmul.f32 %v329, %v418
    %v435 = vmul.f32 %v343, %v419
    %v436 = vmul.f32 %v357, %v420
    %v437 = vmul.f32 %v371, %v421
    %v438 = vmul.f32 %v385, %v422
    %v439 = vmul.f32 %v399, %v423
    %v440 = vmul.f32 %v413, %v424
    %v441 = vmul.f32 %v317, %v425
    %v442 = vmul.f32 %v331, %v426
    %v443 = vmul.f32 %v345, %v427
    %v444 = vmul.f32 %v359, %v428
    %v445 = vmul.f32 %v373, %v429
    %v446 = vmul.f32 %v387, %v430
    %v447 = vmul.f32 %v401, %v431
    %v448 = vmul.f32 %v415, %v432
    %v449 = vsub.f32 2.0, %v433
    %v450 = vsub.f32 2.0, %v434
    %v451 = vsub.f32 2.0, %v435
    %v452 = vsub.f32 2.0, %v436
    %v453 = vsub.f32 2.0, %v437
    %v454 = vsub.f32 2.0, %v438
    %v455 = vsub.f32 2.0, %v439
    %v456 = vsub.f32 2.0, %v440
    %v457 = vsub.f32 2.0, %v441
    %v458 = vsub.f32 2.0, %v442
    %v459 = vsub.f32 2.0, %v443
    %v460 = vsub.f32 2.0, %v444
    %v461 = vsub.f32 2.0, %v445
    %v462 = vsub.f32 2.0, %v446
    %v463 = vsub.f32 2.0, %v447
    %v464 = vsub.f32 2.0, %v448
    %v465 = vmul.f32 %v417, %v449
    %v466 = vmul.f32 %v418, %v450
    %v467 = vmul.f32 %v419, %v451
    %v468 = vmul.f32 %v420, %v452
    %v469 = vmul.f32 %v421, %v453
    %v470 = vmul.f32 %v422, %v454
    %v471 = vmul.f32 %v423, %v455
    %v472 = vmul.f32 %v424, %v456
    %v473 = vmul.f32 %v425, %v457
    %v474 = vmul.f32 %v426, %v458
    %v475 = vmul.f32 %v427, %v459
    %v476 = vmul.f32 %v428, %v460
    %v477 = vmul.f32 %v429, %v461
    %v478 = vmul.f32 %v430, %v462
    %v479 = vmul.f32 %v431, %v463
    %v480 = vmul.f32 %v432, %v464
    %v481 = vmul.f32 %v272, %v170
    %v482 = vmul.f32 %v273, %v184
    %v483 = vmul.f32 %v274, %v198
    %v484 = vmul.f32 %v275, %v212
    %v485 = vmul.f32 %v276, %v226
    %v486 = vmul.f32 %v277, %v240
    %v487 = vmul.f32 %v278, %v254
    %v488 = vmul.f32 %v279, %v268
    %v489 = vmul.f32 %v280, %v172
    %v490 = vmul.f32 %v281, %v186
    %v491 = vmul.f32 %v282, %v200
    %v492 = vmul.f32 %v283, %v214
    %v493 = vmul.f32 %v284, %v228
    %v494 = vmul.f32 %v285, %v242
    %v495 = vmul.f32 %v286, %v256
    %v496 = vmul.f32 %v287, %v270
    %v497 = vmul.f32 %v481, %v465
    %v498 = vmul.f32 %v482, %v466
    %v499 = vmul.f32 %v483, %v467
    %v500 = vmul.f32 %v484, %v468
    %v501 = vmul.f32 %v485, %v469
    %v502 = vmul.f32 %v486, %v470
    %v503 = vmul.f32 %v487, %v471
    %v504 = vmul.f32 %v488, %v472
    %v505 = vmul.f32 %v489, %v473
    %v506 = vmul.f32 %v490, %v474
    %v507 = vmul.f32 %v491, %v475
    %v508 = vmul.f32 %v492, %v476
    %v509 = vmul.f32 %v493, %v477
    %v510 = vmul.f32 %v494, %v478
    %v511 = vmul.f32 %v495, %v479
    %v512 = vmul.f32 %v496, %v480
    %v513 = vpack.c.bf16 %v505, %v497
    %v514 = vpack.c.bf16 %v506, %v498
    %v515 = vpack.c.bf16 %v507, %v499
    %v516 = vpack.c.bf16 %v508, %v500
    %v517 = vpack.c.bf16 %v509, %v501
    %v518 = vpack.c.bf16 %v510, %v502
    %v519 = vpack.c.bf16 %v511, %v503
    %v520 = vpack.c.bf16 %v512, %v504
    %521 = vmatpush.bf16.msra.mxu0 0
    %522 = vmatpush.bf16.msra.mxu0 0
    %523 = vmatpush.bf16.msra.mxu0 0
    %524 = vmatpush.bf16.msra.mxu0 0
    %525 = vmatpush.bf16.msra.mxu0 0
    %526 = vmatpush.bf16.msra.mxu0 0
    %527 = vmatpush.bf16.msra.mxu0 0
    %528 = vmatpush.bf16.msra.mxu0 %v513
    %529 = vmatmul.bf16.gmra.mxu0 %v303
    %v530 = vpop.f32.mrf.mxu0
    %v531 = vadd.f32 1e-08, %v530
    %v532 = vpop.f32.mrf.mxu0
    %v533 = vadd.f32 1e-08, %v532
    %534 = vdwg.mxu0
    %535 = vmatpush.bf16.msra.mxu0 0
    %536 = vmatpush.bf16.msra.mxu0 0
    %537 = vmatpush.bf16.msra.mxu0 0
    %538 = vmatpush.bf16.msra.mxu0 0
    %539 = vmatpush.bf16.msra.mxu0 0
    %540 = vmatpush.bf16.msra.mxu0 0
    %541 = vmatpush.bf16.msra.mxu0 0
    %542 = vmatpush.bf16.msra.mxu0 %v514
    %543 = vmatmul.bf16.gmra.mxu0 %v303
    %v544 = vpop.f32.mrf.mxu0
    %v545 = vadd.f32 1e-08, %v544
    %v546 = vpop.f32.mrf.mxu0
    %v547 = vadd.f32 1e-08, %v546
    %548 = vdwg.mxu0
    %549 = vmatpush.bf16.msra.mxu0 0
    %550 = vmatpush.bf16.msra.mxu0 0
    %551 = vmatpush.bf16.msra.mxu0 0
    %552 = vmatpush.bf16.msra.mxu0 0
    %553 = vmatpush.bf16.msra.mxu0 0
    %554 = vmatpush.bf16.msra.mxu0 0
    %555 = vmatpush.bf16.msra.mxu0 0
    %556 = vmatpush.bf16.msra.mxu0 %v515
    %557 = vmatmul.bf16.gmra.mxu0 %v303
    %v558 = vpop.f32.mrf.mxu0
    %v559 = vadd.f32 1e-08, %v558
    %v560 = vpop.f32.mrf.mxu0
    %v561 = vadd.f32 1e-08, %v560
    %562 = vdwg.mxu0
    %563 = vmatpush.bf16.msra.mxu0 0
    %564 = vmatpush.bf16.msra.mxu0 0
    %565 = vmatpush.bf16.msra.mxu0 0
    %566 = vmatpush.bf16.msra.mxu0 0
    %567 = vmatpush.bf16.msra.mxu0 0
    %568 = vmatpush.bf16.msra.mxu0 0
    %569 = vmatpush.bf16.msra.mxu0 0
    %570 = vmatpush.bf16.msra.mxu0 %v516
    %571 = vmatmul.bf16.gmra.mxu0 %v303
    %v572 = vpop.f32.mrf.mxu0
    %v573 = vadd.f32 1e-08, %v572
    %v574 = vpop.f32.mrf.mxu0
    %v575 = vadd.f32 1e-08, %v574
    %576 = vdwg.mxu0
    %577 = vmatpush.bf16.msra.mxu0 0
    %578 = vmatpush.bf16.msra.mxu0 0
    %579 = vmatpush.bf16.msra.mxu0 0
    %580 = vmatpush.bf16.msra.mxu0 0
    %581 = vmatpush.bf16.msra.mxu0 0
    %582 = vmatpush.bf16.msra.mxu0 0
    %583 = vmatpush.bf16.msra.mxu0 0
    %584 = vmatpush.bf16.msra.mxu0 %v517
    %585 = vmatmul.bf16.gmra.mxu0 %v303
    %v586 = vpop.f32.mrf.mxu0
    %v587 = vadd.f32 1e-08, %v586
    %v588 = vpop.f32.mrf.mxu0
    %v589 = vadd.f32 1e-08, %v588
    %590 = vdwg.mxu0
    %591 = vmatpush.bf16.msra.mxu0 0
    %592 = vmatpush.bf16.msra.mxu0 0
    %593 = vmatpush.bf16.msra.mxu0 0
    %594 = vmatpush.bf16.msra.mxu0 0
    %595 = vmatpush.bf16.msra.mxu0 0
    %596 = vmatpush.bf16.msra.mxu0 0
    %597 = vmatpush.bf16.msra.mxu0 0
    %598 = vmatpush.bf16.msra.mxu0 %v518
    %599 = vmatmul.bf16.gmra.mxu0 %v303
    %v600 = vpop.f32.mrf.mxu0
    %v601 = vadd.f32 1e-08, %v600
    %v602 = vpop.f32.mrf.mxu0
    %v603 = vadd.f32 1e-08, %v602
    %604 = vdwg.mxu0
    %605 = vmatpush.bf16.msra.mxu0 0
    %606 = vmatpush.bf16.msra.mxu0 0
    %607 = vmatpush.bf16.msra.mxu0 0
    %608 = vmatpush.bf16.msra.mxu0 0
    %609 = vmatpush.bf16.msra.mxu0 0
    %610 = vmatpush.bf16.msra.mxu0 0
    %611 = vmatpush.bf16.msra.mxu0 0
    %612 = vmatpush.bf16.msra.mxu0 %v519
    %613 = vmatmul.bf16.gmra.mxu0 %v303
    %v614 = vpop.f32.mrf.mxu0
    %v615 = vadd.f32 1e-08, %v614
    %v616 = vpop.f32.mrf.mxu0
    %v617 = vadd.f32 1e-08, %v616
    %618 = vdwg.mxu0
    %619 = vmatpush.bf16.msra.mxu0 0
    %620 = vmatpush.bf16.msra.mxu0 0
    %621 = vmatpush.bf16.msra.mxu0 0
    %622 = vmatpush.bf16.msra.mxu0 0
    %623 = vmatpush.bf16.msra.mxu0 0
    %624 = vmatpush.bf16.msra.mxu0 0
    %625 = vmatpush.bf16.msra.mxu0 0
    %626 = vmatpush.bf16.msra.mxu0 %v520
    %627 = vmatmul.bf16.gmra.mxu0 %v303
    %v628 = vpop.f32.mrf.mxu0
    %v629 = vadd.f32 1e-08, %v628
    %v630 = vpop.f32.mrf.mxu0
    %v631 = vadd.f32 1e-08, %v630
    %632 = vdwg.mxu0
    %v633 = vrcp.pop %v531
    %v634 = vrcp.pop %v545
    %v635 = vrcp.pop %v559
    %v636 = vrcp.pop %v573
    %v637 = vrcp.pop %v587
    %v638 = vrcp.pop %v601
    %v639 = vrcp.pop %v615
    %v640 = vrcp.pop %v629
    %v641 = vrcp.pop %v533
    %v642 = vrcp.pop %v547
    %v643 = vrcp.pop %v561
    %v644 = vrcp.pop %v575
    %v645 = vrcp.pop %v589
    %v646 = vrcp.pop %v603
    %v647 = vrcp.pop %v617
    %v648 = vrcp.pop %v631
    %v649 = vmul.f32 %v531, %v633
    %v650 = vmul.f32 %v545, %v634
    %v651 = vmul.f32 %v559, %v635
    %v652 = vmul.f32 %v573, %v636
    %v653 = vmul.f32 %v587, %v637
    %v654 = vmul.f32 %v601, %v638
    %v655 = vmul.f32 %v615, %v639
    %v656 = vmul.f32 %v629, %v640
    %v657 = vmul.f32 %v533, %v641
    %v658 = vmul.f32 %v547, %v642
    %v659 = vmul.f32 %v561, %v643
    %v660 = vmul.f32 %v575, %v644
    %v661 = vmul.f32 %v589, %v645
    %v662 = vmul.f32 %v603, %v646
    %v663 = vmul.f32 %v617, %v647
    %v664 = vmul.f32 %v631, %v648
    %v665 = vsub.f32 2.0, %v649
    %v666 = vsub.f32 2.0, %v650
    %v667 = vsub.f32 2.0, %v651
    %v668 = vsub.f32 2.0, %v652
    %v669 = vsub.f32 2.0, %v653
    %v670 = vsub.f32 2.0, %v654
    %v671 = vsub.f32 2.0, %v655
    %v672 = vsub.f32 2.0, %v656
    %v673 = vsub.f32 2.0, %v657
    %v674 = vsub.f32 2.0, %v658
    %v675 = vsub.f32 2.0, %v659
    %v676 = vsub.f32 2.0, %v660
    %v677 = vsub.f32 2.0, %v661
    %v678 = vsub.f32 2.0, %v662
    %v679 = vsub.f32 2.0, %v663
    %v680 = vsub.f32 2.0, %v664
    %v681 = vmul.f32 %v633, %v665
    %v682 = vmul.f32 %v634, %v666
    %v683 = vmul.f32 %v635, %v667
    %v684 = vmul.f32 %v636, %v668
    %v685 = vmul.f32 %v637, %v669
    %v686 = vmul.f32 %v638, %v670
    %v687 = vmul.f32 %v639, %v671
    %v688 = vmul.f32 %v640, %v672
    %v689 = vmul.f32 %v641, %v673
    %v690 = vmul.f32 %v642, %v674
    %v691 = vmul.f32 %v643, %v675
    %v692 = vmul.f32 %v644, %v676
    %v693 = vmul.f32 %v645, %v677
    %v694 = vmul.f32 %v646, %v678
    %v695 = vmul.f32 %v647, %v679
    %v696 = vmul.f32 %v648, %v680
    %v697 = vmul.f32 %v497, %v170
    %v698 = vmul.f32 %v498, %v184
    %v699 = vmul.f32 %v499, %v198
    %v700 = vmul.f32 %v500, %v212
    %v701 = vmul.f32 %v501, %v226
    %v702 = vmul.f32 %v502, %v240
    %v703 = vmul.f32 %v503, %v254
    %v704 = vmul.f32 %v504, %v268
    %v705 = vmul.f32 %v505, %v172
    %v706 = vmul.f32 %v506, %v186
    %v707 = vmul.f32 %v507, %v200
    %v708 = vmul.f32 %v508, %v214
    %v709 = vmul.f32 %v509, %v228
    %v710 = vmul.f32 %v510, %v242
    %v711 = vmul.f32 %v511, %v256
    %v712 = vmul.f32 %v512, %v270
    %v713 = vmul.f32 %v697, %v681
    %v714 = vmul.f32 %v698, %v682
    %v715 = vmul.f32 %v699, %v683
    %v716 = vmul.f32 %v700, %v684
    %v717 = vmul.f32 %v701, %v685
    %v718 = vmul.f32 %v702, %v686
    %v719 = vmul.f32 %v703, %v687
    %v720 = vmul.f32 %v704, %v688
    %v721 = vmul.f32 %v705, %v689
    %v722 = vmul.f32 %v706, %v690
    %v723 = vmul.f32 %v707, %v691
    %v724 = vmul.f32 %v708, %v692
    %v725 = vmul.f32 %v709, %v693
    %v726 = vmul.f32 %v710, %v694
    %v727 = vmul.f32 %v711, %v695
    %v728 = vmul.f32 %v712, %v696
    %v729 = vpack.c.bf16 %v721, %v713
    %v730 = vpack.c.bf16 %v722, %v714
    %v731 = vpack.c.bf16 %v723, %v715
    %v732 = vpack.c.bf16 %v724, %v716
    %v733 = vpack.c.bf16 %v725, %v717
    %v734 = vpack.c.bf16 %v726, %v718
    %v735 = vpack.c.bf16 %v727, %v719
    %v736 = vpack.c.bf16 %v728, %v720
    %737 = vmatpush.bf16.msra.mxu0 0
    %738 = vmatpush.bf16.msra.mxu0 0
    %739 = vmatpush.bf16.msra.mxu0 0
    %740 = vmatpush.bf16.msra.mxu0 0
    %741 = vmatpush.bf16.msra.mxu0 0
    %742 = vmatpush.bf16.msra.mxu0 0
    %743 = vmatpush.bf16.msra.mxu0 0
    %744 = vmatpush.bf16.msra.mxu0 %v729
    %745 = vmatmul.bf16.gmra.mxu0 %v303
    %v746 = vpop.f32.mrf.mxu0
    %v747 = vadd.f32 1e-08, %v746
    %v748 = vpop.f32.mrf.mxu0
    %v749 = vadd.f32 1e-08, %v748
    %750 = vdwg.mxu0
    %751 = vmatpush.bf16.msra.mxu0 0
    %752 = vmatpush.bf16.msra.mxu0 0
    %753 = vmatpush.bf16.msra.mxu0 0
    %754 = vmatpush.bf16.msra.mxu0 0
    %755 = vmatpush.bf16.msra.mxu0 0
    %756 = vmatpush.bf16.msra.mxu0 0
    %757 = vmatpush.bf16.msra.mxu0 0
    %758 = vmatpush.bf16.msra.mxu0 %v730
    %759 = vmatmul.bf16.gmra.mxu0 %v303
    %v760 = vpop.f32.mrf.mxu0
    %v761 = vadd.f32 1e-08, %v760
    %v762 = vpop.f32.mrf.mxu0
    %v763 = vadd.f32 1e-08, %v762
    %764 = vdwg.mxu0
    %765 = vmatpush.bf16.msra.mxu0 0
    %766 = vmatpush.bf16.msra.mxu0 0
    %767 = vmatpush.bf16.msra.mxu0 0
    %768 = vmatpush.bf16.msra.mxu0 0
    %769 = vmatpush.bf16.msra.mxu0 0
    %770 = vmatpush.bf16.msra.mxu0 0
    %771 = vmatpush.bf16.msra.mxu0 0
    %772 = vmatpush.bf16.msra.mxu0 %v731
    %773 = vmatmul.bf16.gmra.mxu0 %v303
    %v774 = vpop.f32.mrf.mxu0
    %v775 = vadd.f32 1e-08, %v774
    %v776 = vpop.f32.mrf.mxu0
    %v777 = vadd.f32 1e-08, %v776
    %778 = vdwg.mxu0
    %779 = vmatpush.bf16.msra.mxu0 0
    %780 = vmatpush.bf16.msra.mxu0 0
    %781 = vmatpush.bf16.msra.mxu0 0
    %782 = vmatpush.bf16.msra.mxu0 0
    %783 = vmatpush.bf16.msra.mxu0 0
    %784 = vmatpush.bf16.msra.mxu0 0
    %785 = vmatpush.bf16.msra.mxu0 0
    %786 = vmatpush.bf16.msra.mxu0 %v732
    %787 = vmatmul.bf16.gmra.mxu0 %v303
    %v788 = vpop.f32.mrf.mxu0
    %v789 = vadd.f32 1e-08, %v788
    %v790 = vpop.f32.mrf.mxu0
    %v791 = vadd.f32 1e-08, %v790
    %792 = vdwg.mxu0
    %793 = vmatpush.bf16.msra.mxu0 0
    %794 = vmatpush.bf16.msra.mxu0 0
    %795 = vmatpush.bf16.msra.mxu0 0
    %796 = vmatpush.bf16.msra.mxu0 0
    %797 = vmatpush.bf16.msra.mxu0 0
    %798 = vmatpush.bf16.msra.mxu0 0
    %799 = vmatpush.bf16.msra.mxu0 0
    %800 = vmatpush.bf16.msra.mxu0 %v733
    %801 = vmatmul.bf16.gmra.mxu0 %v303
    %v802 = vpop.f32.mrf.mxu0
    %v803 = vadd.f32 1e-08, %v802
    %v804 = vpop.f32.mrf.mxu0
    %v805 = vadd.f32 1e-08, %v804
    %806 = vdwg.mxu0
    %807 = vmatpush.bf16.msra.mxu0 0
    %808 = vmatpush.bf16.msra.mxu0 0
    %809 = vmatpush.bf16.msra.mxu0 0
    %810 = vmatpush.bf16.msra.mxu0 0
    %811 = vmatpush.bf16.msra.mxu0 0
    %812 = vmatpush.bf16.msra.mxu0 0
    %813 = vmatpush.bf16.msra.mxu0 0
    %814 = vmatpush.bf16.msra.mxu0 %v734
    %815 = vmatmul.bf16.gmra.mxu0 %v303
    %v816 = vpop.f32.mrf.mxu0
    %v817 = vadd.f32 1e-08, %v816
    %v818 = vpop.f32.mrf.mxu0
    %v819 = vadd.f32 1e-08, %v818
    %820 = vdwg.mxu0
    %821 = vmatpush.bf16.msra.mxu0 0
    %822 = vmatpush.bf16.msra.mxu0 0
    %823 = vmatpush.bf16.msra.mxu0 0
    %824 = vmatpush.bf16.msra.mxu0 0
    %825 = vmatpush.bf16.msra.mxu0 0
    %826 = vmatpush.bf16.msra.mxu0 0
    %827 = vmatpush.bf16.msra.mxu0 0
    %828 = vmatpush.bf16.msra.mxu0 %v735
    %829 = vmatmul.bf16.gmra.mxu0 %v303
    %v830 = vpop.f32.mrf.mxu0
    %v831 = vadd.f32 1e-08, %v830
    %v832 = vpop.f32.mrf.mxu0
    %v833 = vadd.f32 1e-08, %v832
    %834 = vdwg.mxu0
    %835 = vmatpush.bf16.msra.mxu0 0
    %836 = vmatpush.bf16.msra.mxu0 0
    %837 = vmatpush.bf16.msra.mxu0 0
    %838 = vmatpush.bf16.msra.mxu0 0
    %839 = vmatpush.bf16.msra.mxu0 0
    %840 = vmatpush.bf16.msra.mxu0 0
    %841 = vmatpush.bf16.msra.mxu0 0
    %842 = vmatpush.bf16.msra.mxu0 %v736
    %843 = vmatmul.bf16.gmra.mxu0 %v303
    %v844 = vpop.f32.mrf.mxu0
    %v845 = vadd.f32 1e-08, %v844
    %v846 = vpop.f32.mrf.mxu0
    %v847 = vadd.f32 1e-08, %v846
    %848 = vdwg.mxu0
    %v849 = vrcp.pop %v747
    %v850 = vrcp.pop %v761
    %v851 = vrcp.pop %v775
    %v852 = vrcp.pop %v789
    %v853 = vrcp.pop %v803
    %v854 = vrcp.pop %v817
    %v855 = vrcp.pop %v831
    %v856 = vrcp.pop %v845
    %v857 = vrcp.pop %v749
    %v858 = vrcp.pop %v763
    %v859 = vrcp.pop %v777
    %v860 = vrcp.pop %v791
    %v861 = vrcp.pop %v805
    %v862 = vrcp.pop %v819
    %v863 = vrcp.pop %v833
    %v864 = vrcp.pop %v847
    %v865 = vmul.f32 %v747, %v849
    %v866 = vmul.f32 %v761, %v850
    %v867 = vmul.f32 %v775, %v851
    %v868 = vmul.f32 %v789, %v852
    %v869 = vmul.f32 %v803, %v853
    %v870 = vmul.f32 %v817, %v854
    %v871 = vmul.f32 %v831, %v855
    %v872 = vmul.f32 %v845, %v856
    %v873 = vmul.f32 %v749, %v857
    %v874 = vmul.f32 %v763, %v858
    %v875 = vmul.f32 %v777, %v859
    %v876 = vmul.f32 %v791, %v860
    %v877 = vmul.f32 %v805, %v861
    %v878 = vmul.f32 %v819, %v862
    %v879 = vmul.f32 %v833, %v863
    %v880 = vmul.f32 %v847, %v864
    %v881 = vsub.f32 2.0, %v865
    %v882 = vsub.f32 2.0, %v866
    %v883 = vsub.f32 2.0, %v867
    %v884 = vsub.f32 2.0, %v868
    %v885 = vsub.f32 2.0, %v869
    %v886 = vsub.f32 2.0, %v870
    %v887 = vsub.f32 2.0, %v871
    %v888 = vsub.f32 2.0, %v872
    %v889 = vsub.f32 2.0, %v873
    %v890 = vsub.f32 2.0, %v874
    %v891 = vsub.f32 2.0, %v875
    %v892 = vsub.f32 2.0, %v876
    %v893 = vsub.f32 2.0, %v877
    %v894 = vsub.f32 2.0, %v878
    %v895 = vsub.f32 2.0, %v879
    %v896 = vsub.f32 2.0, %v880
    %v897 = vmul.f32 %v849, %v881
    %v898 = vmul.f32 %v850, %v882
    %v899 = vmul.f32 %v851, %v883
    %v900 = vmul.f32 %v852, %v884
    %v901 = vmul.f32 %v853, %v885
    %v902 = vmul.f32 %v854, %v886
    %v903 = vmul.f32 %v855, %v887
    %v904 = vmul.f32 %v856, %v888
    %v905 = vmul.f32 %v857, %v889
    %v906 = vmul.f32 %v858, %v890
    %v907 = vmul.f32 %v859, %v891
    %v908 = vmul.f32 %v860, %v892
    %v909 = vmul.f32 %v861, %v893
    %v910 = vmul.f32 %v862, %v894
    %v911 = vmul.f32 %v863, %v895
    %v912 = vmul.f32 %v864, %v896
    %v913 = vmul.f32 %v713, %v170
    %v914 = vmul.f32 %v714, %v184
    %v915 = vmul.f32 %v715, %v198
    %v916 = vmul.f32 %v716, %v212
    %v917 = vmul.f32 %v717, %v226
    %v918 = vmul.f32 %v718, %v240
    %v919 = vmul.f32 %v719, %v254
    %v920 = vmul.f32 %v720, %v268
    %v921 = vmul.f32 %v721, %v172
    %v922 = vmul.f32 %v722, %v186
    %v923 = vmul.f32 %v723, %v200
    %v924 = vmul.f32 %v724, %v214
    %v925 = vmul.f32 %v725, %v228
    %v926 = vmul.f32 %v726, %v242
    %v927 = vmul.f32 %v727, %v256
    %v928 = vmul.f32 %v728, %v270
    %v929 = vmul.f32 %v913, %v897
    %v930 = vmul.f32 %v914, %v898
    %v931 = vmul.f32 %v915, %v899
    %v932 = vmul.f32 %v916, %v900
    %v933 = vmul.f32 %v917, %v901
    %v934 = vmul.f32 %v918, %v902
    %v935 = vmul.f32 %v919, %v903
    %v936 = vmul.f32 %v920, %v904
    %v937 = vmul.f32 %v921, %v905
    %v938 = vmul.f32 %v922, %v906
    %v939 = vmul.f32 %v923, %v907
    %v940 = vmul.f32 %v924, %v908
    %v941 = vmul.f32 %v925, %v909
    %v942 = vmul.f32 %v926, %v910
    %v943 = vmul.f32 %v927, %v911
    %v944 = vmul.f32 %v928, %v912
    %v945 = vpack.c.bf16 %v937, %v929
    %v946 = vpack.c.bf16 %v938, %v930
    %v947 = vpack.c.bf16 %v939, %v931
    %v948 = vpack.c.bf16 %v940, %v932
    %v949 = vpack.c.bf16 %v941, %v933
    %v950 = vpack.c.bf16 %v942, %v934
    %v951 = vpack.c.bf16 %v943, %v935
    %v952 = vpack.c.bf16 %v944, %v936
    %953 = vmatpush.bf16.msra.mxu0 0
    %954 = vmatpush.bf16.msra.mxu0 0
    %955 = vmatpush.bf16.msra.mxu0 0
    %956 = vmatpush.bf16.msra.mxu0 0
    %957 = vmatpush.bf16.msra.mxu0 0
    %958 = vmatpush.bf16.msra.mxu0 0
    %959 = vmatpush.bf16.msra.mxu0 0
    %960 = vmatpush.bf16.msra.mxu0 %v945
    %961 = vmatmul.bf16.gmra.mxu0 %v303
    %v962 = vpop.f32.mrf.mxu0
    %v963 = vadd.f32 1e-08, %v962
    %v964 = vpop.f32.mrf.mxu0
    %v965 = vadd.f32 1e-08, %v964
    %966 = vdwg.mxu0
    %967 = vmatpush.bf16.msra.mxu0 0
    %968 = vmatpush.bf16.msra.mxu0 0
    %969 = vmatpush.bf16.msra.mxu0 0
    %970 = vmatpush.bf16.msra.mxu0 0
    %971 = vmatpush.bf16.msra.mxu0 0
    %972 = vmatpush.bf16.msra.mxu0 0
    %973 = vmatpush.bf16.msra.mxu0 0
    %974 = vmatpush.bf16.msra.mxu0 %v946
    %975 = vmatmul.bf16.gmra.mxu0 %v303
    %v976 = vpop.f32.mrf.mxu0
    %v977 = vadd.f32 1e-08, %v976
    %v978 = vpop.f32.mrf.mxu0
    %v979 = vadd.f32 1e-08, %v978
    %980 = vdwg.mxu0
    %981 = vmatpush.bf16.msra.mxu0 0
    %982 = vmatpush.bf16.msra.mxu0 0
    %983 = vmatpush.bf16.msra.mxu0 0
    %984 = vmatpush.bf16.msra.mxu0 0
    %985 = vmatpush.bf16.msra.mxu0 0
    %986 = vmatpush.bf16.msra.mxu0 0
    %987 = vmatpush.bf16.msra.mxu0 0
    %988 = vmatpush.bf16.msra.mxu0 %v947
    %989 = vmatmul.bf16.gmra.mxu0 %v303
    %v990 = vpop.f32.mrf.mxu0
    %v991 = vadd.f32 1e-08, %v990
    %v992 = vpop.f32.mrf.mxu0
    %v993 = vadd.f32 1e-08, %v992
    %994 = vdwg.mxu0
    %995 = vmatpush.bf16.msra.mxu0 0
    %996 = vmatpush.bf16.msra.mxu0 0
    %997 = vmatpush.bf16.msra.mxu0 0
    %998 = vmatpush.bf16.msra.mxu0 0
    %999 = vmatpush.bf16.msra.mxu0 0
    %1000 = vmatpush.bf16.msra.mxu0 0
    %1001 = vmatpush.bf16.msra.mxu0 0
    %1002 = vmatpush.bf16.msra.mxu0 %v948
    %1003 = vmatmul.bf16.gmra.mxu0 %v303
    %v1004 = vpop.f32.mrf.mxu0
    %v1005 = vadd.f32 1e-08, %v1004
    %v1006 = vpop.f32.mrf.mxu0
    %v1007 = vadd.f32 1e-08, %v1006
    %1008 = vdwg.mxu0
    %1009 = vmatpush.bf16.msra.mxu0 0
    %1010 = vmatpush.bf16.msra.mxu0 0
    %1011 = vmatpush.bf16.msra.mxu0 0
    %1012 = vmatpush.bf16.msra.mxu0 0
    %1013 = vmatpush.bf16.msra.mxu0 0
    %1014 = vmatpush.bf16.msra.mxu0 0
    %1015 = vmatpush.bf16.msra.mxu0 0
    %1016 = vmatpush.bf16.msra.mxu0 %v949
    %1017 = vmatmul.bf16.gmra.mxu0 %v303
    %v1018 = vpop.f32.mrf.mxu0
    %v1019 = vadd.f32 1e-08, %v1018
    %v1020 = vpop.f32.mrf.mxu0
    %v1021 = vadd.f32 1e-08, %v1020
    %1022 = vdwg.mxu0
    %1023 = vmatpush.bf16.msra.mxu0 0
    %1024 = vmatpush.bf16.msra.mxu0 0
    %1025 = vmatpush.bf16.msra.mxu0 0
    %1026 = vmatpush.bf16.msra.mxu0 0
    %1027 = vmatpush.bf16.msra.mxu0 0
    %1028 = vmatpush.bf16.msra.mxu0 0
    %1029 = vmatpush.bf16.msra.mxu0 0
    %1030 = vmatpush.bf16.msra.mxu0 %v950
    %1031 = vmatmul.bf16.gmra.mxu0 %v303
    %v1032 = vpop.f32.mrf.mxu0
    %v1033 = vadd.f32 1e-08, %v1032
    %v1034 = vpop.f32.mrf.mxu0
    %v1035 = vadd.f32 1e-08, %v1034
    %1036 = vdwg.mxu0
    %1037 = vmatpush.bf16.msra.mxu0 0
    %1038 = vmatpush.bf16.msra.mxu0 0
    %1039 = vmatpush.bf16.msra.mxu0 0
    %1040 = vmatpush.bf16.msra.mxu0 0
    %1041 = vmatpush.bf16.msra.mxu0 0
    %1042 = vmatpush.bf16.msra.mxu0 0
    %1043 = vmatpush.bf16.msra.mxu0 0
    %1044 = vmatpush.bf16.msra.mxu0 %v951
    %1045 = vmatmul.bf16.gmra.mxu0 %v303
    %v1046 = vpop.f32.mrf.mxu0
    %v1047 = vadd.f32 1e-08, %v1046
    %v1048 = vpop.f32.mrf.mxu0
    %v1049 = vadd.f32 1e-08, %v1048
    %1050 = vdwg.mxu0
    %1051 = vmatpush.bf16.msra.mxu0 0
    %1052 = vmatpush.bf16.msra.mxu0 0
    %1053 = vmatpush.bf16.msra.mxu0 0
    %1054 = vmatpush.bf16.msra.mxu0 0
    %1055 = vmatpush.bf16.msra.mxu0 0
    %1056 = vmatpush.bf16.msra.mxu0 0
    %1057 = vmatpush.bf16.msra.mxu0 0
    %1058 = vmatpush.bf16.msra.mxu0 %v952
    %1059 = vmatmul.bf16.gmra.mxu0 %v303
    %v1060 = vpop.f32.mrf.mxu0
    %v1061 = vadd.f32 1e-08, %v1060
    %v1062 = vpop.f32.mrf.mxu0
    %v1063 = vadd.f32 1e-08, %v1062
    %1064 = vdwg.mxu0
    %v1065 = vrcp.pop %v963
    %v1066 = vrcp.pop %v977
    %v1067 = vrcp.pop %v991
    %v1068 = vrcp.pop %v1005
    %v1069 = vrcp.pop %v1019
    %v1070 = vrcp.pop %v1033
    %v1071 = vrcp.pop %v1047
    %v1072 = vrcp.pop %v1061
    %v1073 = vrcp.pop %v965
    %v1074 = vrcp.pop %v979
    %v1075 = vrcp.pop %v993
    %v1076 = vrcp.pop %v1007
    %v1077 = vrcp.pop %v1021
    %v1078 = vrcp.pop %v1035
    %v1079 = vrcp.pop %v1049
    %v1080 = vrcp.pop %v1063
    %v1081 = vmul.f32 %v963, %v1065
    %v1082 = vmul.f32 %v977, %v1066
    %v1083 = vmul.f32 %v991, %v1067
    %v1084 = vmul.f32 %v1005, %v1068
    %v1085 = vmul.f32 %v1019, %v1069
    %v1086 = vmul.f32 %v1033, %v1070
    %v1087 = vmul.f32 %v1047, %v1071
    %v1088 = vmul.f32 %v1061, %v1072
    %v1089 = vmul.f32 %v965, %v1073
    %v1090 = vmul.f32 %v979, %v1074
    %v1091 = vmul.f32 %v993, %v1075
    %v1092 = vmul.f32 %v1007, %v1076
    %v1093 = vmul.f32 %v1021, %v1077
    %v1094 = vmul.f32 %v1035, %v1078
    %v1095 = vmul.f32 %v1049, %v1079
    %v1096 = vmul.f32 %v1063, %v1080
    %v1097 = vsub.f32 2.0, %v1081
    %v1098 = vsub.f32 2.0, %v1082
    %v1099 = vsub.f32 2.0, %v1083
    %v1100 = vsub.f32 2.0, %v1084
    %v1101 = vsub.f32 2.0, %v1085
    %v1102 = vsub.f32 2.0, %v1086
    %v1103 = vsub.f32 2.0, %v1087
    %v1104 = vsub.f32 2.0, %v1088
    %v1105 = vsub.f32 2.0, %v1089
    %v1106 = vsub.f32 2.0, %v1090
    %v1107 = vsub.f32 2.0, %v1091
    %v1108 = vsub.f32 2.0, %v1092
    %v1109 = vsub.f32 2.0, %v1093
    %v1110 = vsub.f32 2.0, %v1094
    %v1111 = vsub.f32 2.0, %v1095
    %v1112 = vsub.f32 2.0, %v1096
    %v1113 = vmul.f32 %v1065, %v1097
    %v1114 = vmul.f32 %v1066, %v1098
    %v1115 = vmul.f32 %v1067, %v1099
    %v1116 = vmul.f32 %v1068, %v1100
    %v1117 = vmul.f32 %v1069, %v1101
    %v1118 = vmul.f32 %v1070, %v1102
    %v1119 = vmul.f32 %v1071, %v1103
    %v1120 = vmul.f32 %v1072, %v1104
    %v1121 = vmul.f32 %v1073, %v1105
    %v1122 = vmul.f32 %v1074, %v1106
    %v1123 = vmul.f32 %v1075, %v1107
    %v1124 = vmul.f32 %v1076, %v1108
    %v1125 = vmul.f32 %v1077, %v1109
    %v1126 = vmul.f32 %v1078, %v1110
    %v1127 = vmul.f32 %v1079, %v1111
    %v1128 = vmul.f32 %v1080, %v1112
    %v1129 = vmul.f32 %v929, %v170
    %v1130 = vmul.f32 %v930, %v184
    %v1131 = vmul.f32 %v931, %v198
    %v1132 = vmul.f32 %v932, %v212
    %v1133 = vmul.f32 %v933, %v226
    %v1134 = vmul.f32 %v934, %v240
    %v1135 = vmul.f32 %v935, %v254
    %v1136 = vmul.f32 %v936, %v268
    %v1137 = vmul.f32 %v937, %v172
    %v1138 = vmul.f32 %v938, %v186
    %v1139 = vmul.f32 %v939, %v200
    %v1140 = vmul.f32 %v940, %v214
    %v1141 = vmul.f32 %v941, %v228
    %v1142 = vmul.f32 %v942, %v242
    %v1143 = vmul.f32 %v943, %v256
    %v1144 = vmul.f32 %v944, %v270
    %v1145 = vmul.f32 %v1129, %v1113
    %v1146 = vmul.f32 %v1130, %v1114
    %v1147 = vmul.f32 %v1131, %v1115
    %v1148 = vmul.f32 %v1132, %v1116
    %v1149 = vmul.f32 %v1133, %v1117
    %v1150 = vmul.f32 %v1134, %v1118
    %v1151 = vmul.f32 %v1135, %v1119
    %v1152 = vmul.f32 %v1136, %v1120
    %v1153 = vmul.f32 %v1137, %v1121
    %v1154 = vmul.f32 %v1138, %v1122
    %v1155 = vmul.f32 %v1139, %v1123
    %v1156 = vmul.f32 %v1140, %v1124
    %v1157 = vmul.f32 %v1141, %v1125
    %v1158 = vmul.f32 %v1142, %v1126
    %v1159 = vmul.f32 %v1143, %v1127
    %v1160 = vmul.f32 %v1144, %v1128
    %v1161 = vpack.c.bf16 %v1153, %v1145
    %v1162 = vpack.c.bf16 %v1154, %v1146
    %v1163 = vpack.c.bf16 %v1155, %v1147
    %v1164 = vpack.c.bf16 %v1156, %v1148
    %v1165 = vpack.c.bf16 %v1157, %v1149
    %v1166 = vpack.c.bf16 %v1158, %v1150
    %v1167 = vpack.c.bf16 %v1159, %v1151
    %v1168 = vpack.c.bf16 %v1160, %v1152
    %1169 = vmatpush.bf16.msra.mxu0 0
    %1170 = vmatpush.bf16.msra.mxu0 0
    %1171 = vmatpush.bf16.msra.mxu0 0
    %1172 = vmatpush.bf16.msra.mxu0 0
    %1173 = vmatpush.bf16.msra.mxu0 0
    %1174 = vmatpush.bf16.msra.mxu0 0
    %1175 = vmatpush.bf16.msra.mxu0 0
    %1176 = vmatpush.bf16.msra.mxu0 %v1161
    %1177 = vmatmul.bf16.gmra.mxu0 %v303
    %v1178 = vpop.f32.mrf.mxu0
    %v1179 = vadd.f32 1e-08, %v1178
    %v1180 = vpop.f32.mrf.mxu0
    %v1181 = vadd.f32 1e-08, %v1180
    %1182 = vdwg.mxu0
    %1183 = vmatpush.bf16.msra.mxu0 0
    %1184 = vmatpush.bf16.msra.mxu0 0
    %1185 = vmatpush.bf16.msra.mxu0 0
    %1186 = vmatpush.bf16.msra.mxu0 0
    %1187 = vmatpush.bf16.msra.mxu0 0
    %1188 = vmatpush.bf16.msra.mxu0 0
    %1189 = vmatpush.bf16.msra.mxu0 0
    %1190 = vmatpush.bf16.msra.mxu0 %v1162
    %1191 = vmatmul.bf16.gmra.mxu0 %v303
    %v1192 = vpop.f32.mrf.mxu0
    %v1193 = vadd.f32 1e-08, %v1192
    %v1194 = vpop.f32.mrf.mxu0
    %v1195 = vadd.f32 1e-08, %v1194
    %1196 = vdwg.mxu0
    %1197 = vmatpush.bf16.msra.mxu0 0
    %1198 = vmatpush.bf16.msra.mxu0 0
    %1199 = vmatpush.bf16.msra.mxu0 0
    %1200 = vmatpush.bf16.msra.mxu0 0
    %1201 = vmatpush.bf16.msra.mxu0 0
    %1202 = vmatpush.bf16.msra.mxu0 0
    %1203 = vmatpush.bf16.msra.mxu0 0
    %1204 = vmatpush.bf16.msra.mxu0 %v1163
    %1205 = vmatmul.bf16.gmra.mxu0 %v303
    %v1206 = vpop.f32.mrf.mxu0
    %v1207 = vadd.f32 1e-08, %v1206
    %v1208 = vpop.f32.mrf.mxu0
    %v1209 = vadd.f32 1e-08, %v1208
    %1210 = vdwg.mxu0
    %1211 = vmatpush.bf16.msra.mxu0 0
    %1212 = vmatpush.bf16.msra.mxu0 0
    %1213 = vmatpush.bf16.msra.mxu0 0
    %1214 = vmatpush.bf16.msra.mxu0 0
    %1215 = vmatpush.bf16.msra.mxu0 0
    %1216 = vmatpush.bf16.msra.mxu0 0
    %1217 = vmatpush.bf16.msra.mxu0 0
    %1218 = vmatpush.bf16.msra.mxu0 %v1164
    %1219 = vmatmul.bf16.gmra.mxu0 %v303
    %v1220 = vpop.f32.mrf.mxu0
    %v1221 = vadd.f32 1e-08, %v1220
    %v1222 = vpop.f32.mrf.mxu0
    %v1223 = vadd.f32 1e-08, %v1222
    %1224 = vdwg.mxu0
    %1225 = vmatpush.bf16.msra.mxu0 0
    %1226 = vmatpush.bf16.msra.mxu0 0
    %1227 = vmatpush.bf16.msra.mxu0 0
    %1228 = vmatpush.bf16.msra.mxu0 0
    %1229 = vmatpush.bf16.msra.mxu0 0
    %1230 = vmatpush.bf16.msra.mxu0 0
    %1231 = vmatpush.bf16.msra.mxu0 0
    %1232 = vmatpush.bf16.msra.mxu0 %v1165
    %1233 = vmatmul.bf16.gmra.mxu0 %v303
    %v1234 = vpop.f32.mrf.mxu0
    %v1235 = vadd.f32 1e-08, %v1234
    %v1236 = vpop.f32.mrf.mxu0
    %v1237 = vadd.f32 1e-08, %v1236
    %1238 = vdwg.mxu0
    %1239 = vmatpush.bf16.msra.mxu0 0
    %1240 = vmatpush.bf16.msra.mxu0 0
    %1241 = vmatpush.bf16.msra.mxu0 0
    %1242 = vmatpush.bf16.msra.mxu0 0
    %1243 = vmatpush.bf16.msra.mxu0 0
    %1244 = vmatpush.bf16.msra.mxu0 0
    %1245 = vmatpush.bf16.msra.mxu0 0
    %1246 = vmatpush.bf16.msra.mxu0 %v1166
    %1247 = vmatmul.bf16.gmra.mxu0 %v303
    %v1248 = vpop.f32.mrf.mxu0
    %v1249 = vadd.f32 1e-08, %v1248
    %v1250 = vpop.f32.mrf.mxu0
    %v1251 = vadd.f32 1e-08, %v1250
    %1252 = vdwg.mxu0
    %1253 = vmatpush.bf16.msra.mxu0 0
    %1254 = vmatpush.bf16.msra.mxu0 0
    %1255 = vmatpush.bf16.msra.mxu0 0
    %1256 = vmatpush.bf16.msra.mxu0 0
    %1257 = vmatpush.bf16.msra.mxu0 0
    %1258 = vmatpush.bf16.msra.mxu0 0
    %1259 = vmatpush.bf16.msra.mxu0 0
    %1260 = vmatpush.bf16.msra.mxu0 %v1167
    %1261 = vmatmul.bf16.gmra.mxu0 %v303
    %v1262 = vpop.f32.mrf.mxu0
    %v1263 = vadd.f32 1e-08, %v1262
    %v1264 = vpop.f32.mrf.mxu0
    %v1265 = vadd.f32 1e-08, %v1264
    %1266 = vdwg.mxu0
    %1267 = vmatpush.bf16.msra.mxu0 0
    %1268 = vmatpush.bf16.msra.mxu0 0
    %1269 = vmatpush.bf16.msra.mxu0 0
    %1270 = vmatpush.bf16.msra.mxu0 0
    %1271 = vmatpush.bf16.msra.mxu0 0
    %1272 = vmatpush.bf16.msra.mxu0 0
    %1273 = vmatpush.bf16.msra.mxu0 0
    %1274 = vmatpush.bf16.msra.mxu0 %v1168
    %1275 = vmatmul.bf16.gmra.mxu0 %v303
    %v1276 = vpop.f32.mrf.mxu0
    %v1277 = vadd.f32 1e-08, %v1276
    %v1278 = vpop.f32.mrf.mxu0
    %v1279 = vadd.f32 1e-08, %v1278
    %1280 = vdwg.mxu0
    %v1281 = vrcp.pop %v1179
    %v1282 = vrcp.pop %v1193
    %v1283 = vrcp.pop %v1207
    %v1284 = vrcp.pop %v1221
    %v1285 = vrcp.pop %v1235
    %v1286 = vrcp.pop %v1249
    %v1287 = vrcp.pop %v1263
    %v1288 = vrcp.pop %v1277
    %v1289 = vrcp.pop %v1181
    %v1290 = vrcp.pop %v1195
    %v1291 = vrcp.pop %v1209
    %v1292 = vrcp.pop %v1223
    %v1293 = vrcp.pop %v1237
    %v1294 = vrcp.pop %v1251
    %v1295 = vrcp.pop %v1265
    %v1296 = vrcp.pop %v1279
    %v1297 = vmul.f32 %v1179, %v1281
    %v1298 = vmul.f32 %v1193, %v1282
    %v1299 = vmul.f32 %v1207, %v1283
    %v1300 = vmul.f32 %v1221, %v1284
    %v1301 = vmul.f32 %v1235, %v1285
    %v1302 = vmul.f32 %v1249, %v1286
    %v1303 = vmul.f32 %v1263, %v1287
    %v1304 = vmul.f32 %v1277, %v1288
    %v1305 = vmul.f32 %v1181, %v1289
    %v1306 = vmul.f32 %v1195, %v1290
    %v1307 = vmul.f32 %v1209, %v1291
    %v1308 = vmul.f32 %v1223, %v1292
    %v1309 = vmul.f32 %v1237, %v1293
    %v1310 = vmul.f32 %v1251, %v1294
    %v1311 = vmul.f32 %v1265, %v1295
    %v1312 = vmul.f32 %v1279, %v1296
    %v1313 = vsub.f32 2.0, %v1297
    %v1314 = vsub.f32 2.0, %v1298
    %v1315 = vsub.f32 2.0, %v1299
    %v1316 = vsub.f32 2.0, %v1300
    %v1317 = vsub.f32 2.0, %v1301
    %v1318 = vsub.f32 2.0, %v1302
    %v1319 = vsub.f32 2.0, %v1303
    %v1320 = vsub.f32 2.0, %v1304
    %v1321 = vsub.f32 2.0, %v1305
    %v1322 = vsub.f32 2.0, %v1306
    %v1323 = vsub.f32 2.0, %v1307
    %v1324 = vsub.f32 2.0, %v1308
    %v1325 = vsub.f32 2.0, %v1309
    %v1326 = vsub.f32 2.0, %v1310
    %v1327 = vsub.f32 2.0, %v1311
    %v1328 = vsub.f32 2.0, %v1312
    %v1329 = vmul.f32 %v1281, %v1313
    %v1330 = vmul.f32 %v1282, %v1314
    %v1331 = vmul.f32 %v1283, %v1315
    %v1332 = vmul.f32 %v1284, %v1316
    %v1333 = vmul.f32 %v1285, %v1317
    %v1334 = vmul.f32 %v1286, %v1318
    %v1335 = vmul.f32 %v1287, %v1319
    %v1336 = vmul.f32 %v1288, %v1320
    %v1337 = vmul.f32 %v1289, %v1321
    %v1338 = vmul.f32 %v1290, %v1322
    %v1339 = vmul.f32 %v1291, %v1323
    %v1340 = vmul.f32 %v1292, %v1324
    %v1341 = vmul.f32 %v1293, %v1325
    %v1342 = vmul.f32 %v1294, %v1326
    %v1343 = vmul.f32 %v1295, %v1327
    %v1344 = vmul.f32 %v1296, %v1328
    %v1345 = vmul.f32 %v1145, %v170
    %v1346 = vmul.f32 %v1146, %v184
    %v1347 = vmul.f32 %v1147, %v198
    %v1348 = vmul.f32 %v1148, %v212
    %v1349 = vmul.f32 %v1149, %v226
    %v1350 = vmul.f32 %v1150, %v240
    %v1351 = vmul.f32 %v1151, %v254
    %v1352 = vmul.f32 %v1152, %v268
    %v1353 = vmul.f32 %v1153, %v172
    %v1354 = vmul.f32 %v1154, %v186
    %v1355 = vmul.f32 %v1155, %v200
    %v1356 = vmul.f32 %v1156, %v214
    %v1357 = vmul.f32 %v1157, %v228
    %v1358 = vmul.f32 %v1158, %v242
    %v1359 = vmul.f32 %v1159, %v256
    %v1360 = vmul.f32 %v1160, %v270
    %v1361 = vmul.f32 %v1345, %v1329
    %v1362 = vmul.f32 %v1346, %v1330
    %v1363 = vmul.f32 %v1347, %v1331
    %v1364 = vmul.f32 %v1348, %v1332
    %v1365 = vmul.f32 %v1349, %v1333
    %v1366 = vmul.f32 %v1350, %v1334
    %v1367 = vmul.f32 %v1351, %v1335
    %v1368 = vmul.f32 %v1352, %v1336
    %v1369 = vmul.f32 %v1353, %v1337
    %v1370 = vmul.f32 %v1354, %v1338
    %v1371 = vmul.f32 %v1355, %v1339
    %v1372 = vmul.f32 %v1356, %v1340
    %v1373 = vmul.f32 %v1357, %v1341
    %v1374 = vmul.f32 %v1358, %v1342
    %v1375 = vmul.f32 %v1359, %v1343
    %v1376 = vmul.f32 %v1360, %v1344
    %v1377 = vpack.c.bf16 %v1369, %v1361
    %v1378 = vpack.c.bf16 %v1370, %v1362
    %v1379 = vpack.c.bf16 %v1371, %v1363
    %v1380 = vpack.c.bf16 %v1372, %v1364
    %v1381 = vpack.c.bf16 %v1373, %v1365
    %v1382 = vpack.c.bf16 %v1374, %v1366
    %v1383 = vpack.c.bf16 %v1375, %v1367
    %v1384 = vpack.c.bf16 %v1376, %v1368
    %1385 = vmatpush.bf16.msra.mxu0 0
    %1386 = vmatpush.bf16.msra.mxu0 0
    %1387 = vmatpush.bf16.msra.mxu0 0
    %1388 = vmatpush.bf16.msra.mxu0 0
    %1389 = vmatpush.bf16.msra.mxu0 0
    %1390 = vmatpush.bf16.msra.mxu0 0
    %1391 = vmatpush.bf16.msra.mxu0 0
    %1392 = vmatpush.bf16.msra.mxu0 %v1377
    %1393 = vmatmul.bf16.gmra.mxu0 %v303
    %v1394 = vpop.f32.mrf.mxu0
    %v1395 = vadd.f32 1e-08, %v1394
    %v1396 = vpop.f32.mrf.mxu0
    %v1397 = vadd.f32 1e-08, %v1396
    %1398 = vdwg.mxu0
    %1399 = vmatpush.bf16.msra.mxu0 0
    %1400 = vmatpush.bf16.msra.mxu0 0
    %1401 = vmatpush.bf16.msra.mxu0 0
    %1402 = vmatpush.bf16.msra.mxu0 0
    %1403 = vmatpush.bf16.msra.mxu0 0
    %1404 = vmatpush.bf16.msra.mxu0 0
    %1405 = vmatpush.bf16.msra.mxu0 0
    %1406 = vmatpush.bf16.msra.mxu0 %v1378
    %1407 = vmatmul.bf16.gmra.mxu0 %v303
    %v1408 = vpop.f32.mrf.mxu0
    %v1409 = vadd.f32 1e-08, %v1408
    %v1410 = vpop.f32.mrf.mxu0
    %v1411 = vadd.f32 1e-08, %v1410
    %1412 = vdwg.mxu0
    %1413 = vmatpush.bf16.msra.mxu0 0
    %1414 = vmatpush.bf16.msra.mxu0 0
    %1415 = vmatpush.bf16.msra.mxu0 0
    %1416 = vmatpush.bf16.msra.mxu0 0
    %1417 = vmatpush.bf16.msra.mxu0 0
    %1418 = vmatpush.bf16.msra.mxu0 0
    %1419 = vmatpush.bf16.msra.mxu0 0
    %1420 = vmatpush.bf16.msra.mxu0 %v1379
    %1421 = vmatmul.bf16.gmra.mxu0 %v303
    %v1422 = vpop.f32.mrf.mxu0
    %v1423 = vadd.f32 1e-08, %v1422
    %v1424 = vpop.f32.mrf.mxu0
    %v1425 = vadd.f32 1e-08, %v1424
    %1426 = vdwg.mxu0
    %1427 = vmatpush.bf16.msra.mxu0 0
    %1428 = vmatpush.bf16.msra.mxu0 0
    %1429 = vmatpush.bf16.msra.mxu0 0
    %1430 = vmatpush.bf16.msra.mxu0 0
    %1431 = vmatpush.bf16.msra.mxu0 0
    %1432 = vmatpush.bf16.msra.mxu0 0
    %1433 = vmatpush.bf16.msra.mxu0 0
    %1434 = vmatpush.bf16.msra.mxu0 %v1380
    %1435 = vmatmul.bf16.gmra.mxu0 %v303
    %v1436 = vpop.f32.mrf.mxu0
    %v1437 = vadd.f32 1e-08, %v1436
    %v1438 = vpop.f32.mrf.mxu0
    %v1439 = vadd.f32 1e-08, %v1438
    %1440 = vdwg.mxu0
    %1441 = vmatpush.bf16.msra.mxu0 0
    %1442 = vmatpush.bf16.msra.mxu0 0
    %1443 = vmatpush.bf16.msra.mxu0 0
    %1444 = vmatpush.bf16.msra.mxu0 0
    %1445 = vmatpush.bf16.msra.mxu0 0
    %1446 = vmatpush.bf16.msra.mxu0 0
    %1447 = vmatpush.bf16.msra.mxu0 0
    %1448 = vmatpush.bf16.msra.mxu0 %v1381
    %1449 = vmatmul.bf16.gmra.mxu0 %v303
    %v1450 = vpop.f32.mrf.mxu0
    %v1451 = vadd.f32 1e-08, %v1450
    %v1452 = vpop.f32.mrf.mxu0
    %v1453 = vadd.f32 1e-08, %v1452
    %1454 = vdwg.mxu0
    %1455 = vmatpush.bf16.msra.mxu0 0
    %1456 = vmatpush.bf16.msra.mxu0 0
    %1457 = vmatpush.bf16.msra.mxu0 0
    %1458 = vmatpush.bf16.msra.mxu0 0
    %1459 = vmatpush.bf16.msra.mxu0 0
    %1460 = vmatpush.bf16.msra.mxu0 0
    %1461 = vmatpush.bf16.msra.mxu0 0
    %1462 = vmatpush.bf16.msra.mxu0 %v1382
    %1463 = vmatmul.bf16.gmra.mxu0 %v303
    %v1464 = vpop.f32.mrf.mxu0
    %v1465 = vadd.f32 1e-08, %v1464
    %v1466 = vpop.f32.mrf.mxu0
    %v1467 = vadd.f32 1e-08, %v1466
    %1468 = vdwg.mxu0
    %1469 = vmatpush.bf16.msra.mxu0 0
    %1470 = vmatpush.bf16.msra.mxu0 0
    %1471 = vmatpush.bf16.msra.mxu0 0
    %1472 = vmatpush.bf16.msra.mxu0 0
    %1473 = vmatpush.bf16.msra.mxu0 0
    %1474 = vmatpush.bf16.msra.mxu0 0
    %1475 = vmatpush.bf16.msra.mxu0 0
    %1476 = vmatpush.bf16.msra.mxu0 %v1383
    %1477 = vmatmul.bf16.gmra.mxu0 %v303
    %v1478 = vpop.f32.mrf.mxu0
    %v1479 = vadd.f32 1e-08, %v1478
    %v1480 = vpop.f32.mrf.mxu0
    %v1481 = vadd.f32 1e-08, %v1480
    %1482 = vdwg.mxu0
    %1483 = vmatpush.bf16.msra.mxu0 0
    %1484 = vmatpush.bf16.msra.mxu0 0
    %1485 = vmatpush.bf16.msra.mxu0 0
    %1486 = vmatpush.bf16.msra.mxu0 0
    %1487 = vmatpush.bf16.msra.mxu0 0
    %1488 = vmatpush.bf16.msra.mxu0 0
    %1489 = vmatpush.bf16.msra.mxu0 0
    %1490 = vmatpush.bf16.msra.mxu0 %v1384
    %1491 = vmatmul.bf16.gmra.mxu0 %v303
    %v1492 = vpop.f32.mrf.mxu0
    %v1493 = vadd.f32 1e-08, %v1492
    %v1494 = vpop.f32.mrf.mxu0
    %v1495 = vadd.f32 1e-08, %v1494
    %1496 = vdwg.mxu0
    %v1497 = vrcp.pop %v1395
    %v1498 = vrcp.pop %v1409
    %v1499 = vrcp.pop %v1423
    %v1500 = vrcp.pop %v1437
    %v1501 = vrcp.pop %v1451
    %v1502 = vrcp.pop %v1465
    %v1503 = vrcp.pop %v1479
    %v1504 = vrcp.pop %v1493
    %v1505 = vrcp.pop %v1397
    %v1506 = vrcp.pop %v1411
    %v1507 = vrcp.pop %v1425
    %v1508 = vrcp.pop %v1439
    %v1509 = vrcp.pop %v1453
    %v1510 = vrcp.pop %v1467
    %v1511 = vrcp.pop %v1481
    %v1512 = vrcp.pop %v1495
    %v1513 = vmul.f32 %v1395, %v1497
    %v1514 = vmul.f32 %v1409, %v1498
    %v1515 = vmul.f32 %v1423, %v1499
    %v1516 = vmul.f32 %v1437, %v1500
    %v1517 = vmul.f32 %v1451, %v1501
    %v1518 = vmul.f32 %v1465, %v1502
    %v1519 = vmul.f32 %v1479, %v1503
    %v1520 = vmul.f32 %v1493, %v1504
    %v1521 = vmul.f32 %v1397, %v1505
    %v1522 = vmul.f32 %v1411, %v1506
    %v1523 = vmul.f32 %v1425, %v1507
    %v1524 = vmul.f32 %v1439, %v1508
    %v1525 = vmul.f32 %v1453, %v1509
    %v1526 = vmul.f32 %v1467, %v1510
    %v1527 = vmul.f32 %v1481, %v1511
    %v1528 = vmul.f32 %v1495, %v1512
    %v1529 = vsub.f32 2.0, %v1513
    %v1530 = vsub.f32 2.0, %v1514
    %v1531 = vsub.f32 2.0, %v1515
    %v1532 = vsub.f32 2.0, %v1516
    %v1533 = vsub.f32 2.0, %v1517
    %v1534 = vsub.f32 2.0, %v1518
    %v1535 = vsub.f32 2.0, %v1519
    %v1536 = vsub.f32 2.0, %v1520
    %v1537 = vsub.f32 2.0, %v1521
    %v1538 = vsub.f32 2.0, %v1522
    %v1539 = vsub.f32 2.0, %v1523
    %v1540 = vsub.f32 2.0, %v1524
    %v1541 = vsub.f32 2.0, %v1525
    %v1542 = vsub.f32 2.0, %v1526
    %v1543 = vsub.f32 2.0, %v1527
    %v1544 = vsub.f32 2.0, %v1528
    %v1545 = vmul.f32 %v1497, %v1529
    %v1546 = vmul.f32 %v1498, %v1530
    %v1547 = vmul.f32 %v1499, %v1531
    %v1548 = vmul.f32 %v1500, %v1532
    %v1549 = vmul.f32 %v1501, %v1533
    %v1550 = vmul.f32 %v1502, %v1534
    %v1551 = vmul.f32 %v1503, %v1535
    %v1552 = vmul.f32 %v1504, %v1536
    %v1553 = vmul.f32 %v1505, %v1537
    %v1554 = vmul.f32 %v1506, %v1538
    %v1555 = vmul.f32 %v1507, %v1539
    %v1556 = vmul.f32 %v1508, %v1540
    %v1557 = vmul.f32 %v1509, %v1541
    %v1558 = vmul.f32 %v1510, %v1542
    %v1559 = vmul.f32 %v1511, %v1543
    %v1560 = vmul.f32 %v1512, %v1544
    %v1561 = vmul.f32 %v1361, %v170
    %v1562 = vmul.f32 %v1362, %v184
    %v1563 = vmul.f32 %v1363, %v198
    %v1564 = vmul.f32 %v1364, %v212
    %v1565 = vmul.f32 %v1365, %v226
    %v1566 = vmul.f32 %v1366, %v240
    %v1567 = vmul.f32 %v1367, %v254
    %v1568 = vmul.f32 %v1368, %v268
    %v1569 = vmul.f32 %v1369, %v172
    %v1570 = vmul.f32 %v1370, %v186
    %v1571 = vmul.f32 %v1371, %v200
    %v1572 = vmul.f32 %v1372, %v214
    %v1573 = vmul.f32 %v1373, %v228
    %v1574 = vmul.f32 %v1374, %v242
    %v1575 = vmul.f32 %v1375, %v256
    %v1576 = vmul.f32 %v1376, %v270
    %v1577 = vmul.f32 %v1561, %v1545
    %v1578 = vmul.f32 %v1562, %v1546
    %v1579 = vmul.f32 %v1563, %v1547
    %v1580 = vmul.f32 %v1564, %v1548
    %v1581 = vmul.f32 %v1565, %v1549
    %v1582 = vmul.f32 %v1566, %v1550
    %v1583 = vmul.f32 %v1567, %v1551
    %v1584 = vmul.f32 %v1568, %v1552
    %v1585 = vmul.f32 %v1569, %v1553
    %v1586 = vmul.f32 %v1570, %v1554
    %v1587 = vmul.f32 %v1571, %v1555
    %v1588 = vmul.f32 %v1572, %v1556
    %v1589 = vmul.f32 %v1573, %v1557
    %v1590 = vmul.f32 %v1574, %v1558
    %v1591 = vmul.f32 %v1575, %v1559
    %v1592 = vmul.f32 %v1576, %v1560
    %v1593 = vpack.c.bf16 %v1585, %v1577
    %v1594 = vpack.c.bf16 %v1586, %v1578
    %v1595 = vpack.c.bf16 %v1587, %v1579
    %v1596 = vpack.c.bf16 %v1588, %v1580
    %v1597 = vpack.c.bf16 %v1589, %v1581
    %v1598 = vpack.c.bf16 %v1590, %v1582
    %v1599 = vpack.c.bf16 %v1591, %v1583
    %v1600 = vpack.c.bf16 %v1592, %v1584
    %1601 = vmatpush.bf16.msra.mxu0 0
    %1602 = vmatpush.bf16.msra.mxu0 0
    %1603 = vmatpush.bf16.msra.mxu0 0
    %1604 = vmatpush.bf16.msra.mxu0 0
    %1605 = vmatpush.bf16.msra.mxu0 0
    %1606 = vmatpush.bf16.msra.mxu0 0
    %1607 = vmatpush.bf16.msra.mxu0 0
    %1608 = vmatpush.bf16.msra.mxu0 %v1593
    %1609 = vmatmul.bf16.gmra.mxu0 %v303
    %v1610 = vpop.f32.mrf.mxu0
    %v1611 = vadd.f32 1e-08, %v1610
    %v1612 = vpop.f32.mrf.mxu0
    %v1613 = vadd.f32 1e-08, %v1612
    %1614 = vdwg.mxu0
    %1615 = vmatpush.bf16.msra.mxu0 0
    %1616 = vmatpush.bf16.msra.mxu0 0
    %1617 = vmatpush.bf16.msra.mxu0 0
    %1618 = vmatpush.bf16.msra.mxu0 0
    %1619 = vmatpush.bf16.msra.mxu0 0
    %1620 = vmatpush.bf16.msra.mxu0 0
    %1621 = vmatpush.bf16.msra.mxu0 0
    %1622 = vmatpush.bf16.msra.mxu0 %v1594
    %1623 = vmatmul.bf16.gmra.mxu0 %v303
    %v1624 = vpop.f32.mrf.mxu0
    %v1625 = vadd.f32 1e-08, %v1624
    %v1626 = vpop.f32.mrf.mxu0
    %v1627 = vadd.f32 1e-08, %v1626
    %1628 = vdwg.mxu0
    %1629 = vmatpush.bf16.msra.mxu0 0
    %1630 = vmatpush.bf16.msra.mxu0 0
    %1631 = vmatpush.bf16.msra.mxu0 0
    %1632 = vmatpush.bf16.msra.mxu0 0
    %1633 = vmatpush.bf16.msra.mxu0 0
    %1634 = vmatpush.bf16.msra.mxu0 0
    %1635 = vmatpush.bf16.msra.mxu0 0
    %1636 = vmatpush.bf16.msra.mxu0 %v1595
    %1637 = vmatmul.bf16.gmra.mxu0 %v303
    %v1638 = vpop.f32.mrf.mxu0
    %v1639 = vadd.f32 1e-08, %v1638
    %v1640 = vpop.f32.mrf.mxu0
    %v1641 = vadd.f32 1e-08, %v1640
    %1642 = vdwg.mxu0
    %1643 = vmatpush.bf16.msra.mxu0 0
    %1644 = vmatpush.bf16.msra.mxu0 0
    %1645 = vmatpush.bf16.msra.mxu0 0
    %1646 = vmatpush.bf16.msra.mxu0 0
    %1647 = vmatpush.bf16.msra.mxu0 0
    %1648 = vmatpush.bf16.msra.mxu0 0
    %1649 = vmatpush.bf16.msra.mxu0 0
    %1650 = vmatpush.bf16.msra.mxu0 %v1596
    %1651 = vmatmul.bf16.gmra.mxu0 %v303
    %v1652 = vpop.f32.mrf.mxu0
    %v1653 = vadd.f32 1e-08, %v1652
    %v1654 = vpop.f32.mrf.mxu0
    %v1655 = vadd.f32 1e-08, %v1654
    %1656 = vdwg.mxu0
    %1657 = vmatpush.bf16.msra.mxu0 0
    %1658 = vmatpush.bf16.msra.mxu0 0
    %1659 = vmatpush.bf16.msra.mxu0 0
    %1660 = vmatpush.bf16.msra.mxu0 0
    %1661 = vmatpush.bf16.msra.mxu0 0
    %1662 = vmatpush.bf16.msra.mxu0 0
    %1663 = vmatpush.bf16.msra.mxu0 0
    %1664 = vmatpush.bf16.msra.mxu0 %v1597
    %1665 = vmatmul.bf16.gmra.mxu0 %v303
    %v1666 = vpop.f32.mrf.mxu0
    %v1667 = vadd.f32 1e-08, %v1666
    %v1668 = vpop.f32.mrf.mxu0
    %v1669 = vadd.f32 1e-08, %v1668
    %1670 = vdwg.mxu0
    %1671 = vmatpush.bf16.msra.mxu0 0
    %1672 = vmatpush.bf16.msra.mxu0 0
    %1673 = vmatpush.bf16.msra.mxu0 0
    %1674 = vmatpush.bf16.msra.mxu0 0
    %1675 = vmatpush.bf16.msra.mxu0 0
    %1676 = vmatpush.bf16.msra.mxu0 0
    %1677 = vmatpush.bf16.msra.mxu0 0
    %1678 = vmatpush.bf16.msra.mxu0 %v1598
    %1679 = vmatmul.bf16.gmra.mxu0 %v303
    %v1680 = vpop.f32.mrf.mxu0
    %v1681 = vadd.f32 1e-08, %v1680
    %v1682 = vpop.f32.mrf.mxu0
    %v1683 = vadd.f32 1e-08, %v1682
    %1684 = vdwg.mxu0
    %1685 = vmatpush.bf16.msra.mxu0 0
    %1686 = vmatpush.bf16.msra.mxu0 0
    %1687 = vmatpush.bf16.msra.mxu0 0
    %1688 = vmatpush.bf16.msra.mxu0 0
    %1689 = vmatpush.bf16.msra.mxu0 0
    %1690 = vmatpush.bf16.msra.mxu0 0
    %1691 = vmatpush.bf16.msra.mxu0 0
    %1692 = vmatpush.bf16.msra.mxu0 %v1599
    %1693 = vmatmul.bf16.gmra.mxu0 %v303
    %v1694 = vpop.f32.mrf.mxu0
    %v1695 = vadd.f32 1e-08, %v1694
    %v1696 = vpop.f32.mrf.mxu0
    %v1697 = vadd.f32 1e-08, %v1696
    %1698 = vdwg.mxu0
    %1699 = vmatpush.bf16.msra.mxu0 0
    %1700 = vmatpush.bf16.msra.mxu0 0
    %1701 = vmatpush.bf16.msra.mxu0 0
    %1702 = vmatpush.bf16.msra.mxu0 0
    %1703 = vmatpush.bf16.msra.mxu0 0
    %1704 = vmatpush.bf16.msra.mxu0 0
    %1705 = vmatpush.bf16.msra.mxu0 0
    %1706 = vmatpush.bf16.msra.mxu0 %v1600
    %1707 = vmatmul.bf16.gmra.mxu0 %v303
    %v1708 = vpop.f32.mrf.mxu0
    %v1709 = vadd.f32 1e-08, %v1708
    %v1710 = vpop.f32.mrf.mxu0
    %v1711 = vadd.f32 1e-08, %v1710
    %1712 = vdwg.mxu0
    %v1713 = vrcp.pop %v1611
    %v1714 = vrcp.pop %v1625
    %v1715 = vrcp.pop %v1639
    %v1716 = vrcp.pop %v1653
    %v1717 = vrcp.pop %v1667
    %v1718 = vrcp.pop %v1681
    %v1719 = vrcp.pop %v1695
    %v1720 = vrcp.pop %v1709
    %v1721 = vrcp.pop %v1613
    %v1722 = vrcp.pop %v1627
    %v1723 = vrcp.pop %v1641
    %v1724 = vrcp.pop %v1655
    %v1725 = vrcp.pop %v1669
    %v1726 = vrcp.pop %v1683
    %v1727 = vrcp.pop %v1697
    %v1728 = vrcp.pop %v1711
    %v1729 = vmul.f32 %v1611, %v1713
    %v1730 = vmul.f32 %v1625, %v1714
    %v1731 = vmul.f32 %v1639, %v1715
    %v1732 = vmul.f32 %v1653, %v1716
    %v1733 = vmul.f32 %v1667, %v1717
    %v1734 = vmul.f32 %v1681, %v1718
    %v1735 = vmul.f32 %v1695, %v1719
    %v1736 = vmul.f32 %v1709, %v1720
    %v1737 = vmul.f32 %v1613, %v1721
    %v1738 = vmul.f32 %v1627, %v1722
    %v1739 = vmul.f32 %v1641, %v1723
    %v1740 = vmul.f32 %v1655, %v1724
    %v1741 = vmul.f32 %v1669, %v1725
    %v1742 = vmul.f32 %v1683, %v1726
    %v1743 = vmul.f32 %v1697, %v1727
    %v1744 = vmul.f32 %v1711, %v1728
    %v1745 = vsub.f32 2.0, %v1729
    %v1746 = vsub.f32 2.0, %v1730
    %v1747 = vsub.f32 2.0, %v1731
    %v1748 = vsub.f32 2.0, %v1732
    %v1749 = vsub.f32 2.0, %v1733
    %v1750 = vsub.f32 2.0, %v1734
    %v1751 = vsub.f32 2.0, %v1735
    %v1752 = vsub.f32 2.0, %v1736
    %v1753 = vsub.f32 2.0, %v1737
    %v1754 = vsub.f32 2.0, %v1738
    %v1755 = vsub.f32 2.0, %v1739
    %v1756 = vsub.f32 2.0, %v1740
    %v1757 = vsub.f32 2.0, %v1741
    %v1758 = vsub.f32 2.0, %v1742
    %v1759 = vsub.f32 2.0, %v1743
    %v1760 = vsub.f32 2.0, %v1744
    %v1761 = vmul.f32 %v1713, %v1745
    %v1762 = vmul.f32 %v1714, %v1746
    %v1763 = vmul.f32 %v1715, %v1747
    %v1764 = vmul.f32 %v1716, %v1748
    %v1765 = vmul.f32 %v1717, %v1749
    %v1766 = vmul.f32 %v1718, %v1750
    %v1767 = vmul.f32 %v1719, %v1751
    %v1768 = vmul.f32 %v1720, %v1752
    %v1769 = vmul.f32 %v1721, %v1753
    %v1770 = vmul.f32 %v1722, %v1754
    %v1771 = vmul.f32 %v1723, %v1755
    %v1772 = vmul.f32 %v1724, %v1756
    %v1773 = vmul.f32 %v1725, %v1757
    %v1774 = vmul.f32 %v1726, %v1758
    %v1775 = vmul.f32 %v1727, %v1759
    %v1776 = vmul.f32 %v1728, %v1760
    %v1777 = vmul.f32 %v1577, %v170
    %v1778 = vmul.f32 %v1578, %v184
    %v1779 = vmul.f32 %v1579, %v198
    %v1780 = vmul.f32 %v1580, %v212
    %v1781 = vmul.f32 %v1581, %v226
    %v1782 = vmul.f32 %v1582, %v240
    %v1783 = vmul.f32 %v1583, %v254
    %v1784 = vmul.f32 %v1584, %v268
    %v1785 = vmul.f32 %v1585, %v172
    %v1786 = vmul.f32 %v1586, %v186
    %v1787 = vmul.f32 %v1587, %v200
    %v1788 = vmul.f32 %v1588, %v214
    %v1789 = vmul.f32 %v1589, %v228
    %v1790 = vmul.f32 %v1590, %v242
    %v1791 = vmul.f32 %v1591, %v256
    %v1792 = vmul.f32 %v1592, %v270
    %v1793 = vmul.f32 %v1777, %v1761
    %v1794 = vmul.f32 %v1778, %v1762
    %v1795 = vmul.f32 %v1779, %v1763
    %v1796 = vmul.f32 %v1780, %v1764
    %v1797 = vmul.f32 %v1781, %v1765
    %v1798 = vmul.f32 %v1782, %v1766
    %v1799 = vmul.f32 %v1783, %v1767
    %v1800 = vmul.f32 %v1784, %v1768
    %v1801 = vmul.f32 %v1785, %v1769
    %v1802 = vmul.f32 %v1786, %v1770
    %v1803 = vmul.f32 %v1787, %v1771
    %v1804 = vmul.f32 %v1788, %v1772
    %v1805 = vmul.f32 %v1789, %v1773
    %v1806 = vmul.f32 %v1790, %v1774
    %v1807 = vmul.f32 %v1791, %v1775
    %v1808 = vmul.f32 %v1792, %v1776
    %v1809 = vpack.c.bf16 %v1801, %v1793
    %v1810 = vpack.c.bf16 %v1802, %v1794
    %v1811 = vpack.c.bf16 %v1803, %v1795
    %v1812 = vpack.c.bf16 %v1804, %v1796
    %v1813 = vpack.c.bf16 %v1805, %v1797
    %v1814 = vpack.c.bf16 %v1806, %v1798
    %v1815 = vpack.c.bf16 %v1807, %v1799
    %v1816 = vpack.c.bf16 %v1808, %v1800
    %1817 = vmatpush.bf16.msra.mxu0 0
    %1818 = vmatpush.bf16.msra.mxu0 0
    %1819 = vmatpush.bf16.msra.mxu0 0
    %1820 = vmatpush.bf16.msra.mxu0 0
    %1821 = vmatpush.bf16.msra.mxu0 0
    %1822 = vmatpush.bf16.msra.mxu0 0
    %1823 = vmatpush.bf16.msra.mxu0 0
    %1824 = vmatpush.bf16.msra.mxu0 %v1809
    %1825 = vmatmul.bf16.gmra.mxu0 %v303
    %v1826 = vpop.f32.mrf.mxu0
    %v1827 = vadd.f32 1e-08, %v1826
    %v1828 = vpop.f32.mrf.mxu0
    %v1829 = vadd.f32 1e-08, %v1828
    %1830 = vdwg.mxu0
    %1831 = vmatpush.bf16.msra.mxu0 0
    %1832 = vmatpush.bf16.msra.mxu0 0
    %1833 = vmatpush.bf16.msra.mxu0 0
    %1834 = vmatpush.bf16.msra.mxu0 0
    %1835 = vmatpush.bf16.msra.mxu0 0
    %1836 = vmatpush.bf16.msra.mxu0 0
    %1837 = vmatpush.bf16.msra.mxu0 0
    %1838 = vmatpush.bf16.msra.mxu0 %v1810
    %1839 = vmatmul.bf16.gmra.mxu0 %v303
    %v1840 = vpop.f32.mrf.mxu0
    %v1841 = vadd.f32 1e-08, %v1840
    %v1842 = vpop.f32.mrf.mxu0
    %v1843 = vadd.f32 1e-08, %v1842
    %1844 = vdwg.mxu0
    %1845 = vmatpush.bf16.msra.mxu0 0
    %1846 = vmatpush.bf16.msra.mxu0 0
    %1847 = vmatpush.bf16.msra.mxu0 0
    %1848 = vmatpush.bf16.msra.mxu0 0
    %1849 = vmatpush.bf16.msra.mxu0 0
    %1850 = vmatpush.bf16.msra.mxu0 0
    %1851 = vmatpush.bf16.msra.mxu0 0
    %1852 = vmatpush.bf16.msra.mxu0 %v1811
    %1853 = vmatmul.bf16.gmra.mxu0 %v303
    %v1854 = vpop.f32.mrf.mxu0
    %v1855 = vadd.f32 1e-08, %v1854
    %v1856 = vpop.f32.mrf.mxu0
    %v1857 = vadd.f32 1e-08, %v1856
    %1858 = vdwg.mxu0
    %1859 = vmatpush.bf16.msra.mxu0 0
    %1860 = vmatpush.bf16.msra.mxu0 0
    %1861 = vmatpush.bf16.msra.mxu0 0
    %1862 = vmatpush.bf16.msra.mxu0 0
    %1863 = vmatpush.bf16.msra.mxu0 0
    %1864 = vmatpush.bf16.msra.mxu0 0
    %1865 = vmatpush.bf16.msra.mxu0 0
    %1866 = vmatpush.bf16.msra.mxu0 %v1812
    %1867 = vmatmul.bf16.gmra.mxu0 %v303
    %v1868 = vpop.f32.mrf.mxu0
    %v1869 = vadd.f32 1e-08, %v1868
    %v1870 = vpop.f32.mrf.mxu0
    %v1871 = vadd.f32 1e-08, %v1870
    %1872 = vdwg.mxu0
    %1873 = vmatpush.bf16.msra.mxu0 0
    %1874 = vmatpush.bf16.msra.mxu0 0
    %1875 = vmatpush.bf16.msra.mxu0 0
    %1876 = vmatpush.bf16.msra.mxu0 0
    %1877 = vmatpush.bf16.msra.mxu0 0
    %1878 = vmatpush.bf16.msra.mxu0 0
    %1879 = vmatpush.bf16.msra.mxu0 0
    %1880 = vmatpush.bf16.msra.mxu0 %v1813
    %1881 = vmatmul.bf16.gmra.mxu0 %v303
    %v1882 = vpop.f32.mrf.mxu0
    %v1883 = vadd.f32 1e-08, %v1882
    %v1884 = vpop.f32.mrf.mxu0
    %v1885 = vadd.f32 1e-08, %v1884
    %1886 = vdwg.mxu0
    %1887 = vmatpush.bf16.msra.mxu0 0
    %1888 = vmatpush.bf16.msra.mxu0 0
    %1889 = vmatpush.bf16.msra.mxu0 0
    %1890 = vmatpush.bf16.msra.mxu0 0
    %1891 = vmatpush.bf16.msra.mxu0 0
    %1892 = vmatpush.bf16.msra.mxu0 0
    %1893 = vmatpush.bf16.msra.mxu0 0
    %1894 = vmatpush.bf16.msra.mxu0 %v1814
    %1895 = vmatmul.bf16.gmra.mxu0 %v303
    %v1896 = vpop.f32.mrf.mxu0
    %v1897 = vadd.f32 1e-08, %v1896
    %v1898 = vpop.f32.mrf.mxu0
    %v1899 = vadd.f32 1e-08, %v1898
    %1900 = vdwg.mxu0
    %1901 = vmatpush.bf16.msra.mxu0 0
    %1902 = vmatpush.bf16.msra.mxu0 0
    %1903 = vmatpush.bf16.msra.mxu0 0
    %1904 = vmatpush.bf16.msra.mxu0 0
    %1905 = vmatpush.bf16.msra.mxu0 0
    %1906 = vmatpush.bf16.msra.mxu0 0
    %1907 = vmatpush.bf16.msra.mxu0 0
    %1908 = vmatpush.bf16.msra.mxu0 %v1815
    %1909 = vmatmul.bf16.gmra.mxu0 %v303
    %v1910 = vpop.f32.mrf.mxu0
    %v1911 = vadd.f32 1e-08, %v1910
    %v1912 = vpop.f32.mrf.mxu0
    %v1913 = vadd.f32 1e-08, %v1912
    %1914 = vdwg.mxu0
    %1915 = vmatpush.bf16.msra.mxu0 0
    %1916 = vmatpush.bf16.msra.mxu0 0
    %1917 = vmatpush.bf16.msra.mxu0 0
    %1918 = vmatpush.bf16.msra.mxu0 0
    %1919 = vmatpush.bf16.msra.mxu0 0
    %1920 = vmatpush.bf16.msra.mxu0 0
    %1921 = vmatpush.bf16.msra.mxu0 0
    %1922 = vmatpush.bf16.msra.mxu0 %v1816
    %1923 = vmatmul.bf16.gmra.mxu0 %v303
    %v1924 = vpop.f32.mrf.mxu0
    %v1925 = vadd.f32 1e-08, %v1924
    %v1926 = vpop.f32.mrf.mxu0
    %v1927 = vadd.f32 1e-08, %v1926
    %1928 = vdwg.mxu0
    %v1929 = vrcp.pop %v1827
    %v1930 = vrcp.pop %v1841
    %v1931 = vrcp.pop %v1855
    %v1932 = vrcp.pop %v1869
    %v1933 = vrcp.pop %v1883
    %v1934 = vrcp.pop %v1897
    %v1935 = vrcp.pop %v1911
    %v1936 = vrcp.pop %v1925
    %v1937 = vrcp.pop %v1829
    %v1938 = vrcp.pop %v1843
    %v1939 = vrcp.pop %v1857
    %v1940 = vrcp.pop %v1871
    %v1941 = vrcp.pop %v1885
    %v1942 = vrcp.pop %v1899
    %v1943 = vrcp.pop %v1913
    %v1944 = vrcp.pop %v1927
    %v1945 = vmul.f32 %v1827, %v1929
    %v1946 = vmul.f32 %v1841, %v1930
    %v1947 = vmul.f32 %v1855, %v1931
    %v1948 = vmul.f32 %v1869, %v1932
    %v1949 = vmul.f32 %v1883, %v1933
    %v1950 = vmul.f32 %v1897, %v1934
    %v1951 = vmul.f32 %v1911, %v1935
    %v1952 = vmul.f32 %v1925, %v1936
    %v1953 = vmul.f32 %v1829, %v1937
    %v1954 = vmul.f32 %v1843, %v1938
    %v1955 = vmul.f32 %v1857, %v1939
    %v1956 = vmul.f32 %v1871, %v1940
    %v1957 = vmul.f32 %v1885, %v1941
    %v1958 = vmul.f32 %v1899, %v1942
    %v1959 = vmul.f32 %v1913, %v1943
    %v1960 = vmul.f32 %v1927, %v1944
    %v1961 = vsub.f32 2.0, %v1945
    %v1962 = vsub.f32 2.0, %v1946
    %v1963 = vsub.f32 2.0, %v1947
    %v1964 = vsub.f32 2.0, %v1948
    %v1965 = vsub.f32 2.0, %v1949
    %v1966 = vsub.f32 2.0, %v1950
    %v1967 = vsub.f32 2.0, %v1951
    %v1968 = vsub.f32 2.0, %v1952
    %v1969 = vsub.f32 2.0, %v1953
    %v1970 = vsub.f32 2.0, %v1954
    %v1971 = vsub.f32 2.0, %v1955
    %v1972 = vsub.f32 2.0, %v1956
    %v1973 = vsub.f32 2.0, %v1957
    %v1974 = vsub.f32 2.0, %v1958
    %v1975 = vsub.f32 2.0, %v1959
    %v1976 = vsub.f32 2.0, %v1960
    %v1977 = vmul.f32 %v1929, %v1961
    %v1978 = vmul.f32 %v1930, %v1962
    %v1979 = vmul.f32 %v1931, %v1963
    %v1980 = vmul.f32 %v1932, %v1964
    %v1981 = vmul.f32 %v1933, %v1965
    %v1982 = vmul.f32 %v1934, %v1966
    %v1983 = vmul.f32 %v1935, %v1967
    %v1984 = vmul.f32 %v1936, %v1968
    %v1985 = vmul.f32 %v1937, %v1969
    %v1986 = vmul.f32 %v1938, %v1970
    %v1987 = vmul.f32 %v1939, %v1971
    %v1988 = vmul.f32 %v1940, %v1972
    %v1989 = vmul.f32 %v1941, %v1973
    %v1990 = vmul.f32 %v1942, %v1974
    %v1991 = vmul.f32 %v1943, %v1975
    %v1992 = vmul.f32 %v1944, %v1976
    %v1993 = vmul.f32 %v1793, %v170
    %v1994 = vmul.f32 %v1794, %v184
    %v1995 = vmul.f32 %v1795, %v198
    %v1996 = vmul.f32 %v1796, %v212
    %v1997 = vmul.f32 %v1797, %v226
    %v1998 = vmul.f32 %v1798, %v240
    %v1999 = vmul.f32 %v1799, %v254
    %v2000 = vmul.f32 %v1800, %v268
    %v2001 = vmul.f32 %v1801, %v172
    %v2002 = vmul.f32 %v1802, %v186
    %v2003 = vmul.f32 %v1803, %v200
    %v2004 = vmul.f32 %v1804, %v214
    %v2005 = vmul.f32 %v1805, %v228
    %v2006 = vmul.f32 %v1806, %v242
    %v2007 = vmul.f32 %v1807, %v256
    %v2008 = vmul.f32 %v1808, %v270
    %v2009 = vmul.f32 %v1993, %v1977
    %v2010 = vmul.f32 %v1994, %v1978
    %v2011 = vmul.f32 %v1995, %v1979
    %v2012 = vmul.f32 %v1996, %v1980
    %v2013 = vmul.f32 %v1997, %v1981
    %v2014 = vmul.f32 %v1998, %v1982
    %v2015 = vmul.f32 %v1999, %v1983
    %v2016 = vmul.f32 %v2000, %v1984
    %v2017 = vmul.f32 %v2001, %v1985
    %v2018 = vmul.f32 %v2002, %v1986
    %v2019 = vmul.f32 %v2003, %v1987
    %v2020 = vmul.f32 %v2004, %v1988
    %v2021 = vmul.f32 %v2005, %v1989
    %v2022 = vmul.f32 %v2006, %v1990
    %v2023 = vmul.f32 %v2007, %v1991
    %v2024 = vmul.f32 %v2008, %v1992
    %v2025 = vpack.c.bf16 %v2017, %v2009
    %v2026 = vpack.c.bf16 %v2018, %v2010
    %v2027 = vpack.c.bf16 %v2019, %v2011
    %v2028 = vpack.c.bf16 %v2020, %v2012
    %v2029 = vpack.c.bf16 %v2021, %v2013
    %v2030 = vpack.c.bf16 %v2022, %v2014
    %v2031 = vpack.c.bf16 %v2023, %v2015
    %v2032 = vpack.c.bf16 %v2024, %v2016
    %2033 = vmatpush.bf16.msra.mxu0 0
    %2034 = vmatpush.bf16.msra.mxu0 0
    %2035 = vmatpush.bf16.msra.mxu0 0
    %2036 = vmatpush.bf16.msra.mxu0 0
    %2037 = vmatpush.bf16.msra.mxu0 0
    %2038 = vmatpush.bf16.msra.mxu0 0
    %2039 = vmatpush.bf16.msra.mxu0 0
    %2040 = vmatpush.bf16.msra.mxu0 %v2025
    %2041 = vmatmul.bf16.gmra.mxu0 %v303
    %v2042 = vpop.f32.mrf.mxu0
    %v2043 = vadd.f32 1e-08, %v2042
    %v2044 = vpop.f32.mrf.mxu0
    %v2045 = vadd.f32 1e-08, %v2044
    %2046 = vdwg.mxu0
    %2047 = vmatpush.bf16.msra.mxu0 0
    %2048 = vmatpush.bf16.msra.mxu0 0
    %2049 = vmatpush.bf16.msra.mxu0 0
    %2050 = vmatpush.bf16.msra.mxu0 0
    %2051 = vmatpush.bf16.msra.mxu0 0
    %2052 = vmatpush.bf16.msra.mxu0 0
    %2053 = vmatpush.bf16.msra.mxu0 0
    %2054 = vmatpush.bf16.msra.mxu0 %v2026
    %2055 = vmatmul.bf16.gmra.mxu0 %v303
    %v2056 = vpop.f32.mrf.mxu0
    %v2057 = vadd.f32 1e-08, %v2056
    %v2058 = vpop.f32.mrf.mxu0
    %v2059 = vadd.f32 1e-08, %v2058
    %2060 = vdwg.mxu0
    %2061 = vmatpush.bf16.msra.mxu0 0
    %2062 = vmatpush.bf16.msra.mxu0 0
    %2063 = vmatpush.bf16.msra.mxu0 0
    %2064 = vmatpush.bf16.msra.mxu0 0
    %2065 = vmatpush.bf16.msra.mxu0 0
    %2066 = vmatpush.bf16.msra.mxu0 0
    %2067 = vmatpush.bf16.msra.mxu0 0
    %2068 = vmatpush.bf16.msra.mxu0 %v2027
    %2069 = vmatmul.bf16.gmra.mxu0 %v303
    %v2070 = vpop.f32.mrf.mxu0
    %v2071 = vadd.f32 1e-08, %v2070
    %v2072 = vpop.f32.mrf.mxu0
    %v2073 = vadd.f32 1e-08, %v2072
    %2074 = vdwg.mxu0
    %2075 = vmatpush.bf16.msra.mxu0 0
    %2076 = vmatpush.bf16.msra.mxu0 0
    %2077 = vmatpush.bf16.msra.mxu0 0
    %2078 = vmatpush.bf16.msra.mxu0 0
    %2079 = vmatpush.bf16.msra.mxu0 0
    %2080 = vmatpush.bf16.msra.mxu0 0
    %2081 = vmatpush.bf16.msra.mxu0 0
    %2082 = vmatpush.bf16.msra.mxu0 %v2028
    %2083 = vmatmul.bf16.gmra.mxu0 %v303
    %v2084 = vpop.f32.mrf.mxu0
    %v2085 = vadd.f32 1e-08, %v2084
    %v2086 = vpop.f32.mrf.mxu0
    %v2087 = vadd.f32 1e-08, %v2086
    %2088 = vdwg.mxu0
    %2089 = vmatpush.bf16.msra.mxu0 0
    %2090 = vmatpush.bf16.msra.mxu0 0
    %2091 = vmatpush.bf16.msra.mxu0 0
    %2092 = vmatpush.bf16.msra.mxu0 0
    %2093 = vmatpush.bf16.msra.mxu0 0
    %2094 = vmatpush.bf16.msra.mxu0 0
    %2095 = vmatpush.bf16.msra.mxu0 0
    %2096 = vmatpush.bf16.msra.mxu0 %v2029
    %2097 = vmatmul.bf16.gmra.mxu0 %v303
    %v2098 = vpop.f32.mrf.mxu0
    %v2099 = vadd.f32 1e-08, %v2098
    %v2100 = vpop.f32.mrf.mxu0
    %v2101 = vadd.f32 1e-08, %v2100
    %2102 = vdwg.mxu0
    %2103 = vmatpush.bf16.msra.mxu0 0
    %2104 = vmatpush.bf16.msra.mxu0 0
    %2105 = vmatpush.bf16.msra.mxu0 0
    %2106 = vmatpush.bf16.msra.mxu0 0
    %2107 = vmatpush.bf16.msra.mxu0 0
    %2108 = vmatpush.bf16.msra.mxu0 0
    %2109 = vmatpush.bf16.msra.mxu0 0
    %2110 = vmatpush.bf16.msra.mxu0 %v2030
    %2111 = vmatmul.bf16.gmra.mxu0 %v303
    %v2112 = vpop.f32.mrf.mxu0
    %v2113 = vadd.f32 1e-08, %v2112
    %v2114 = vpop.f32.mrf.mxu0
    %v2115 = vadd.f32 1e-08, %v2114
    %2116 = vdwg.mxu0
    %2117 = vmatpush.bf16.msra.mxu0 0
    %2118 = vmatpush.bf16.msra.mxu0 0
    %2119 = vmatpush.bf16.msra.mxu0 0
    %2120 = vmatpush.bf16.msra.mxu0 0
    %2121 = vmatpush.bf16.msra.mxu0 0
    %2122 = vmatpush.bf16.msra.mxu0 0
    %2123 = vmatpush.bf16.msra.mxu0 0
    %2124 = vmatpush.bf16.msra.mxu0 %v2031
    %2125 = vmatmul.bf16.gmra.mxu0 %v303
    %v2126 = vpop.f32.mrf.mxu0
    %v2127 = vadd.f32 1e-08, %v2126
    %v2128 = vpop.f32.mrf.mxu0
    %v2129 = vadd.f32 1e-08, %v2128
    %2130 = vdwg.mxu0
    %2131 = vmatpush.bf16.msra.mxu0 0
    %2132 = vmatpush.bf16.msra.mxu0 0
    %2133 = vmatpush.bf16.msra.mxu0 0
    %2134 = vmatpush.bf16.msra.mxu0 0
    %2135 = vmatpush.bf16.msra.mxu0 0
    %2136 = vmatpush.bf16.msra.mxu0 0
    %2137 = vmatpush.bf16.msra.mxu0 0
    %2138 = vmatpush.bf16.msra.mxu0 %v2032
    %2139 = vmatmul.bf16.gmra.mxu0 %v303
    %v2140 = vpop.f32.mrf.mxu0
    %v2141 = vadd.f32 1e-08, %v2140
    %v2142 = vpop.f32.mrf.mxu0
    %v2143 = vadd.f32 1e-08, %v2142
    %2144 = vdwg.mxu0
    %v2145 = vrcp.pop %v2043
    %v2146 = vrcp.pop %v2057
    %v2147 = vrcp.pop %v2071
    %v2148 = vrcp.pop %v2085
    %v2149 = vrcp.pop %v2099
    %v2150 = vrcp.pop %v2113
    %v2151 = vrcp.pop %v2127
    %v2152 = vrcp.pop %v2141
    %v2153 = vrcp.pop %v2045
    %v2154 = vrcp.pop %v2059
    %v2155 = vrcp.pop %v2073
    %v2156 = vrcp.pop %v2087
    %v2157 = vrcp.pop %v2101
    %v2158 = vrcp.pop %v2115
    %v2159 = vrcp.pop %v2129
    %v2160 = vrcp.pop %v2143
    %v2161 = vmul.f32 %v2043, %v2145
    %v2162 = vmul.f32 %v2057, %v2146
    %v2163 = vmul.f32 %v2071, %v2147
    %v2164 = vmul.f32 %v2085, %v2148
    %v2165 = vmul.f32 %v2099, %v2149
    %v2166 = vmul.f32 %v2113, %v2150
    %v2167 = vmul.f32 %v2127, %v2151
    %v2168 = vmul.f32 %v2141, %v2152
    %v2169 = vmul.f32 %v2045, %v2153
    %v2170 = vmul.f32 %v2059, %v2154
    %v2171 = vmul.f32 %v2073, %v2155
    %v2172 = vmul.f32 %v2087, %v2156
    %v2173 = vmul.f32 %v2101, %v2157
    %v2174 = vmul.f32 %v2115, %v2158
    %v2175 = vmul.f32 %v2129, %v2159
    %v2176 = vmul.f32 %v2143, %v2160
    %v2177 = vsub.f32 2.0, %v2161
    %v2178 = vsub.f32 2.0, %v2162
    %v2179 = vsub.f32 2.0, %v2163
    %v2180 = vsub.f32 2.0, %v2164
    %v2181 = vsub.f32 2.0, %v2165
    %v2182 = vsub.f32 2.0, %v2166
    %v2183 = vsub.f32 2.0, %v2167
    %v2184 = vsub.f32 2.0, %v2168
    %v2185 = vsub.f32 2.0, %v2169
    %v2186 = vsub.f32 2.0, %v2170
    %v2187 = vsub.f32 2.0, %v2171
    %v2188 = vsub.f32 2.0, %v2172
    %v2189 = vsub.f32 2.0, %v2173
    %v2190 = vsub.f32 2.0, %v2174
    %v2191 = vsub.f32 2.0, %v2175
    %v2192 = vsub.f32 2.0, %v2176
    %v2193 = vmul.f32 %v2145, %v2177
    %v2194 = vmul.f32 %v2146, %v2178
    %v2195 = vmul.f32 %v2147, %v2179
    %v2196 = vmul.f32 %v2148, %v2180
    %v2197 = vmul.f32 %v2149, %v2181
    %v2198 = vmul.f32 %v2150, %v2182
    %v2199 = vmul.f32 %v2151, %v2183
    %v2200 = vmul.f32 %v2152, %v2184
    %v2201 = vmul.f32 %v2153, %v2185
    %v2202 = vmul.f32 %v2154, %v2186
    %v2203 = vmul.f32 %v2155, %v2187
    %v2204 = vmul.f32 %v2156, %v2188
    %v2205 = vmul.f32 %v2157, %v2189
    %v2206 = vmul.f32 %v2158, %v2190
    %v2207 = vmul.f32 %v2159, %v2191
    %v2208 = vmul.f32 %v2160, %v2192
    %v2209 = vmul.f32 %v2009, %v170
    %v2210 = vmul.f32 %v2010, %v184
    %v2211 = vmul.f32 %v2011, %v198
    %v2212 = vmul.f32 %v2012, %v212
    %v2213 = vmul.f32 %v2013, %v226
    %v2214 = vmul.f32 %v2014, %v240
    %v2215 = vmul.f32 %v2015, %v254
    %v2216 = vmul.f32 %v2016, %v268
    %v2217 = vmul.f32 %v2017, %v172
    %v2218 = vmul.f32 %v2018, %v186
    %v2219 = vmul.f32 %v2019, %v200
    %v2220 = vmul.f32 %v2020, %v214
    %v2221 = vmul.f32 %v2021, %v228
    %v2222 = vmul.f32 %v2022, %v242
    %v2223 = vmul.f32 %v2023, %v256
    %v2224 = vmul.f32 %v2024, %v270
    %v2225 = vmul.f32 %v2209, %v2193
    %v2226 = vmul.f32 %v2210, %v2194
    %v2227 = vmul.f32 %v2211, %v2195
    %v2228 = vmul.f32 %v2212, %v2196
    %v2229 = vmul.f32 %v2213, %v2197
    %v2230 = vmul.f32 %v2214, %v2198
    %v2231 = vmul.f32 %v2215, %v2199
    %v2232 = vmul.f32 %v2216, %v2200
    %v2233 = vmul.f32 %v2217, %v2201
    %v2234 = vmul.f32 %v2218, %v2202
    %v2235 = vmul.f32 %v2219, %v2203
    %v2236 = vmul.f32 %v2220, %v2204
    %v2237 = vmul.f32 %v2221, %v2205
    %v2238 = vmul.f32 %v2222, %v2206
    %v2239 = vmul.f32 %v2223, %v2207
    %v2240 = vmul.f32 %v2224, %v2208
    %v2241 = vpack.c.bf16 %v2233, %v2225
    %v2242 = vpack.c.bf16 %v2234, %v2226
    %v2243 = vpack.c.bf16 %v2235, %v2227
    %v2244 = vpack.c.bf16 %v2236, %v2228
    %v2245 = vpack.c.bf16 %v2237, %v2229
    %v2246 = vpack.c.bf16 %v2238, %v2230
    %v2247 = vpack.c.bf16 %v2239, %v2231
    %v2248 = vpack.c.bf16 %v2240, %v2232
    %2249 = vmatpush.bf16.msra.mxu0 0
    %2250 = vmatpush.bf16.msra.mxu0 0
    %2251 = vmatpush.bf16.msra.mxu0 0
    %2252 = vmatpush.bf16.msra.mxu0 0
    %2253 = vmatpush.bf16.msra.mxu0 0
    %2254 = vmatpush.bf16.msra.mxu0 0
    %2255 = vmatpush.bf16.msra.mxu0 0
    %2256 = vmatpush.bf16.msra.mxu0 %v2241
    %2257 = vmatmul.bf16.gmra.mxu0 %v303
    %v2258 = vpop.f32.mrf.mxu0
    %v2259 = vadd.f32 1e-08, %v2258
    %v2260 = vpop.f32.mrf.mxu0
    %v2261 = vadd.f32 1e-08, %v2260
    %2262 = vdwg.mxu0
    %2263 = vmatpush.bf16.msra.mxu0 0
    %2264 = vmatpush.bf16.msra.mxu0 0
    %2265 = vmatpush.bf16.msra.mxu0 0
    %2266 = vmatpush.bf16.msra.mxu0 0
    %2267 = vmatpush.bf16.msra.mxu0 0
    %2268 = vmatpush.bf16.msra.mxu0 0
    %2269 = vmatpush.bf16.msra.mxu0 0
    %2270 = vmatpush.bf16.msra.mxu0 %v2242
    %2271 = vmatmul.bf16.gmra.mxu0 %v303
    %v2272 = vpop.f32.mrf.mxu0
    %v2273 = vadd.f32 1e-08, %v2272
    %v2274 = vpop.f32.mrf.mxu0
    %v2275 = vadd.f32 1e-08, %v2274
    %2276 = vdwg.mxu0
    %2277 = vmatpush.bf16.msra.mxu0 0
    %2278 = vmatpush.bf16.msra.mxu0 0
    %2279 = vmatpush.bf16.msra.mxu0 0
    %2280 = vmatpush.bf16.msra.mxu0 0
    %2281 = vmatpush.bf16.msra.mxu0 0
    %2282 = vmatpush.bf16.msra.mxu0 0
    %2283 = vmatpush.bf16.msra.mxu0 0
    %2284 = vmatpush.bf16.msra.mxu0 %v2243
    %2285 = vmatmul.bf16.gmra.mxu0 %v303
    %v2286 = vpop.f32.mrf.mxu0
    %v2287 = vadd.f32 1e-08, %v2286
    %v2288 = vpop.f32.mrf.mxu0
    %v2289 = vadd.f32 1e-08, %v2288
    %2290 = vdwg.mxu0
    %2291 = vmatpush.bf16.msra.mxu0 0
    %2292 = vmatpush.bf16.msra.mxu0 0
    %2293 = vmatpush.bf16.msra.mxu0 0
    %2294 = vmatpush.bf16.msra.mxu0 0
    %2295 = vmatpush.bf16.msra.mxu0 0
    %2296 = vmatpush.bf16.msra.mxu0 0
    %2297 = vmatpush.bf16.msra.mxu0 0
    %2298 = vmatpush.bf16.msra.mxu0 %v2244
    %2299 = vmatmul.bf16.gmra.mxu0 %v303
    %v2300 = vpop.f32.mrf.mxu0
    %v2301 = vadd.f32 1e-08, %v2300
    %v2302 = vpop.f32.mrf.mxu0
    %v2303 = vadd.f32 1e-08, %v2302
    %2304 = vdwg.mxu0
    %2305 = vmatpush.bf16.msra.mxu0 0
    %2306 = vmatpush.bf16.msra.mxu0 0
    %2307 = vmatpush.bf16.msra.mxu0 0
    %2308 = vmatpush.bf16.msra.mxu0 0
    %2309 = vmatpush.bf16.msra.mxu0 0
    %2310 = vmatpush.bf16.msra.mxu0 0
    %2311 = vmatpush.bf16.msra.mxu0 0
    %2312 = vmatpush.bf16.msra.mxu0 %v2245
    %2313 = vmatmul.bf16.gmra.mxu0 %v303
    %v2314 = vpop.f32.mrf.mxu0
    %v2315 = vadd.f32 1e-08, %v2314
    %v2316 = vpop.f32.mrf.mxu0
    %v2317 = vadd.f32 1e-08, %v2316
    %2318 = vdwg.mxu0
    %2319 = vmatpush.bf16.msra.mxu0 0
    %2320 = vmatpush.bf16.msra.mxu0 0
    %2321 = vmatpush.bf16.msra.mxu0 0
    %2322 = vmatpush.bf16.msra.mxu0 0
    %2323 = vmatpush.bf16.msra.mxu0 0
    %2324 = vmatpush.bf16.msra.mxu0 0
    %2325 = vmatpush.bf16.msra.mxu0 0
    %2326 = vmatpush.bf16.msra.mxu0 %v2246
    %2327 = vmatmul.bf16.gmra.mxu0 %v303
    %v2328 = vpop.f32.mrf.mxu0
    %v2329 = vadd.f32 1e-08, %v2328
    %v2330 = vpop.f32.mrf.mxu0
    %v2331 = vadd.f32 1e-08, %v2330
    %2332 = vdwg.mxu0
    %2333 = vmatpush.bf16.msra.mxu0 0
    %2334 = vmatpush.bf16.msra.mxu0 0
    %2335 = vmatpush.bf16.msra.mxu0 0
    %2336 = vmatpush.bf16.msra.mxu0 0
    %2337 = vmatpush.bf16.msra.mxu0 0
    %2338 = vmatpush.bf16.msra.mxu0 0
    %2339 = vmatpush.bf16.msra.mxu0 0
    %2340 = vmatpush.bf16.msra.mxu0 %v2247
    %2341 = vmatmul.bf16.gmra.mxu0 %v303
    %v2342 = vpop.f32.mrf.mxu0
    %v2343 = vadd.f32 1e-08, %v2342
    %v2344 = vpop.f32.mrf.mxu0
    %v2345 = vadd.f32 1e-08, %v2344
    %2346 = vdwg.mxu0
    %2347 = vmatpush.bf16.msra.mxu0 0
    %2348 = vmatpush.bf16.msra.mxu0 0
    %2349 = vmatpush.bf16.msra.mxu0 0
    %2350 = vmatpush.bf16.msra.mxu0 0
    %2351 = vmatpush.bf16.msra.mxu0 0
    %2352 = vmatpush.bf16.msra.mxu0 0
    %2353 = vmatpush.bf16.msra.mxu0 0
    %2354 = vmatpush.bf16.msra.mxu0 %v2248
    %2355 = vmatmul.bf16.gmra.mxu0 %v303
    %v2356 = vpop.f32.mrf.mxu0
    %v2357 = vadd.f32 1e-08, %v2356
    %v2358 = vpop.f32.mrf.mxu0
    %v2359 = vadd.f32 1e-08, %v2358
    %2360 = vdwg.mxu0
    %v2361 = vrcp.pop %v2259
    %v2362 = vrcp.pop %v2273
    %v2363 = vrcp.pop %v2287
    %v2364 = vrcp.pop %v2301
    %v2365 = vrcp.pop %v2315
    %v2366 = vrcp.pop %v2329
    %v2367 = vrcp.pop %v2343
    %v2368 = vrcp.pop %v2357
    %v2369 = vrcp.pop %v2261
    %v2370 = vrcp.pop %v2275
    %v2371 = vrcp.pop %v2289
    %v2372 = vrcp.pop %v2303
    %v2373 = vrcp.pop %v2317
    %v2374 = vrcp.pop %v2331
    %v2375 = vrcp.pop %v2345
    %v2376 = vrcp.pop %v2359
    %v2377 = vmul.f32 %v2259, %v2361
    %v2378 = vmul.f32 %v2273, %v2362
    %v2379 = vmul.f32 %v2287, %v2363
    %v2380 = vmul.f32 %v2301, %v2364
    %v2381 = vmul.f32 %v2315, %v2365
    %v2382 = vmul.f32 %v2329, %v2366
    %v2383 = vmul.f32 %v2343, %v2367
    %v2384 = vmul.f32 %v2357, %v2368
    %v2385 = vmul.f32 %v2261, %v2369
    %v2386 = vmul.f32 %v2275, %v2370
    %v2387 = vmul.f32 %v2289, %v2371
    %v2388 = vmul.f32 %v2303, %v2372
    %v2389 = vmul.f32 %v2317, %v2373
    %v2390 = vmul.f32 %v2331, %v2374
    %v2391 = vmul.f32 %v2345, %v2375
    %v2392 = vmul.f32 %v2359, %v2376
    %v2393 = vsub.f32 2.0, %v2377
    %v2394 = vsub.f32 2.0, %v2378
    %v2395 = vsub.f32 2.0, %v2379
    %v2396 = vsub.f32 2.0, %v2380
    %v2397 = vsub.f32 2.0, %v2381
    %v2398 = vsub.f32 2.0, %v2382
    %v2399 = vsub.f32 2.0, %v2383
    %v2400 = vsub.f32 2.0, %v2384
    %v2401 = vsub.f32 2.0, %v2385
    %v2402 = vsub.f32 2.0, %v2386
    %v2403 = vsub.f32 2.0, %v2387
    %v2404 = vsub.f32 2.0, %v2388
    %v2405 = vsub.f32 2.0, %v2389
    %v2406 = vsub.f32 2.0, %v2390
    %v2407 = vsub.f32 2.0, %v2391
    %v2408 = vsub.f32 2.0, %v2392
    %v2409 = vmul.f32 %v2361, %v2393
    %v2410 = vmul.f32 %v2362, %v2394
    %v2411 = vmul.f32 %v2363, %v2395
    %v2412 = vmul.f32 %v2364, %v2396
    %v2413 = vmul.f32 %v2365, %v2397
    %v2414 = vmul.f32 %v2366, %v2398
    %v2415 = vmul.f32 %v2367, %v2399
    %v2416 = vmul.f32 %v2368, %v2400
    %v2417 = vmul.f32 %v2369, %v2401
    %v2418 = vmul.f32 %v2370, %v2402
    %v2419 = vmul.f32 %v2371, %v2403
    %v2420 = vmul.f32 %v2372, %v2404
    %v2421 = vmul.f32 %v2373, %v2405
    %v2422 = vmul.f32 %v2374, %v2406
    %v2423 = vmul.f32 %v2375, %v2407
    %v2424 = vmul.f32 %v2376, %v2408
    %v2425 = vmul.f32 %v2225, %v170
    %v2426 = vmul.f32 %v2226, %v184
    %v2427 = vmul.f32 %v2227, %v198
    %v2428 = vmul.f32 %v2228, %v212
    %v2429 = vmul.f32 %v2229, %v226
    %v2430 = vmul.f32 %v2230, %v240
    %v2431 = vmul.f32 %v2231, %v254
    %v2432 = vmul.f32 %v2232, %v268
    %v2433 = vmul.f32 %v2233, %v172
    %v2434 = vmul.f32 %v2234, %v186
    %v2435 = vmul.f32 %v2235, %v200
    %v2436 = vmul.f32 %v2236, %v214
    %v2437 = vmul.f32 %v2237, %v228
    %v2438 = vmul.f32 %v2238, %v242
    %v2439 = vmul.f32 %v2239, %v256
    %v2440 = vmul.f32 %v2240, %v270
    %v2441 = vmul.f32 %v2425, %v2409
    %v2442 = vmul.f32 %v2426, %v2410
    %v2443 = vmul.f32 %v2427, %v2411
    %v2444 = vmul.f32 %v2428, %v2412
    %v2445 = vmul.f32 %v2429, %v2413
    %v2446 = vmul.f32 %v2430, %v2414
    %v2447 = vmul.f32 %v2431, %v2415
    %v2448 = vmul.f32 %v2432, %v2416
    %v2449 = vmul.f32 %v2433, %v2417
    %v2450 = vmul.f32 %v2434, %v2418
    %v2451 = vmul.f32 %v2435, %v2419
    %v2452 = vmul.f32 %v2436, %v2420
    %v2453 = vmul.f32 %v2437, %v2421
    %v2454 = vmul.f32 %v2438, %v2422
    %v2455 = vmul.f32 %v2439, %v2423
    %v2456 = vmul.f32 %v2440, %v2424
    %2457 = vst [vmem:[#allocation11] sm:$0xff] %v2441
    %2458 = vst [vmem:[#allocation11 + $0x8] sm:$0xff] %v2442
    %2459 = vst [vmem:[#allocation11 + $0x10] sm:$0xff] %v2443
    %2460 = vst [vmem:[#allocation11 + $0x18] sm:$0xff] %v2444
    %2461 = vst [vmem:[#allocation11 + $0x20] sm:$0xff] %v2445
    %2462 = vst [vmem:[#allocation11 + $0x28] sm:$0xff] %v2446
    %2463 = vst [vmem:[#allocation11 + $0x30] sm:$0xff] %v2447
    %2464 = vst [vmem:[#allocation11 + $0x38] sm:$0xff] %v2448
    %2465 = vst [vmem:[#allocation11 + $0x40] sm:$0xff] %v2449
    %2466 = vst [vmem:[#allocation11 + $0x48] sm:$0xff] %v2450
    %2467 = vst [vmem:[#allocation11 + $0x50] sm:$0xff] %v2451
    %2468 = vst [vmem:[#allocation11 + $0x58] sm:$0xff] %v2452
    %2469 = vst [vmem:[#allocation11 + $0x60] sm:$0xff] %v2453
    %2470 = vst [vmem:[#allocation11 + $0x68] sm:$0xff] %v2454
    %2471 = vst [vmem:[#allocation11 + $0x70] sm:$0xff] %v2455
    %2472 = vst [vmem:[#allocation11 + $0x78] sm:$0xff] %v2456
    %v2473 = vld [vmem:[#allocation8] sm:$0xf]
    %v2474 = vld [vmem:[#allocation10] sm:$0xf]
    %v2475 = vpack.c.bf16 %v2449, %v2441
    %v2476 = vpack.c.bf16 %v2450, %v2442
    %v2477 = vpack.c.bf16 %v2451, %v2443
    %v2478 = vpack.c.bf16 %v2452, %v2444
    %v2479 = vpack.c.bf16 %v2453, %v2445
    %v2480 = vpack.c.bf16 %v2454, %v2446
    %v2481 = vpack.c.bf16 %v2455, %v2447
    %v2482 = vpack.c.bf16 %v2456, %v2448
    %v2484 = vsel %vm301, %v2473, 0
    %2486 = vmatpush.bf16.msra.mxu0 0
    %2487 = vmatpush.bf16.msra.mxu0 0
    %2488 = vmatpush.bf16.msra.mxu0 0
    %2489 = vmatpush.bf16.msra.mxu0 0
    %2490 = vmatpush.bf16.msra.mxu0 0
    %2491 = vmatpush.bf16.msra.mxu0 0
    %2492 = vmatpush.bf16.msra.mxu0 0
    %2493 = vmatpush.bf16.msra.mxu0 %v2475
    %2494 = vmatmul.bf16.gmra.mxu0 %v2484
    %v2495 = vpop.f32.mrf.mxu0
    %v2496 = vadd.f32 0.0, %v2495
    %v2497 = vpop.f32.mrf.mxu0
    %2498 = vdwg.mxu0
    %2499 = vmatpush.bf16.msra.mxu0 0
    %2500 = vmatpush.bf16.msra.mxu0 0
    %2501 = vmatpush.bf16.msra.mxu0 0
    %2502 = vmatpush.bf16.msra.mxu0 0
    %2503 = vmatpush.bf16.msra.mxu0 0
    %2504 = vmatpush.bf16.msra.mxu0 0
    %2505 = vmatpush.bf16.msra.mxu0 0
    %2506 = vmatpush.bf16.msra.mxu0 %v2476
    %2507 = vmatmul.bf16.gmra.mxu0 %v2484
    %v2508 = vpop.f32.mrf.mxu0
    %v2509 = vadd.f32 0.0, %v2508
    %v2510 = vpop.f32.mrf.mxu0
    %2511 = vdwg.mxu0
    %2512 = vmatpush.bf16.msra.mxu0 0
    %2513 = vmatpush.bf16.msra.mxu0 0
    %2514 = vmatpush.bf16.msra.mxu0 0
    %2515 = vmatpush.bf16.msra.mxu0 0
    %2516 = vmatpush.bf16.msra.mxu0 0
    %2517 = vmatpush.bf16.msra.mxu0 0
    %2518 = vmatpush.bf16.msra.mxu0 0
    %2519 = vmatpush.bf16.msra.mxu0 %v2477
    %2520 = vmatmul.bf16.gmra.mxu0 %v2484
    %v2521 = vpop.f32.mrf.mxu0
    %v2522 = vadd.f32 0.0, %v2521
    %v2523 = vpop.f32.mrf.mxu0
    %2524 = vdwg.mxu0
    %2525 = vmatpush.bf16.msra.mxu0 0
    %2526 = vmatpush.bf16.msra.mxu0 0
    %2527 = vmatpush.bf16.msra.mxu0 0
    %2528 = vmatpush.bf16.msra.mxu0 0
    %2529 = vmatpush.bf16.msra.mxu0 0
    %2530 = vmatpush.bf16.msra.mxu0 0
    %2531 = vmatpush.bf16.msra.mxu0 0
    %2532 = vmatpush.bf16.msra.mxu0 %v2478
    %2533 = vmatmul.bf16.gmra.mxu0 %v2484
    %v2534 = vpop.f32.mrf.mxu0
    %v2535 = vadd.f32 0.0, %v2534
    %v2536 = vpop.f32.mrf.mxu0
    %2537 = vdwg.mxu0
    %2538 = vmatpush.bf16.msra.mxu0 0
    %2539 = vmatpush.bf16.msra.mxu0 0
    %2540 = vmatpush.bf16.msra.mxu0 0
    %2541 = vmatpush.bf16.msra.mxu0 0
    %2542 = vmatpush.bf16.msra.mxu0 0
    %2543 = vmatpush.bf16.msra.mxu0 0
    %2544 = vmatpush.bf16.msra.mxu0 0
    %2545 = vmatpush.bf16.msra.mxu0 %v2479
    %2546 = vmatmul.bf16.gmra.mxu0 %v2484
    %v2547 = vpop.f32.mrf.mxu0
    %v2548 = vadd.f32 0.0, %v2547
    %v2549 = vpop.f32.mrf.mxu0
    %2550 = vdwg.mxu0
    %2551 = vmatpush.bf16.msra.mxu0 0
    %2552 = vmatpush.bf16.msra.mxu0 0
    %2553 = vmatpush.bf16.msra.mxu0 0
    %2554 = vmatpush.bf16.msra.mxu0 0
    %2555 = vmatpush.bf16.msra.mxu0 0
    %2556 = vmatpush.bf16.msra.mxu0 0
    %2557 = vmatpush.bf16.msra.mxu0 0
    %2558 = vmatpush.bf16.msra.mxu0 %v2480
    %2559 = vmatmul.bf16.gmra.mxu0 %v2484
    %v2560 = vpop.f32.mrf.mxu0
    %v2561 = vadd.f32 0.0, %v2560
    %v2562 = vpop.f32.mrf.mxu0
    %2563 = vdwg.mxu0
    %2564 = vmatpush.bf16.msra.mxu0 0
    %2565 = vmatpush.bf16.msra.mxu0 0
    %2566 = vmatpush.bf16.msra.mxu0 0
    %2567 = vmatpush.bf16.msra.mxu0 0
    %2568 = vmatpush.bf16.msra.mxu0 0
    %2569 = vmatpush.bf16.msra.mxu0 0
    %2570 = vmatpush.bf16.msra.mxu0 0
    %2571 = vmatpush.bf16.msra.mxu0 %v2481
    %2572 = vmatmul.bf16.gmra.mxu0 %v2484
    %v2573 = vpop.f32.mrf.mxu0
    %v2574 = vadd.f32 0.0, %v2573
    %v2575 = vpop.f32.mrf.mxu0
    %2576 = vdwg.mxu0
    %2577 = vmatpush.bf16.msra.mxu0 0
    %2578 = vmatpush.bf16.msra.mxu0 0
    %2579 = vmatpush.bf16.msra.mxu0 0
    %2580 = vmatpush.bf16.msra.mxu0 0
    %2581 = vmatpush.bf16.msra.mxu0 0
    %2582 = vmatpush.bf16.msra.mxu0 0
    %2583 = vmatpush.bf16.msra.mxu0 0
    %2584 = vmatpush.bf16.msra.mxu0 %v2482
    %2585 = vmatmul.bf16.gmra.mxu0 %v2484
    %v2586 = vpop.f32.mrf.mxu0
    %v2587 = vadd.f32 0.0, %v2586
    %v2588 = vpop.f32.mrf.mxu0
    %2589 = vdwg.mxu0
    %v2590 = vmax.f32 %v2496, 1e-08
    %v2591 = vmax.f32 %v2509, 1e-08
    %v2592 = vmax.f32 %v2522, 1e-08
    %v2593 = vmax.f32 %v2535, 1e-08
    %v2594 = vmax.f32 %v2548, 1e-08
    %v2595 = vmax.f32 %v2561, 1e-08
    %v2596 = vmax.f32 %v2574, 1e-08
    %v2597 = vmax.f32 %v2587, 1e-08
    %v2598 = vpack.c.bf16 %v2590, %v2590
    %v2599 = vpack.c.bf16 %v2591, %v2591
    %v2600 = vpack.c.bf16 %v2592, %v2592
    %v2601 = vpack.c.bf16 %v2593, %v2593
    %v2602 = vpack.c.bf16 %v2594, %v2594
    %v2603 = vpack.c.bf16 %v2595, %v2595
    %v2604 = vpack.c.bf16 %v2596, %v2596
    %v2605 = vpack.c.bf16 %v2597, %v2597
    %vm2606 = vcmask 64512
    %v2608 = vsel %vm2606, %v2474, 0
    %vm2610 = vcmask 1043456
    %v2612 = vsel %vm2610, %v2598, 0
    %v2615 = vsel %vm2610, %v2599, 0
    %v2618 = vsel %vm2610, %v2600, 0
    %v2621 = vsel %vm2610, %v2601, 0
    %v2624 = vsel %vm2610, %v2602, 0
    %v2627 = vsel %vm2610, %v2603, 0
    %v2630 = vsel %vm2610, %v2604, 0
    %v2633 = vsel %vm2610, %v2605, 0
    %2635 = vmatpush.bf16.msra.mxu0 0
    %2636 = vmatpush.bf16.msra.mxu0 0
    %2637 = vmatpush.bf16.msra.mxu0 0
    %2638 = vmatpush.bf16.msra.mxu0 0
    %2639 = vmatpush.bf16.msra.mxu0 0
    %2640 = vmatpush.bf16.msra.mxu0 0
    %2641 = vmatpush.bf16.msra.mxu0 0
    %2642 = vmatpush.bf16.msra.mxu0 %v2612
    %2643 = vmatmul.bf16.gmra.mxu0 %v2608
    %v2644 = vpop.f32.mrf.mxu0
    %v2645 = vadd.f32 1e-08, %v2644
    %v2646 = vpop.f32.mrf.mxu0
    %2647 = vdwg.mxu0
    %2648 = vmatpush.bf16.msra.mxu0 0
    %2649 = vmatpush.bf16.msra.mxu0 0
    %2650 = vmatpush.bf16.msra.mxu0 0
    %2651 = vmatpush.bf16.msra.mxu0 0
    %2652 = vmatpush.bf16.msra.mxu0 0
    %2653 = vmatpush.bf16.msra.mxu0 0
    %2654 = vmatpush.bf16.msra.mxu0 0
    %2655 = vmatpush.bf16.msra.mxu0 %v2615
    %2656 = vmatmul.bf16.gmra.mxu0 %v2608
    %v2657 = vpop.f32.mrf.mxu0
    %v2658 = vadd.f32 1e-08, %v2657
    %v2659 = vpop.f32.mrf.mxu0
    %2660 = vdwg.mxu0
    %2661 = vmatpush.bf16.msra.mxu0 0
    %2662 = vmatpush.bf16.msra.mxu0 0
    %2663 = vmatpush.bf16.msra.mxu0 0
    %2664 = vmatpush.bf16.msra.mxu0 0
    %2665 = vmatpush.bf16.msra.mxu0 0
    %2666 = vmatpush.bf16.msra.mxu0 0
    %2667 = vmatpush.bf16.msra.mxu0 0
    %2668 = vmatpush.bf16.msra.mxu0 %v2618
    %2669 = vmatmul.bf16.gmra.mxu0 %v2608
    %v2670 = vpop.f32.mrf.mxu0
    %v2671 = vadd.f32 1e-08, %v2670
    %v2672 = vpop.f32.mrf.mxu0
    %2673 = vdwg.mxu0
    %2674 = vmatpush.bf16.msra.mxu0 0
    %2675 = vmatpush.bf16.msra.mxu0 0
    %2676 = vmatpush.bf16.msra.mxu0 0
    %2677 = vmatpush.bf16.msra.mxu0 0
    %2678 = vmatpush.bf16.msra.mxu0 0
    %2679 = vmatpush.bf16.msra.mxu0 0
    %2680 = vmatpush.bf16.msra.mxu0 0
    %2681 = vmatpush.bf16.msra.mxu0 %v2621
    %2682 = vmatmul.bf16.gmra.mxu0 %v2608
    %v2683 = vpop.f32.mrf.mxu0
    %v2684 = vadd.f32 1e-08, %v2683
    %v2685 = vpop.f32.mrf.mxu0
    %2686 = vdwg.mxu0
    %2687 = vmatpush.bf16.msra.mxu0 0
    %2688 = vmatpush.bf16.msra.mxu0 0
    %2689 = vmatpush.bf16.msra.mxu0 0
    %2690 = vmatpush.bf16.msra.mxu0 0
    %2691 = vmatpush.bf16.msra.mxu0 0
    %2692 = vmatpush.bf16.msra.mxu0 0
    %2693 = vmatpush.bf16.msra.mxu0 0
    %2694 = vmatpush.bf16.msra.mxu0 %v2624
    %2695 = vmatmul.bf16.gmra.mxu0 %v2608
    %v2696 = vpop.f32.mrf.mxu0
    %v2697 = vadd.f32 1e-08, %v2696
    %v2698 = vpop.f32.mrf.mxu0
    %2699 = vdwg.mxu0
    %2700 = vmatpush.bf16.msra.mxu0 0
    %2701 = vmatpush.bf16.msra.mxu0 0
    %2702 = vmatpush.bf16.msra.mxu0 0
    %2703 = vmatpush.bf16.msra.mxu0 0
    %2704 = vmatpush.bf16.msra.mxu0 0
    %2705 = vmatpush.bf16.msra.mxu0 0
    %2706 = vmatpush.bf16.msra.mxu0 0
    %2707 = vmatpush.bf16.msra.mxu0 %v2627
    %2708 = vmatmul.bf16.gmra.mxu0 %v2608
    %v2709 = vpop.f32.mrf.mxu0
    %v2710 = vadd.f32 1e-08, %v2709
    %v2711 = vpop.f32.mrf.mxu0
    %2712 = vdwg.mxu0
    %2713 = vmatpush.bf16.msra.mxu0 0
    %2714 = vmatpush.bf16.msra.mxu0 0
    %2715 = vmatpush.bf16.msra.mxu0 0
    %2716 = vmatpush.bf16.msra.mxu0 0
    %2717 = vmatpush.bf16.msra.mxu0 0
    %2718 = vmatpush.bf16.msra.mxu0 0
    %2719 = vmatpush.bf16.msra.mxu0 0
    %2720 = vmatpush.bf16.msra.mxu0 %v2630
    %2721 = vmatmul.bf16.gmra.mxu0 %v2608
    %v2722 = vpop.f32.mrf.mxu0
    %v2723 = vadd.f32 1e-08, %v2722
    %v2724 = vpop.f32.mrf.mxu0
    %2725 = vdwg.mxu0
    %2726 = vmatpush.bf16.msra.mxu0 0
    %2727 = vmatpush.bf16.msra.mxu0 0
    %2728 = vmatpush.bf16.msra.mxu0 0
    %2729 = vmatpush.bf16.msra.mxu0 0
    %2730 = vmatpush.bf16.msra.mxu0 0
    %2731 = vmatpush.bf16.msra.mxu0 0
    %2732 = vmatpush.bf16.msra.mxu0 0
    %2733 = vmatpush.bf16.msra.mxu0 %v2633
    %2734 = vmatmul.bf16.gmra.mxu0 %v2608
    %v2735 = vpop.f32.mrf.mxu0
    %v2736 = vadd.f32 1e-08, %v2735
    %v2737 = vpop.f32.mrf.mxu0
    %2738 = vdwg.mxu0
    %v2739 = vrcp.pop %v2645
    %v2740 = vrcp.pop %v2658
    %v2741 = vrcp.pop %v2671
    %v2742 = vrcp.pop %v2684
    %v2743 = vrcp.pop %v2697
    %v2744 = vrcp.pop %v2710
    %v2745 = vrcp.pop %v2723
    %v2746 = vrcp.pop %v2736
    %v2747 = vmul.f32 %v2645, %v2739
    %v2748 = vmul.f32 %v2658, %v2740
    %v2749 = vmul.f32 %v2671, %v2741
    %v2750 = vmul.f32 %v2684, %v2742
    %v2751 = vmul.f32 %v2697, %v2743
    %v2752 = vmul.f32 %v2710, %v2744
    %v2753 = vmul.f32 %v2723, %v2745
    %v2754 = vmul.f32 %v2736, %v2746
    %v2755 = vsub.f32 2.0, %v2747
    %v2756 = vsub.f32 2.0, %v2748
    %v2757 = vsub.f32 2.0, %v2749
    %v2758 = vsub.f32 2.0, %v2750
    %v2759 = vsub.f32 2.0, %v2751
    %v2760 = vsub.f32 2.0, %v2752
    %v2761 = vsub.f32 2.0, %v2753
    %v2762 = vsub.f32 2.0, %v2754
    %v2763 = vmul.f32 %v2739, %v2755
    %v2764 = vmul.f32 %v2740, %v2756
    %v2765 = vmul.f32 %v2741, %v2757
    %v2766 = vmul.f32 %v2742, %v2758
    %v2767 = vmul.f32 %v2743, %v2759
    %v2768 = vmul.f32 %v2744, %v2760
    %v2769 = vmul.f32 %v2745, %v2761
    %v2770 = vmul.f32 %v2746, %v2762
    %v2771 = vmul.f32 %v2590, %v2496
    %v2772 = vmul.f32 %v2591, %v2509
    %v2773 = vmul.f32 %v2592, %v2522
    %v2774 = vmul.f32 %v2593, %v2535
    %v2775 = vmul.f32 %v2594, %v2548
    %v2776 = vmul.f32 %v2595, %v2561
    %v2777 = vmul.f32 %v2596, %v2574
    %v2778 = vmul.f32 %v2597, %v2587
    %v2779 = vmul.f32 %v2771, %v2763
    %v2780 = vmul.f32 %v2772, %v2764
    %v2781 = vmul.f32 %v2773, %v2765
    %v2782 = vmul.f32 %v2774, %v2766
    %v2783 = vmul.f32 %v2775, %v2767
    %v2784 = vmul.f32 %v2776, %v2768
    %v2785 = vmul.f32 %v2777, %v2769
    %v2786 = vmul.f32 %v2778, %v2770
    %v2787 = vpack.c.bf16 %v2779, %v2779
    %v2788 = vpack.c.bf16 %v2780, %v2780
    %v2789 = vpack.c.bf16 %v2781, %v2781
    %v2790 = vpack.c.bf16 %v2782, %v2782
    %v2791 = vpack.c.bf16 %v2783, %v2783
    %v2792 = vpack.c.bf16 %v2784, %v2784
    %v2793 = vpack.c.bf16 %v2785, %v2785
    %v2794 = vpack.c.bf16 %v2786, %v2786
    %v2796 = vsel %vm2610, %v2787, 0
    %v2799 = vsel %vm2610, %v2788, 0
    %v2802 = vsel %vm2610, %v2789, 0
    %v2805 = vsel %vm2610, %v2790, 0
    %v2808 = vsel %vm2610, %v2791, 0
    %v2811 = vsel %vm2610, %v2792, 0
    %v2814 = vsel %vm2610, %v2793, 0
    %v2817 = vsel %vm2610, %v2794, 0
    %2819 = vmatpush.bf16.msra.mxu0 0
    %2820 = vmatpush.bf16.msra.mxu0 0
    %2821 = vmatpush.bf16.msra.mxu0 0
    %2822 = vmatpush.bf16.msra.mxu0 0
    %2823 = vmatpush.bf16.msra.mxu0 0
    %2824 = vmatpush.bf16.msra.mxu0 0
    %2825 = vmatpush.bf16.msra.mxu0 0
    %2826 = vmatpush.bf16.msra.mxu0 %v2796
    %2827 = vmatmul.bf16.gmra.mxu0 %v2608
    %v2828 = vpop.f32.mrf.mxu0
    %v2829 = vadd.f32 1e-08, %v2828
    %v2830 = vpop.f32.mrf.mxu0
    %2831 = vdwg.mxu0
    %2832 = vmatpush.bf16.msra.mxu0 0
    %2833 = vmatpush.bf16.msra.mxu0 0
    %2834 = vmatpush.bf16.msra.mxu0 0
    %2835 = vmatpush.bf16.msra.mxu0 0
    %2836 = vmatpush.bf16.msra.mxu0 0
    %2837 = vmatpush.bf16.msra.mxu0 0
    %2838 = vmatpush.bf16.msra.mxu0 0
    %2839 = vmatpush.bf16.msra.mxu0 %v2799
    %2840 = vmatmul.bf16.gmra.mxu0 %v2608
    %v2841 = vpop.f32.mrf.mxu0
    %v2842 = vadd.f32 1e-08, %v2841
    %v2843 = vpop.f32.mrf.mxu0
    %2844 = vdwg.mxu0
    %2845 = vmatpush.bf16.msra.mxu0 0
    %2846 = vmatpush.bf16.msra.mxu0 0
    %2847 = vmatpush.bf16.msra.mxu0 0
    %2848 = vmatpush.bf16.msra.mxu0 0
    %2849 = vmatpush.bf16.msra.mxu0 0
    %2850 = vmatpush.bf16.msra.mxu0 0
    %2851 = vmatpush.bf16.msra.mxu0 0
    %2852 = vmatpush.bf16.msra.mxu0 %v2802
    %2853 = vmatmul.bf16.gmra.mxu0 %v2608
    %v2854 = vpop.f32.mrf.mxu0
    %v2855 = vadd.f32 1e-08, %v2854
    %v2856 = vpop.f32.mrf.mxu0
    %2857 = vdwg.mxu0
    %2858 = vmatpush.bf16.msra.mxu0 0
    %2859 = vmatpush.bf16.msra.mxu0 0
    %2860 = vmatpush.bf16.msra.mxu0 0
    %2861 = vmatpush.bf16.msra.mxu0 0
    %2862 = vmatpush.bf16.msra.mxu0 0
    %2863 = vmatpush.bf16.msra.mxu0 0
    %2864 = vmatpush.bf16.msra.mxu0 0
    %2865 = vmatpush.bf16.msra.mxu0 %v2805
    %2866 = vmatmul.bf16.gmra.mxu0 %v2608
    %v2867 = vpop.f32.mrf.mxu0
    %v2868 = vadd.f32 1e-08, %v2867
    %v2869 = vpop.f32.mrf.mxu0
    %2870 = vdwg.mxu0
    %2871 = vmatpush.bf16.msra.mxu0 0
    %2872 = vmatpush.bf16.msra.mxu0 0
    %2873 = vmatpush.bf16.msra.mxu0 0
    %2874 = vmatpush.bf16.msra.mxu0 0
    %2875 = vmatpush.bf16.msra.mxu0 0
    %2876 = vmatpush.bf16.msra.mxu0 0
    %2877 = vmatpush.bf16.msra.mxu0 0
    %2878 = vmatpush.bf16.msra.mxu0 %v2808
    %2879 = vmatmul.bf16.gmra.mxu0 %v2608
    %v2880 = vpop.f32.mrf.mxu0
    %v2881 = vadd.f32 1e-08, %v2880
    %v2882 = vpop.f32.mrf.mxu0
    %2883 = vdwg.mxu0
    %2884 = vmatpush.bf16.msra.mxu0 0
    %2885 = vmatpush.bf16.msra.mxu0 0
    %2886 = vmatpush.bf16.msra.mxu0 0
    %2887 = vmatpush.bf16.msra.mxu0 0
    %2888 = vmatpush.bf16.msra.mxu0 0
    %2889 = vmatpush.bf16.msra.mxu0 0
    %2890 = vmatpush.bf16.msra.mxu0 0
    %2891 = vmatpush.bf16.msra.mxu0 %v2811
    %2892 = vmatmul.bf16.gmra.mxu0 %v2608
    %v2893 = vpop.f32.mrf.mxu0
    %v2894 = vadd.f32 1e-08, %v2893
    %v2895 = vpop.f32.mrf.mxu0
    %2896 = vdwg.mxu0
    %2897 = vmatpush.bf16.msra.mxu0 0
    %2898 = vmatpush.bf16.msra.mxu0 0
    %2899 = vmatpush.bf16.msra.mxu0 0
    %2900 = vmatpush.bf16.msra.mxu0 0
    %2901 = vmatpush.bf16.msra.mxu0 0
    %2902 = vmatpush.bf16.msra.mxu0 0
    %2903 = vmatpush.bf16.msra.mxu0 0
    %2904 = vmatpush.bf16.msra.mxu0 %v2814
    %2905 = vmatmul.bf16.gmra.mxu0 %v2608
    %v2906 = vpop.f32.mrf.mxu0
    %v2907 = vadd.f32 1e-08, %v2906
    %v2908 = vpop.f32.mrf.mxu0
    %2909 = vdwg.mxu0
    %2910 = vmatpush.bf16.msra.mxu0 0
    %2911 = vmatpush.bf16.msra.mxu0 0
    %2912 = vmatpush.bf16.msra.mxu0 0
    %2913 = vmatpush.bf16.msra.mxu0 0
    %2914 = vmatpush.bf16.msra.mxu0 0
    %2915 = vmatpush.bf16.msra.mxu0 0
    %2916 = vmatpush.bf16.msra.mxu0 0
    %2917 = vmatpush.bf16.msra.mxu0 %v2817
    %2918 = vmatmul.bf16.gmra.mxu0 %v2608
    %v2919 = vpop.f32.mrf.mxu0
    %v2920 = vadd.f32 1e-08, %v2919
    %v2921 = vpop.f32.mrf.mxu0
    %2922 = vdwg.mxu0
    %v2923 = vrcp.pop %v2829
    %v2924 = vrcp.pop %v2842
    %v2925 = vrcp.pop %v2855
    %v2926 = vrcp.pop %v2868
    %v2927 = vrcp.pop %v2881
    %v2928 = vrcp.pop %v2894
    %v2929 = vrcp.pop %v2907
    %v2930 = vrcp.pop %v2920
    %v2931 = vmul.f32 %v2829, %v2923
    %v2932 = vmul.f32 %v2842, %v2924
    %v2933 = vmul.f32 %v2855, %v2925
    %v2934 = vmul.f32 %v2868, %v2926
    %v2935 = vmul.f32 %v2881, %v2927
    %v2936 = vmul.f32 %v2894, %v2928
    %v2937 = vmul.f32 %v2907, %v2929
    %v2938 = vmul.f32 %v2920, %v2930
    %v2939 = vsub.f32 2.0, %v2931
    %v2940 = vsub.f32 2.0, %v2932
    %v2941 = vsub.f32 2.0, %v2933
    %v2942 = vsub.f32 2.0, %v2934
    %v2943 = vsub.f32 2.0, %v2935
    %v2944 = vsub.f32 2.0, %v2936
    %v2945 = vsub.f32 2.0, %v2937
    %v2946 = vsub.f32 2.0, %v2938
    %v2947 = vmul.f32 %v2923, %v2939
    %v2948 = vmul.f32 %v2924, %v2940
    %v2949 = vmul.f32 %v2925, %v2941
    %v2950 = vmul.f32 %v2926, %v2942
    %v2951 = vmul.f32 %v2927, %v2943
    %v2952 = vmul.f32 %v2928, %v2944
    %v2953 = vmul.f32 %v2929, %v2945
    %v2954 = vmul.f32 %v2930, %v2946
    %v2955 = vmul.f32 %v2779, %v2496
    %v2956 = vmul.f32 %v2780, %v2509
    %v2957 = vmul.f32 %v2781, %v2522
    %v2958 = vmul.f32 %v2782, %v2535
    %v2959 = vmul.f32 %v2783, %v2548
    %v2960 = vmul.f32 %v2784, %v2561
    %v2961 = vmul.f32 %v2785, %v2574
    %v2962 = vmul.f32 %v2786, %v2587
    %v2963 = vmul.f32 %v2955, %v2947
    %v2964 = vmul.f32 %v2956, %v2948
    %v2965 = vmul.f32 %v2957, %v2949
    %v2966 = vmul.f32 %v2958, %v2950
    %v2967 = vmul.f32 %v2959, %v2951
    %v2968 = vmul.f32 %v2960, %v2952
    %v2969 = vmul.f32 %v2961, %v2953
    %v2970 = vmul.f32 %v2962, %v2954
    %v2971 = vpack.c.bf16 %v2963, %v2963
    %v2972 = vpack.c.bf16 %v2964, %v2964
    %v2973 = vpack.c.bf16 %v2965, %v2965
    %v2974 = vpack.c.bf16 %v2966, %v2966
    %v2975 = vpack.c.bf16 %v2967, %v2967
    %v2976 = vpack.c.bf16 %v2968, %v2968
    %v2977 = vpack.c.bf16 %v2969, %v2969
    %v2978 = vpack.c.bf16 %v2970, %v2970
    %v2980 = vsel %vm2610, %v2971, 0
    %v2983 = vsel %vm2610, %v2972, 0
    %v2986 = vsel %vm2610, %v2973, 0
    %v2989 = vsel %vm2610, %v2974, 0
    %v2992 = vsel %vm2610, %v2975, 0
    %v2995 = vsel %vm2610, %v2976, 0
    %v2998 = vsel %vm2610, %v2977, 0
    %v3001 = vsel %vm2610, %v2978, 0
    %3003 = vmatpush.bf16.msra.mxu0 0
    %3004 = vmatpush.bf16.msra.mxu0 0
    %3005 = vmatpush.bf16.msra.mxu0 0
    %3006 = vmatpush.bf16.msra.mxu0 0
    %3007 = vmatpush.bf16.msra.mxu0 0
    %3008 = vmatpush.bf16.msra.mxu0 0
    %3009 = vmatpush.bf16.msra.mxu0 0
    %3010 = vmatpush.bf16.msra.mxu0 %v2980
    %3011 = vmatmul.bf16.gmra.mxu0 %v2608
    %v3012 = vpop.f32.mrf.mxu0
    %v3013 = vadd.f32 1e-08, %v3012
    %v3014 = vpop.f32.mrf.mxu0
    %3015 = vdwg.mxu0
    %3016 = vmatpush.bf16.msra.mxu0 0
    %3017 = vmatpush.bf16.msra.mxu0 0
    %3018 = vmatpush.bf16.msra.mxu0 0
    %3019 = vmatpush.bf16.msra.mxu0 0
    %3020 = vmatpush.bf16.msra.mxu0 0
    %3021 = vmatpush.bf16.msra.mxu0 0
    %3022 = vmatpush.bf16.msra.mxu0 0
    %3023 = vmatpush.bf16.msra.mxu0 %v2983
    %3024 = vmatmul.bf16.gmra.mxu0 %v2608
    %v3025 = vpop.f32.mrf.mxu0
    %v3026 = vadd.f32 1e-08, %v3025
    %v3027 = vpop.f32.mrf.mxu0
    %3028 = vdwg.mxu0
    %3029 = vmatpush.bf16.msra.mxu0 0
    %3030 = vmatpush.bf16.msra.mxu0 0
    %3031 = vmatpush.bf16.msra.mxu0 0
    %3032 = vmatpush.bf16.msra.mxu0 0
    %3033 = vmatpush.bf16.msra.mxu0 0
    %3034 = vmatpush.bf16.msra.mxu0 0
    %3035 = vmatpush.bf16.msra.mxu0 0
    %3036 = vmatpush.bf16.msra.mxu0 %v2986
    %3037 = vmatmul.bf16.gmra.mxu0 %v2608
    %v3038 = vpop.f32.mrf.mxu0
    %v3039 = vadd.f32 1e-08, %v3038
    %v3040 = vpop.f32.mrf.mxu0
    %3041 = vdwg.mxu0
    %3042 = vmatpush.bf16.msra.mxu0 0
    %3043 = vmatpush.bf16.msra.mxu0 0
    %3044 = vmatpush.bf16.msra.mxu0 0
    %3045 = vmatpush.bf16.msra.mxu0 0
    %3046 = vmatpush.bf16.msra.mxu0 0
    %3047 = vmatpush.bf16.msra.mxu0 0
    %3048 = vmatpush.bf16.msra.mxu0 0
    %3049 = vmatpush.bf16.msra.mxu0 %v2989
    %3050 = vmatmul.bf16.gmra.mxu0 %v2608
    %v3051 = vpop.f32.mrf.mxu0
    %v3052 = vadd.f32 1e-08, %v3051
    %v3053 = vpop.f32.mrf.mxu0
    %3054 = vdwg.mxu0
    %3055 = vmatpush.bf16.msra.mxu0 0
    %3056 = vmatpush.bf16.msra.mxu0 0
    %3057 = vmatpush.bf16.msra.mxu0 0
    %3058 = vmatpush.bf16.msra.mxu0 0
    %3059 = vmatpush.bf16.msra.mxu0 0
    %3060 = vmatpush.bf16.msra.mxu0 0
    %3061 = vmatpush.bf16.msra.mxu0 0
    %3062 = vmatpush.bf16.msra.mxu0 %v2992
    %3063 = vmatmul.bf16.gmra.mxu0 %v2608
    %v3064 = vpop.f32.mrf.mxu0
    %v3065 = vadd.f32 1e-08, %v3064
    %v3066 = vpop.f32.mrf.mxu0
    %3067 = vdwg.mxu0
    %3068 = vmatpush.bf16.msra.mxu0 0
    %3069 = vmatpush.bf16.msra.mxu0 0
    %3070 = vmatpush.bf16.msra.mxu0 0
    %3071 = vmatpush.bf16.msra.mxu0 0
    %3072 = vmatpush.bf16.msra.mxu0 0
    %3073 = vmatpush.bf16.msra.mxu0 0
    %3074 = vmatpush.bf16.msra.mxu0 0
    %3075 = vmatpush.bf16.msra.mxu0 %v2995
    %3076 = vmatmul.bf16.gmra.mxu0 %v2608
    %v3077 = vpop.f32.mrf.mxu0
    %v3078 = vadd.f32 1e-08, %v3077
    %v3079 = vpop.f32.mrf.mxu0
    %3080 = vdwg.mxu0
    %3081 = vmatpush.bf16.msra.mxu0 0
    %3082 = vmatpush.bf16.msra.mxu0 0
    %3083 = vmatpush.bf16.msra.mxu0 0
    %3084 = vmatpush.bf16.msra.mxu0 0
    %3085 = vmatpush.bf16.msra.mxu0 0
    %3086 = vmatpush.bf16.msra.mxu0 0
    %3087 = vmatpush.bf16.msra.mxu0 0
    %3088 = vmatpush.bf16.msra.mxu0 %v2998
    %3089 = vmatmul.bf16.gmra.mxu0 %v2608
    %v3090 = vpop.f32.mrf.mxu0
    %v3091 = vadd.f32 1e-08, %v3090
    %v3092 = vpop.f32.mrf.mxu0
    %3093 = vdwg.mxu0
    %3094 = vmatpush.bf16.msra.mxu0 0
    %3095 = vmatpush.bf16.msra.mxu0 0
    %3096 = vmatpush.bf16.msra.mxu0 0
    %3097 = vmatpush.bf16.msra.mxu0 0
    %3098 = vmatpush.bf16.msra.mxu0 0
    %3099 = vmatpush.bf16.msra.mxu0 0
    %3100 = vmatpush.bf16.msra.mxu0 0
    %3101 = vmatpush.bf16.msra.mxu0 %v3001
    %3102 = vmatmul.bf16.gmra.mxu0 %v2608
    %v3103 = vpop.f32.mrf.mxu0
    %v3104 = vadd.f32 1e-08, %v3103
    %v3105 = vpop.f32.mrf.mxu0
    %3106 = vdwg.mxu0
    %v3107 = vrcp.pop %v3013
    %v3108 = vrcp.pop %v3026
    %v3109 = vrcp.pop %v3039
    %v3110 = vrcp.pop %v3052
    %v3111 = vrcp.pop %v3065
    %v3112 = vrcp.pop %v3078
    %v3113 = vrcp.pop %v3091
    %v3114 = vrcp.pop %v3104
    %v3115 = vmul.f32 %v3013, %v3107
    %v3116 = vmul.f32 %v3026, %v3108
    %v3117 = vmul.f32 %v3039, %v3109
    %v3118 = vmul.f32 %v3052, %v3110
    %v3119 = vmul.f32 %v3065, %v3111
    %v3120 = vmul.f32 %v3078, %v3112
    %v3121 = vmul.f32 %v3091, %v3113
    %v3122 = vmul.f32 %v3104, %v3114
    %v3123 = vsub.f32 2.0, %v3115
    %v3124 = vsub.f32 2.0, %v3116
    %v3125 = vsub.f32 2.0, %v3117
    %v3126 = vsub.f32 2.0, %v3118
    %v3127 = vsub.f32 2.0, %v3119
    %v3128 = vsub.f32 2.0, %v3120
    %v3129 = vsub.f32 2.0, %v3121
    %v3130 = vsub.f32 2.0, %v3122
    %v3131 = vmul.f32 %v3107, %v3123
    %v3132 = vmul.f32 %v3108, %v3124
    %v3133 = vmul.f32 %v3109, %v3125
    %v3134 = vmul.f32 %v3110, %v3126
    %v3135 = vmul.f32 %v3111, %v3127
    %v3136 = vmul.f32 %v3112, %v3128
    %v3137 = vmul.f32 %v3113, %v3129
    %v3138 = vmul.f32 %v3114, %v3130
    %v3139 = vmul.f32 %v2963, %v2496
    %v3140 = vmul.f32 %v2964, %v2509
    %v3141 = vmul.f32 %v2965, %v2522
    %v3142 = vmul.f32 %v2966, %v2535
    %v3143 = vmul.f32 %v2967, %v2548
    %v3144 = vmul.f32 %v2968, %v2561
    %v3145 = vmul.f32 %v2969, %v2574
    %v3146 = vmul.f32 %v2970, %v2587
    %v3147 = vmul.f32 %v3139, %v3131
    %v3148 = vmul.f32 %v3140, %v3132
    %v3149 = vmul.f32 %v3141, %v3133
    %v3150 = vmul.f32 %v3142, %v3134
    %v3151 = vmul.f32 %v3143, %v3135
    %v3152 = vmul.f32 %v3144, %v3136
    %v3153 = vmul.f32 %v3145, %v3137
    %v3154 = vmul.f32 %v3146, %v3138
    %v3155 = vpack.c.bf16 %v3147, %v3147
    %v3156 = vpack.c.bf16 %v3148, %v3148
    %v3157 = vpack.c.bf16 %v3149, %v3149
    %v3158 = vpack.c.bf16 %v3150, %v3150
    %v3159 = vpack.c.bf16 %v3151, %v3151
    %v3160 = vpack.c.bf16 %v3152, %v3152
    %v3161 = vpack.c.bf16 %v3153, %v3153
    %v3162 = vpack.c.bf16 %v3154, %v3154
    %v3164 = vsel %vm2610, %v3155, 0
    %v3167 = vsel %vm2610, %v3156, 0
    %v3170 = vsel %vm2610, %v3157, 0
    %v3173 = vsel %vm2610, %v3158, 0
    %v3176 = vsel %vm2610, %v3159, 0
    %v3179 = vsel %vm2610, %v3160, 0
    %v3182 = vsel %vm2610, %v3161, 0
    %v3185 = vsel %vm2610, %v3162, 0
    %3187 = vmatpush.bf16.msra.mxu0 0
    %3188 = vmatpush.bf16.msra.mxu0 0
    %3189 = vmatpush.bf16.msra.mxu0 0
    %3190 = vmatpush.bf16.msra.mxu0 0
    %3191 = vmatpush.bf16.msra.mxu0 0
    %3192 = vmatpush.bf16.msra.mxu0 0
    %3193 = vmatpush.bf16.msra.mxu0 0
    %3194 = vmatpush.bf16.msra.mxu0 %v3164
    %3195 = vmatmul.bf16.gmra.mxu0 %v2608
    %v3196 = vpop.f32.mrf.mxu0
    %v3197 = vadd.f32 1e-08, %v3196
    %v3198 = vpop.f32.mrf.mxu0
    %3199 = vdwg.mxu0
    %3200 = vmatpush.bf16.msra.mxu0 0
    %3201 = vmatpush.bf16.msra.mxu0 0
    %3202 = vmatpush.bf16.msra.mxu0 0
    %3203 = vmatpush.bf16.msra.mxu0 0
    %3204 = vmatpush.bf16.msra.mxu0 0
    %3205 = vmatpush.bf16.msra.mxu0 0
    %3206 = vmatpush.bf16.msra.mxu0 0
    %3207 = vmatpush.bf16.msra.mxu0 %v3167
    %3208 = vmatmul.bf16.gmra.mxu0 %v2608
    %v3209 = vpop.f32.mrf.mxu0
    %v3210 = vadd.f32 1e-08, %v3209
    %v3211 = vpop.f32.mrf.mxu0
    %3212 = vdwg.mxu0
    %3213 = vmatpush.bf16.msra.mxu0 0
    %3214 = vmatpush.bf16.msra.mxu0 0
    %3215 = vmatpush.bf16.msra.mxu0 0
    %3216 = vmatpush.bf16.msra.mxu0 0
    %3217 = vmatpush.bf16.msra.mxu0 0
    %3218 = vmatpush.bf16.msra.mxu0 0
    %3219 = vmatpush.bf16.msra.mxu0 0
    %3220 = vmatpush.bf16.msra.mxu0 %v3170
    %3221 = vmatmul.bf16.gmra.mxu0 %v2608
    %v3222 = vpop.f32.mrf.mxu0
    %v3223 = vadd.f32 1e-08, %v3222
    %v3224 = vpop.f32.mrf.mxu0
    %3225 = vdwg.mxu0
    %3226 = vmatpush.bf16.msra.mxu0 0
    %3227 = vmatpush.bf16.msra.mxu0 0
    %3228 = vmatpush.bf16.msra.mxu0 0
    %3229 = vmatpush.bf16.msra.mxu0 0
    %3230 = vmatpush.bf16.msra.mxu0 0
    %3231 = vmatpush.bf16.msra.mxu0 0
    %3232 = vmatpush.bf16.msra.mxu0 0
    %3233 = vmatpush.bf16.msra.mxu0 %v3173
    %3234 = vmatmul.bf16.gmra.mxu0 %v2608
    %v3235 = vpop.f32.mrf.mxu0
    %v3236 = vadd.f32 1e-08, %v3235
    %v3237 = vpop.f32.mrf.mxu0
    %3238 = vdwg.mxu0
    %3239 = vmatpush.bf16.msra.mxu0 0
    %3240 = vmatpush.bf16.msra.mxu0 0
    %3241 = vmatpush.bf16.msra.mxu0 0
    %3242 = vmatpush.bf16.msra.mxu0 0
    %3243 = vmatpush.bf16.msra.mxu0 0
    %3244 = vmatpush.bf16.msra.mxu0 0
    %3245 = vmatpush.bf16.msra.mxu0 0
    %3246 = vmatpush.bf16.msra.mxu0 %v3176
    %3247 = vmatmul.bf16.gmra.mxu0 %v2608
    %v3248 = vpop.f32.mrf.mxu0
    %v3249 = vadd.f32 1e-08, %v3248
    %v3250 = vpop.f32.mrf.mxu0
    %3251 = vdwg.mxu0
    %3252 = vmatpush.bf16.msra.mxu0 0
    %3253 = vmatpush.bf16.msra.mxu0 0
    %3254 = vmatpush.bf16.msra.mxu0 0
    %3255 = vmatpush.bf16.msra.mxu0 0
    %3256 = vmatpush.bf16.msra.mxu0 0
    %3257 = vmatpush.bf16.msra.mxu0 0
    %3258 = vmatpush.bf16.msra.mxu0 0
    %3259 = vmatpush.bf16.msra.mxu0 %v3179
    %3260 = vmatmul.bf16.gmra.mxu0 %v2608
    %v3261 = vpop.f32.mrf.mxu0
    %v3262 = vadd.f32 1e-08, %v3261
    %v3263 = vpop.f32.mrf.mxu0
    %3264 = vdwg.mxu0
    %3265 = vmatpush.bf16.msra.mxu0 0
    %3266 = vmatpush.bf16.msra.mxu0 0
    %3267 = vmatpush.bf16.msra.mxu0 0
    %3268 = vmatpush.bf16.msra.mxu0 0
    %3269 = vmatpush.bf16.msra.mxu0 0
    %3270 = vmatpush.bf16.msra.mxu0 0
    %3271 = vmatpush.bf16.msra.mxu0 0
    %3272 = vmatpush.bf16.msra.mxu0 %v3182
    %3273 = vmatmul.bf16.gmra.mxu0 %v2608
    %v3274 = vpop.f32.mrf.mxu0
    %v3275 = vadd.f32 1e-08, %v3274
    %v3276 = vpop.f32.mrf.mxu0
    %3277 = vdwg.mxu0
    %3278 = vmatpush.bf16.msra.mxu0 0
    %3279 = vmatpush.bf16.msra.mxu0 0
    %3280 = vmatpush.bf16.msra.mxu0 0
    %3281 = vmatpush.bf16.msra.mxu0 0
    %3282 = vmatpush.bf16.msra.mxu0 0
    %3283 = vmatpush.bf16.msra.mxu0 0
    %3284 = vmatpush.bf16.msra.mxu0 0
    %3285 = vmatpush.bf16.msra.mxu0 %v3185
    %3286 = vmatmul.bf16.gmra.mxu0 %v2608
    %v3287 = vpop.f32.mrf.mxu0
    %v3288 = vadd.f32 1e-08, %v3287
    %v3289 = vpop.f32.mrf.mxu0
    %3290 = vdwg.mxu0
    %v3291 = vrcp.pop %v3197
    %v3292 = vrcp.pop %v3210
    %v3293 = vrcp.pop %v3223
    %v3294 = vrcp.pop %v3236
    %v3295 = vrcp.pop %v3249
    %v3296 = vrcp.pop %v3262
    %v3297 = vrcp.pop %v3275
    %v3298 = vrcp.pop %v3288
    %v3299 = vmul.f32 %v3197, %v3291
    %v3300 = vmul.f32 %v3210, %v3292
    %v3301 = vmul.f32 %v3223, %v3293
    %v3302 = vmul.f32 %v3236, %v3294
    %v3303 = vmul.f32 %v3249, %v3295
    %v3304 = vmul.f32 %v3262, %v3296
    %v3305 = vmul.f32 %v3275, %v3297
    %v3306 = vmul.f32 %v3288, %v3298
    %v3307 = vsub.f32 2.0, %v3299
    %v3308 = vsub.f32 2.0, %v3300
    %v3309 = vsub.f32 2.0, %v3301
    %v3310 = vsub.f32 2.0, %v3302
    %v3311 = vsub.f32 2.0, %v3303
    %v3312 = vsub.f32 2.0, %v3304
    %v3313 = vsub.f32 2.0, %v3305
    %v3314 = vsub.f32 2.0, %v3306
    %v3315 = vmul.f32 %v3291, %v3307
    %v3316 = vmul.f32 %v3292, %v3308
    %v3317 = vmul.f32 %v3293, %v3309
    %v3318 = vmul.f32 %v3294, %v3310
    %v3319 = vmul.f32 %v3295, %v3311
    %v3320 = vmul.f32 %v3296, %v3312
    %v3321 = vmul.f32 %v3297, %v3313
    %v3322 = vmul.f32 %v3298, %v3314
    %v3323 = vmul.f32 %v3147, %v2496
    %v3324 = vmul.f32 %v3148, %v2509
    %v3325 = vmul.f32 %v3149, %v2522
    %v3326 = vmul.f32 %v3150, %v2535
    %v3327 = vmul.f32 %v3151, %v2548
    %v3328 = vmul.f32 %v3152, %v2561
    %v3329 = vmul.f32 %v3153, %v2574
    %v3330 = vmul.f32 %v3154, %v2587
    %v3331 = vmul.f32 %v3323, %v3315
    %v3332 = vmul.f32 %v3324, %v3316
    %v3333 = vmul.f32 %v3325, %v3317
    %v3334 = vmul.f32 %v3326, %v3318
    %v3335 = vmul.f32 %v3327, %v3319
    %v3336 = vmul.f32 %v3328, %v3320
    %v3337 = vmul.f32 %v3329, %v3321
    %v3338 = vmul.f32 %v3330, %v3322
    %v3339 = vpack.c.bf16 %v3331, %v3331
    %v3340 = vpack.c.bf16 %v3332, %v3332
    %v3341 = vpack.c.bf16 %v3333, %v3333
    %v3342 = vpack.c.bf16 %v3334, %v3334
    %v3343 = vpack.c.bf16 %v3335, %v3335
    %v3344 = vpack.c.bf16 %v3336, %v3336
    %v3345 = vpack.c.bf16 %v3337, %v3337
    %v3346 = vpack.c.bf16 %v3338, %v3338
    %v3348 = vsel %vm2610, %v3339, 0
    %v3351 = vsel %vm2610, %v3340, 0
    %v3354 = vsel %vm2610, %v3341, 0
    %v3357 = vsel %vm2610, %v3342, 0
    %v3360 = vsel %vm2610, %v3343, 0
    %v3363 = vsel %vm2610, %v3344, 0
    %v3366 = vsel %vm2610, %v3345, 0
    %v3369 = vsel %vm2610, %v3346, 0
    %3371 = vmatpush.bf16.msra.mxu0 0
    %3372 = vmatpush.bf16.msra.mxu0 0
    %3373 = vmatpush.bf16.msra.mxu0 0
    %3374 = vmatpush.bf16.msra.mxu0 0
    %3375 = vmatpush.bf16.msra.mxu0 0
    %3376 = vmatpush.bf16.msra.mxu0 0
    %3377 = vmatpush.bf16.msra.mxu0 0
    %3378 = vmatpush.bf16.msra.mxu0 %v3348
    %3379 = vmatmul.bf16.gmra.mxu0 %v2608
    %v3380 = vpop.f32.mrf.mxu0
    %v3381 = vadd.f32 1e-08, %v3380
    %v3382 = vpop.f32.mrf.mxu0
    %3383 = vdwg.mxu0
    %3384 = vmatpush.bf16.msra.mxu0 0
    %3385 = vmatpush.bf16.msra.mxu0 0
    %3386 = vmatpush.bf16.msra.mxu0 0
    %3387 = vmatpush.bf16.msra.mxu0 0
    %3388 = vmatpush.bf16.msra.mxu0 0
    %3389 = vmatpush.bf16.msra.mxu0 0
    %3390 = vmatpush.bf16.msra.mxu0 0
    %3391 = vmatpush.bf16.msra.mxu0 %v3351
    %3392 = vmatmul.bf16.gmra.mxu0 %v2608
    %v3393 = vpop.f32.mrf.mxu0
    %v3394 = vadd.f32 1e-08, %v3393
    %v3395 = vpop.f32.mrf.mxu0
    %3396 = vdwg.mxu0
    %3397 = vmatpush.bf16.msra.mxu0 0
    %3398 = vmatpush.bf16.msra.mxu0 0
    %3399 = vmatpush.bf16.msra.mxu0 0
    %3400 = vmatpush.bf16.msra.mxu0 0
    %3401 = vmatpush.bf16.msra.mxu0 0
    %3402 = vmatpush.bf16.msra.mxu0 0
    %3403 = vmatpush.bf16.msra.mxu0 0
    %3404 = vmatpush.bf16.msra.mxu0 %v3354
    %3405 = vmatmul.bf16.gmra.mxu0 %v2608
    %v3406 = vpop.f32.mrf.mxu0
    %v3407 = vadd.f32 1e-08, %v3406
    %v3408 = vpop.f32.mrf.mxu0
    %3409 = vdwg.mxu0
    %3410 = vmatpush.bf16.msra.mxu0 0
    %3411 = vmatpush.bf16.msra.mxu0 0
    %3412 = vmatpush.bf16.msra.mxu0 0
    %3413 = vmatpush.bf16.msra.mxu0 0
    %3414 = vmatpush.bf16.msra.mxu0 0
    %3415 = vmatpush.bf16.msra.mxu0 0
    %3416 = vmatpush.bf16.msra.mxu0 0
    %3417 = vmatpush.bf16.msra.mxu0 %v3357
    %3418 = vmatmul.bf16.gmra.mxu0 %v2608
    %v3419 = vpop.f32.mrf.mxu0
    %v3420 = vadd.f32 1e-08, %v3419
    %v3421 = vpop.f32.mrf.mxu0
    %3422 = vdwg.mxu0
    %3423 = vmatpush.bf16.msra.mxu0 0
    %3424 = vmatpush.bf16.msra.mxu0 0
    %3425 = vmatpush.bf16.msra.mxu0 0
    %3426 = vmatpush.bf16.msra.mxu0 0
    %3427 = vmatpush.bf16.msra.mxu0 0
    %3428 = vmatpush.bf16.msra.mxu0 0
    %3429 = vmatpush.bf16.msra.mxu0 0
    %3430 = vmatpush.bf16.msra.mxu0 %v3360
    %3431 = vmatmul.bf16.gmra.mxu0 %v2608
    %v3432 = vpop.f32.mrf.mxu0
    %v3433 = vadd.f32 1e-08, %v3432
    %v3434 = vpop.f32.mrf.mxu0
    %3435 = vdwg.mxu0
    %3436 = vmatpush.bf16.msra.mxu0 0
    %3437 = vmatpush.bf16.msra.mxu0 0
    %3438 = vmatpush.bf16.msra.mxu0 0
    %3439 = vmatpush.bf16.msra.mxu0 0
    %3440 = vmatpush.bf16.msra.mxu0 0
    %3441 = vmatpush.bf16.msra.mxu0 0
    %3442 = vmatpush.bf16.msra.mxu0 0
    %3443 = vmatpush.bf16.msra.mxu0 %v3363
    %3444 = vmatmul.bf16.gmra.mxu0 %v2608
    %v3445 = vpop.f32.mrf.mxu0
    %v3446 = vadd.f32 1e-08, %v3445
    %v3447 = vpop.f32.mrf.mxu0
    %3448 = vdwg.mxu0
    %3449 = vmatpush.bf16.msra.mxu0 0
    %3450 = vmatpush.bf16.msra.mxu0 0
    %3451 = vmatpush.bf16.msra.mxu0 0
    %3452 = vmatpush.bf16.msra.mxu0 0
    %3453 = vmatpush.bf16.msra.mxu0 0
    %3454 = vmatpush.bf16.msra.mxu0 0
    %3455 = vmatpush.bf16.msra.mxu0 0
    %3456 = vmatpush.bf16.msra.mxu0 %v3366
    %3457 = vmatmul.bf16.gmra.mxu0 %v2608
    %v3458 = vpop.f32.mrf.mxu0
    %v3459 = vadd.f32 1e-08, %v3458
    %v3460 = vpop.f32.mrf.mxu0
    %3461 = vdwg.mxu0
    %3462 = vmatpush.bf16.msra.mxu0 0
    %3463 = vmatpush.bf16.msra.mxu0 0
    %3464 = vmatpush.bf16.msra.mxu0 0
    %3465 = vmatpush.bf16.msra.mxu0 0
    %3466 = vmatpush.bf16.msra.mxu0 0
    %3467 = vmatpush.bf16.msra.mxu0 0
    %3468 = vmatpush.bf16.msra.mxu0 0
    %3469 = vmatpush.bf16.msra.mxu0 %v3369
    %3470 = vmatmul.bf16.gmra.mxu0 %v2608
    %v3471 = vpop.f32.mrf.mxu0
    %v3472 = vadd.f32 1e-08, %v3471
    %v3473 = vpop.f32.mrf.mxu0
    %3474 = vdwg.mxu0
    %v3475 = vrcp.pop %v3381
    %v3476 = vrcp.pop %v3394
    %v3477 = vrcp.pop %v3407
    %v3478 = vrcp.pop %v3420
    %v3479 = vrcp.pop %v3433
    %v3480 = vrcp.pop %v3446
    %v3481 = vrcp.pop %v3459
    %v3482 = vrcp.pop %v3472
    %v3483 = vmul.f32 %v3381, %v3475
    %v3484 = vmul.f32 %v3394, %v3476
    %v3485 = vmul.f32 %v3407, %v3477
    %v3486 = vmul.f32 %v3420, %v3478
    %v3487 = vmul.f32 %v3433, %v3479
    %v3488 = vmul.f32 %v3446, %v3480
    %v3489 = vmul.f32 %v3459, %v3481
    %v3490 = vmul.f32 %v3472, %v3482
    %v3491 = vsub.f32 2.0, %v3483
    %v3492 = vsub.f32 2.0, %v3484
    %v3493 = vsub.f32 2.0, %v3485
    %v3494 = vsub.f32 2.0, %v3486
    %v3495 = vsub.f32 2.0, %v3487
    %v3496 = vsub.f32 2.0, %v3488
    %v3497 = vsub.f32 2.0, %v3489
    %v3498 = vsub.f32 2.0, %v3490
    %v3499 = vmul.f32 %v3475, %v3491
    %v3500 = vmul.f32 %v3476, %v3492
    %v3501 = vmul.f32 %v3477, %v3493
    %v3502 = vmul.f32 %v3478, %v3494
    %v3503 = vmul.f32 %v3479, %v3495
    %v3504 = vmul.f32 %v3480, %v3496
    %v3505 = vmul.f32 %v3481, %v3497
    %v3506 = vmul.f32 %v3482, %v3498
    %v3507 = vmul.f32 %v3331, %v2496
    %v3508 = vmul.f32 %v3332, %v2509
    %v3509 = vmul.f32 %v3333, %v2522
    %v3510 = vmul.f32 %v3334, %v2535
    %v3511 = vmul.f32 %v3335, %v2548
    %v3512 = vmul.f32 %v3336, %v2561
    %v3513 = vmul.f32 %v3337, %v2574
    %v3514 = vmul.f32 %v3338, %v2587
    %v3515 = vmul.f32 %v3507, %v3499
    %v3516 = vmul.f32 %v3508, %v3500
    %v3517 = vmul.f32 %v3509, %v3501
    %v3518 = vmul.f32 %v3510, %v3502
    %v3519 = vmul.f32 %v3511, %v3503
    %v3520 = vmul.f32 %v3512, %v3504
    %v3521 = vmul.f32 %v3513, %v3505
    %v3522 = vmul.f32 %v3514, %v3506
    %v3523 = vpack.c.bf16 %v3515, %v3515
    %v3524 = vpack.c.bf16 %v3516, %v3516
    %v3525 = vpack.c.bf16 %v3517, %v3517
    %v3526 = vpack.c.bf16 %v3518, %v3518
    %v3527 = vpack.c.bf16 %v3519, %v3519
    %v3528 = vpack.c.bf16 %v3520, %v3520
    %v3529 = vpack.c.bf16 %v3521, %v3521
    %v3530 = vpack.c.bf16 %v3522, %v3522
    %v3532 = vsel %vm2610, %v3523, 0
    %v3535 = vsel %vm2610, %v3524, 0
    %v3538 = vsel %vm2610, %v3525, 0
    %v3541 = vsel %vm2610, %v3526, 0
    %v3544 = vsel %vm2610, %v3527, 0
    %v3547 = vsel %vm2610, %v3528, 0
    %v3550 = vsel %vm2610, %v3529, 0
    %v3553 = vsel %vm2610, %v3530, 0
    %3555 = vmatpush.bf16.msra.mxu0 0
    %3556 = vmatpush.bf16.msra.mxu0 0
    %3557 = vmatpush.bf16.msra.mxu0 0
    %3558 = vmatpush.bf16.msra.mxu0 0
    %3559 = vmatpush.bf16.msra.mxu0 0
    %3560 = vmatpush.bf16.msra.mxu0 0
    %3561 = vmatpush.bf16.msra.mxu0 0
    %3562 = vmatpush.bf16.msra.mxu0 %v3532
    %3563 = vmatmul.bf16.gmra.mxu0 %v2608
    %v3564 = vpop.f32.mrf.mxu0
    %v3565 = vadd.f32 1e-08, %v3564
    %v3566 = vpop.f32.mrf.mxu0
    %3567 = vdwg.mxu0
    %3568 = vmatpush.bf16.msra.mxu0 0
    %3569 = vmatpush.bf16.msra.mxu0 0
    %3570 = vmatpush.bf16.msra.mxu0 0
    %3571 = vmatpush.bf16.msra.mxu0 0
    %3572 = vmatpush.bf16.msra.mxu0 0
    %3573 = vmatpush.bf16.msra.mxu0 0
    %3574 = vmatpush.bf16.msra.mxu0 0
    %3575 = vmatpush.bf16.msra.mxu0 %v3535
    %3576 = vmatmul.bf16.gmra.mxu0 %v2608
    %v3577 = vpop.f32.mrf.mxu0
    %v3578 = vadd.f32 1e-08, %v3577
    %v3579 = vpop.f32.mrf.mxu0
    %3580 = vdwg.mxu0
    %3581 = vmatpush.bf16.msra.mxu0 0
    %3582 = vmatpush.bf16.msra.mxu0 0
    %3583 = vmatpush.bf16.msra.mxu0 0
    %3584 = vmatpush.bf16.msra.mxu0 0
    %3585 = vmatpush.bf16.msra.mxu0 0
    %3586 = vmatpush.bf16.msra.mxu0 0
    %3587 = vmatpush.bf16.msra.mxu0 0
    %3588 = vmatpush.bf16.msra.mxu0 %v3538
    %3589 = vmatmul.bf16.gmra.mxu0 %v2608
    %v3590 = vpop.f32.mrf.mxu0
    %v3591 = vadd.f32 1e-08, %v3590
    %v3592 = vpop.f32.mrf.mxu0
    %3593 = vdwg.mxu0
    %3594 = vmatpush.bf16.msra.mxu0 0
    %3595 = vmatpush.bf16.msra.mxu0 0
    %3596 = vmatpush.bf16.msra.mxu0 0
    %3597 = vmatpush.bf16.msra.mxu0 0
    %3598 = vmatpush.bf16.msra.mxu0 0
    %3599 = vmatpush.bf16.msra.mxu0 0
    %3600 = vmatpush.bf16.msra.mxu0 0
    %3601 = vmatpush.bf16.msra.mxu0 %v3541
    %3602 = vmatmul.bf16.gmra.mxu0 %v2608
    %v3603 = vpop.f32.mrf.mxu0
    %v3604 = vadd.f32 1e-08, %v3603
    %v3605 = vpop.f32.mrf.mxu0
    %3606 = vdwg.mxu0
    %3607 = vmatpush.bf16.msra.mxu0 0
    %3608 = vmatpush.bf16.msra.mxu0 0
    %3609 = vmatpush.bf16.msra.mxu0 0
    %3610 = vmatpush.bf16.msra.mxu0 0
    %3611 = vmatpush.bf16.msra.mxu0 0
    %3612 = vmatpush.bf16.msra.mxu0 0
    %3613 = vmatpush.bf16.msra.mxu0 0
    %3614 = vmatpush.bf16.msra.mxu0 %v3544
    %3615 = vmatmul.bf16.gmra.mxu0 %v2608
    %v3616 = vpop.f32.mrf.mxu0
    %v3617 = vadd.f32 1e-08, %v3616
    %v3618 = vpop.f32.mrf.mxu0
    %3619 = vdwg.mxu0
    %3620 = vmatpush.bf16.msra.mxu0 0
    %3621 = vmatpush.bf16.msra.mxu0 0
    %3622 = vmatpush.bf16.msra.mxu0 0
    %3623 = vmatpush.bf16.msra.mxu0 0
    %3624 = vmatpush.bf16.msra.mxu0 0
    %3625 = vmatpush.bf16.msra.mxu0 0
    %3626 = vmatpush.bf16.msra.mxu0 0
    %3627 = vmatpush.bf16.msra.mxu0 %v3547
    %3628 = vmatmul.bf16.gmra.mxu0 %v2608
    %v3629 = vpop.f32.mrf.mxu0
    %v3630 = vadd.f32 1e-08, %v3629
    %v3631 = vpop.f32.mrf.mxu0
    %3632 = vdwg.mxu0
    %3633 = vmatpush.bf16.msra.mxu0 0
    %3634 = vmatpush.bf16.msra.mxu0 0
    %3635 = vmatpush.bf16.msra.mxu0 0
    %3636 = vmatpush.bf16.msra.mxu0 0
    %3637 = vmatpush.bf16.msra.mxu0 0
    %3638 = vmatpush.bf16.msra.mxu0 0
    %3639 = vmatpush.bf16.msra.mxu0 0
    %3640 = vmatpush.bf16.msra.mxu0 %v3550
    %3641 = vmatmul.bf16.gmra.mxu0 %v2608
    %v3642 = vpop.f32.mrf.mxu0
    %v3643 = vadd.f32 1e-08, %v3642
    %v3644 = vpop.f32.mrf.mxu0
    %3645 = vdwg.mxu0
    %3646 = vmatpush.bf16.msra.mxu0 0
    %3647 = vmatpush.bf16.msra.mxu0 0
    %3648 = vmatpush.bf16.msra.mxu0 0
    %3649 = vmatpush.bf16.msra.mxu0 0
    %3650 = vmatpush.bf16.msra.mxu0 0
    %3651 = vmatpush.bf16.msra.mxu0 0
    %3652 = vmatpush.bf16.msra.mxu0 0
    %3653 = vmatpush.bf16.msra.mxu0 %v3553
    %3654 = vmatmul.bf16.gmra.mxu0 %v2608
    %v3655 = vpop.f32.mrf.mxu0
    %v3656 = vadd.f32 1e-08, %v3655
    %v3657 = vpop.f32.mrf.mxu0
    %3658 = vdwg.mxu0
    %v3659 = vrcp.pop %v3565
    %v3660 = vrcp.pop %v3578
    %v3661 = vrcp.pop %v3591
    %v3662 = vrcp.pop %v3604
    %v3663 = vrcp.pop %v3617
    %v3664 = vrcp.pop %v3630
    %v3665 = vrcp.pop %v3643
    %v3666 = vrcp.pop %v3656
    %v3667 = vmul.f32 %v3565, %v3659
    %v3668 = vmul.f32 %v3578, %v3660
    %v3669 = vmul.f32 %v3591, %v3661
    %v3670 = vmul.f32 %v3604, %v3662
    %v3671 = vmul.f32 %v3617, %v3663
    %v3672 = vmul.f32 %v3630, %v3664
    %v3673 = vmul.f32 %v3643, %v3665
    %v3674 = vmul.f32 %v3656, %v3666
    %v3675 = vsub.f32 2.0, %v3667
    %v3676 = vsub.f32 2.0, %v3668
    %v3677 = vsub.f32 2.0, %v3669
    %v3678 = vsub.f32 2.0, %v3670
    %v3679 = vsub.f32 2.0, %v3671
    %v3680 = vsub.f32 2.0, %v3672
    %v3681 = vsub.f32 2.0, %v3673
    %v3682 = vsub.f32 2.0, %v3674
    %v3683 = vmul.f32 %v3659, %v3675
    %v3684 = vmul.f32 %v3660, %v3676
    %v3685 = vmul.f32 %v3661, %v3677
    %v3686 = vmul.f32 %v3662, %v3678
    %v3687 = vmul.f32 %v3663, %v3679
    %v3688 = vmul.f32 %v3664, %v3680
    %v3689 = vmul.f32 %v3665, %v3681
    %v3690 = vmul.f32 %v3666, %v3682
    %v3691 = vmul.f32 %v3515, %v2496
    %v3692 = vmul.f32 %v3516, %v2509
    %v3693 = vmul.f32 %v3517, %v2522
    %v3694 = vmul.f32 %v3518, %v2535
    %v3695 = vmul.f32 %v3519, %v2548
    %v3696 = vmul.f32 %v3520, %v2561
    %v3697 = vmul.f32 %v3521, %v2574
    %v3698 = vmul.f32 %v3522, %v2587
    %v3699 = vmul.f32 %v3691, %v3683
    %v3700 = vmul.f32 %v3692, %v3684
    %v3701 = vmul.f32 %v3693, %v3685
    %v3702 = vmul.f32 %v3694, %v3686
    %v3703 = vmul.f32 %v3695, %v3687
    %v3704 = vmul.f32 %v3696, %v3688
    %v3705 = vmul.f32 %v3697, %v3689
    %v3706 = vmul.f32 %v3698, %v3690
    %v3707 = vpack.c.bf16 %v3699, %v3699
    %v3708 = vpack.c.bf16 %v3700, %v3700
    %v3709 = vpack.c.bf16 %v3701, %v3701
    %v3710 = vpack.c.bf16 %v3702, %v3702
    %v3711 = vpack.c.bf16 %v3703, %v3703
    %v3712 = vpack.c.bf16 %v3704, %v3704
    %v3713 = vpack.c.bf16 %v3705, %v3705
    %v3714 = vpack.c.bf16 %v3706, %v3706
    %v3716 = vsel %vm2610, %v3707, 0
    %v3719 = vsel %vm2610, %v3708, 0
    %v3722 = vsel %vm2610, %v3709, 0
    %v3725 = vsel %vm2610, %v3710, 0
    %v3728 = vsel %vm2610, %v3711, 0
    %v3731 = vsel %vm2610, %v3712, 0
    %v3734 = vsel %vm2610, %v3713, 0
    %v3737 = vsel %vm2610, %v3714, 0
    %3739 = vmatpush.bf16.msra.mxu0 0
    %3740 = vmatpush.bf16.msra.mxu0 0
    %3741 = vmatpush.bf16.msra.mxu0 0
    %3742 = vmatpush.bf16.msra.mxu0 0
    %3743 = vmatpush.bf16.msra.mxu0 0
    %3744 = vmatpush.bf16.msra.mxu0 0
    %3745 = vmatpush.bf16.msra.mxu0 0
    %3746 = vmatpush.bf16.msra.mxu0 %v3716
    %3747 = vmatmul.bf16.gmra.mxu0 %v2608
    %v3748 = vpop.f32.mrf.mxu0
    %v3749 = vadd.f32 1e-08, %v3748
    %v3750 = vpop.f32.mrf.mxu0
    %3751 = vdwg.mxu0
    %3752 = vmatpush.bf16.msra.mxu0 0
    %3753 = vmatpush.bf16.msra.mxu0 0
    %3754 = vmatpush.bf16.msra.mxu0 0
    %3755 = vmatpush.bf16.msra.mxu0 0
    %3756 = vmatpush.bf16.msra.mxu0 0
    %3757 = vmatpush.bf16.msra.mxu0 0
    %3758 = vmatpush.bf16.msra.mxu0 0
    %3759 = vmatpush.bf16.msra.mxu0 %v3719
    %3760 = vmatmul.bf16.gmra.mxu0 %v2608
    %v3761 = vpop.f32.mrf.mxu0
    %v3762 = vadd.f32 1e-08, %v3761
    %v3763 = vpop.f32.mrf.mxu0
    %3764 = vdwg.mxu0
    %3765 = vmatpush.bf16.msra.mxu0 0
    %3766 = vmatpush.bf16.msra.mxu0 0
    %3767 = vmatpush.bf16.msra.mxu0 0
    %3768 = vmatpush.bf16.msra.mxu0 0
    %3769 = vmatpush.bf16.msra.mxu0 0
    %3770 = vmatpush.bf16.msra.mxu0 0
    %3771 = vmatpush.bf16.msra.mxu0 0
    %3772 = vmatpush.bf16.msra.mxu0 %v3722
    %3773 = vmatmul.bf16.gmra.mxu0 %v2608
    %v3774 = vpop.f32.mrf.mxu0
    %v3775 = vadd.f32 1e-08, %v3774
    %v3776 = vpop.f32.mrf.mxu0
    %3777 = vdwg.mxu0
    %3778 = vmatpush.bf16.msra.mxu0 0
    %3779 = vmatpush.bf16.msra.mxu0 0
    %3780 = vmatpush.bf16.msra.mxu0 0
    %3781 = vmatpush.bf16.msra.mxu0 0
    %3782 = vmatpush.bf16.msra.mxu0 0
    %3783 = vmatpush.bf16.msra.mxu0 0
    %3784 = vmatpush.bf16.msra.mxu0 0
    %3785 = vmatpush.bf16.msra.mxu0 %v3725
    %3786 = vmatmul.bf16.gmra.mxu0 %v2608
    %v3787 = vpop.f32.mrf.mxu0
    %v3788 = vadd.f32 1e-08, %v3787
    %v3789 = vpop.f32.mrf.mxu0
    %3790 = vdwg.mxu0
    %3791 = vmatpush.bf16.msra.mxu0 0
    %3792 = vmatpush.bf16.msra.mxu0 0
    %3793 = vmatpush.bf16.msra.mxu0 0
    %3794 = vmatpush.bf16.msra.mxu0 0
    %3795 = vmatpush.bf16.msra.mxu0 0
    %3796 = vmatpush.bf16.msra.mxu0 0
    %3797 = vmatpush.bf16.msra.mxu0 0
    %3798 = vmatpush.bf16.msra.mxu0 %v3728
    %3799 = vmatmul.bf16.gmra.mxu0 %v2608
    %v3800 = vpop.f32.mrf.mxu0
    %v3801 = vadd.f32 1e-08, %v3800
    %v3802 = vpop.f32.mrf.mxu0
    %3803 = vdwg.mxu0
    %3804 = vmatpush.bf16.msra.mxu0 0
    %3805 = vmatpush.bf16.msra.mxu0 0
    %3806 = vmatpush.bf16.msra.mxu0 0
    %3807 = vmatpush.bf16.msra.mxu0 0
    %3808 = vmatpush.bf16.msra.mxu0 0
    %3809 = vmatpush.bf16.msra.mxu0 0
    %3810 = vmatpush.bf16.msra.mxu0 0
    %3811 = vmatpush.bf16.msra.mxu0 %v3731
    %3812 = vmatmul.bf16.gmra.mxu0 %v2608
    %v3813 = vpop.f32.mrf.mxu0
    %v3814 = vadd.f32 1e-08, %v3813
    %v3815 = vpop.f32.mrf.mxu0
    %3816 = vdwg.mxu0
    %3817 = vmatpush.bf16.msra.mxu0 0
    %3818 = vmatpush.bf16.msra.mxu0 0
    %3819 = vmatpush.bf16.msra.mxu0 0
    %3820 = vmatpush.bf16.msra.mxu0 0
    %3821 = vmatpush.bf16.msra.mxu0 0
    %3822 = vmatpush.bf16.msra.mxu0 0
    %3823 = vmatpush.bf16.msra.mxu0 0
    %3824 = vmatpush.bf16.msra.mxu0 %v3734
    %3825 = vmatmul.bf16.gmra.mxu0 %v2608
    %v3826 = vpop.f32.mrf.mxu0
    %v3827 = vadd.f32 1e-08, %v3826
    %v3828 = vpop.f32.mrf.mxu0
    %3829 = vdwg.mxu0
    %3830 = vmatpush.bf16.msra.mxu0 0
    %3831 = vmatpush.bf16.msra.mxu0 0
    %3832 = vmatpush.bf16.msra.mxu0 0
    %3833 = vmatpush.bf16.msra.mxu0 0
    %3834 = vmatpush.bf16.msra.mxu0 0
    %3835 = vmatpush.bf16.msra.mxu0 0
    %3836 = vmatpush.bf16.msra.mxu0 0
    %3837 = vmatpush.bf16.msra.mxu0 %v3737
    %3838 = vmatmul.bf16.gmra.mxu0 %v2608
    %v3839 = vpop.f32.mrf.mxu0
    %v3840 = vadd.f32 1e-08, %v3839
    %v3841 = vpop.f32.mrf.mxu0
    %3842 = vdwg.mxu0
    %v3843 = vrcp.pop %v3749
    %v3844 = vrcp.pop %v3762
    %v3845 = vrcp.pop %v3775
    %v3846 = vrcp.pop %v3788
    %v3847 = vrcp.pop %v3801
    %v3848 = vrcp.pop %v3814
    %v3849 = vrcp.pop %v3827
    %v3850 = vrcp.pop %v3840
    %v3851 = vmul.f32 %v3749, %v3843
    %v3852 = vmul.f32 %v3762, %v3844
    %v3853 = vmul.f32 %v3775, %v3845
    %v3854 = vmul.f32 %v3788, %v3846
    %v3855 = vmul.f32 %v3801, %v3847
    %v3856 = vmul.f32 %v3814, %v3848
    %v3857 = vmul.f32 %v3827, %v3849
    %v3858 = vmul.f32 %v3840, %v3850
    %v3859 = vsub.f32 2.0, %v3851
    %v3860 = vsub.f32 2.0, %v3852
    %v3861 = vsub.f32 2.0, %v3853
    %v3862 = vsub.f32 2.0, %v3854
    %v3863 = vsub.f32 2.0, %v3855
    %v3864 = vsub.f32 2.0, %v3856
    %v3865 = vsub.f32 2.0, %v3857
    %v3866 = vsub.f32 2.0, %v3858
    %v3867 = vmul.f32 %v3843, %v3859
    %v3868 = vmul.f32 %v3844, %v3860
    %v3869 = vmul.f32 %v3845, %v3861
    %v3870 = vmul.f32 %v3846, %v3862
    %v3871 = vmul.f32 %v3847, %v3863
    %v3872 = vmul.f32 %v3848, %v3864
    %v3873 = vmul.f32 %v3849, %v3865
    %v3874 = vmul.f32 %v3850, %v3866
    %v3875 = vmul.f32 %v3699, %v2496
    %v3876 = vmul.f32 %v3700, %v2509
    %v3877 = vmul.f32 %v3701, %v2522
    %v3878 = vmul.f32 %v3702, %v2535
    %v3879 = vmul.f32 %v3703, %v2548
    %v3880 = vmul.f32 %v3704, %v2561
    %v3881 = vmul.f32 %v3705, %v2574
    %v3882 = vmul.f32 %v3706, %v2587
    %v3883 = vmul.f32 %v3875, %v3867
    %v3884 = vmul.f32 %v3876, %v3868
    %v3885 = vmul.f32 %v3877, %v3869
    %v3886 = vmul.f32 %v3878, %v3870
    %v3887 = vmul.f32 %v3879, %v3871
    %v3888 = vmul.f32 %v3880, %v3872
    %v3889 = vmul.f32 %v3881, %v3873
    %v3890 = vmul.f32 %v3882, %v3874
    %v3891 = vpack.c.bf16 %v3883, %v3883
    %v3892 = vpack.c.bf16 %v3884, %v3884
    %v3893 = vpack.c.bf16 %v3885, %v3885
    %v3894 = vpack.c.bf16 %v3886, %v3886
    %v3895 = vpack.c.bf16 %v3887, %v3887
    %v3896 = vpack.c.bf16 %v3888, %v3888
    %v3897 = vpack.c.bf16 %v3889, %v3889
    %v3898 = vpack.c.bf16 %v3890, %v3890
    %v3900 = vsel %vm2610, %v3891, 0
    %v3903 = vsel %vm2610, %v3892, 0
    %v3906 = vsel %vm2610, %v3893, 0
    %v3909 = vsel %vm2610, %v3894, 0
    %v3912 = vsel %vm2610, %v3895, 0
    %v3915 = vsel %vm2610, %v3896, 0
    %v3918 = vsel %vm2610, %v3897, 0
    %v3921 = vsel %vm2610, %v3898, 0
    %3923 = vmatpush.bf16.msra.mxu0 0
    %3924 = vmatpush.bf16.msra.mxu0 0
    %3925 = vmatpush.bf16.msra.mxu0 0
    %3926 = vmatpush.bf16.msra.mxu0 0
    %3927 = vmatpush.bf16.msra.mxu0 0
    %3928 = vmatpush.bf16.msra.mxu0 0
    %3929 = vmatpush.bf16.msra.mxu0 0
    %3930 = vmatpush.bf16.msra.mxu0 %v3900
    %3931 = vmatmul.bf16.gmra.mxu0 %v2608
    %v3932 = vpop.f32.mrf.mxu0
    %v3933 = vadd.f32 1e-08, %v3932
    %v3934 = vpop.f32.mrf.mxu0
    %3935 = vdwg.mxu0
    %3936 = vmatpush.bf16.msra.mxu0 0
    %3937 = vmatpush.bf16.msra.mxu0 0
    %3938 = vmatpush.bf16.msra.mxu0 0
    %3939 = vmatpush.bf16.msra.mxu0 0
    %3940 = vmatpush.bf16.msra.mxu0 0
    %3941 = vmatpush.bf16.msra.mxu0 0
    %3942 = vmatpush.bf16.msra.mxu0 0
    %3943 = vmatpush.bf16.msra.mxu0 %v3903
    %3944 = vmatmul.bf16.gmra.mxu0 %v2608
    %v3945 = vpop.f32.mrf.mxu0
    %v3946 = vadd.f32 1e-08, %v3945
    %v3947 = vpop.f32.mrf.mxu0
    %3948 = vdwg.mxu0
    %3949 = vmatpush.bf16.msra.mxu0 0
    %3950 = vmatpush.bf16.msra.mxu0 0
    %3951 = vmatpush.bf16.msra.mxu0 0
    %3952 = vmatpush.bf16.msra.mxu0 0
    %3953 = vmatpush.bf16.msra.mxu0 0
    %3954 = vmatpush.bf16.msra.mxu0 0
    %3955 = vmatpush.bf16.msra.mxu0 0
    %3956 = vmatpush.bf16.msra.mxu0 %v3906
    %3957 = vmatmul.bf16.gmra.mxu0 %v2608
    %v3958 = vpop.f32.mrf.mxu0
    %v3959 = vadd.f32 1e-08, %v3958
    %v3960 = vpop.f32.mrf.mxu0
    %3961 = vdwg.mxu0
    %3962 = vmatpush.bf16.msra.mxu0 0
    %3963 = vmatpush.bf16.msra.mxu0 0
    %3964 = vmatpush.bf16.msra.mxu0 0
    %3965 = vmatpush.bf16.msra.mxu0 0
    %3966 = vmatpush.bf16.msra.mxu0 0
    %3967 = vmatpush.bf16.msra.mxu0 0
    %3968 = vmatpush.bf16.msra.mxu0 0
    %3969 = vmatpush.bf16.msra.mxu0 %v3909
    %3970 = vmatmul.bf16.gmra.mxu0 %v2608
    %v3971 = vpop.f32.mrf.mxu0
    %v3972 = vadd.f32 1e-08, %v3971
    %v3973 = vpop.f32.mrf.mxu0
    %3974 = vdwg.mxu0
    %3975 = vmatpush.bf16.msra.mxu0 0
    %3976 = vmatpush.bf16.msra.mxu0 0
    %3977 = vmatpush.bf16.msra.mxu0 0
    %3978 = vmatpush.bf16.msra.mxu0 0
    %3979 = vmatpush.bf16.msra.mxu0 0
    %3980 = vmatpush.bf16.msra.mxu0 0
    %3981 = vmatpush.bf16.msra.mxu0 0
    %3982 = vmatpush.bf16.msra.mxu0 %v3912
    %3983 = vmatmul.bf16.gmra.mxu0 %v2608
    %v3984 = vpop.f32.mrf.mxu0
    %v3985 = vadd.f32 1e-08, %v3984
    %v3986 = vpop.f32.mrf.mxu0
    %3987 = vdwg.mxu0
    %3988 = vmatpush.bf16.msra.mxu0 0
    %3989 = vmatpush.bf16.msra.mxu0 0
    %3990 = vmatpush.bf16.msra.mxu0 0
    %3991 = vmatpush.bf16.msra.mxu0 0
    %3992 = vmatpush.bf16.msra.mxu0 0
    %3993 = vmatpush.bf16.msra.mxu0 0
    %3994 = vmatpush.bf16.msra.mxu0 0
    %3995 = vmatpush.bf16.msra.mxu0 %v3915
    %3996 = vmatmul.bf16.gmra.mxu0 %v2608
    %v3997 = vpop.f32.mrf.mxu0
    %v3998 = vadd.f32 1e-08, %v3997
    %v3999 = vpop.f32.mrf.mxu0
    %4000 = vdwg.mxu0
    %4001 = vmatpush.bf16.msra.mxu0 0
    %4002 = vmatpush.bf16.msra.mxu0 0
    %4003 = vmatpush.bf16.msra.mxu0 0
    %4004 = vmatpush.bf16.msra.mxu0 0
    %4005 = vmatpush.bf16.msra.mxu0 0
    %4006 = vmatpush.bf16.msra.mxu0 0
    %4007 = vmatpush.bf16.msra.mxu0 0
    %4008 = vmatpush.bf16.msra.mxu0 %v3918
    %4009 = vmatmul.bf16.gmra.mxu0 %v2608
    %v4010 = vpop.f32.mrf.mxu0
    %v4011 = vadd.f32 1e-08, %v4010
    %v4012 = vpop.f32.mrf.mxu0
    %4013 = vdwg.mxu0
    %4014 = vmatpush.bf16.msra.mxu0 0
    %4015 = vmatpush.bf16.msra.mxu0 0
    %4016 = vmatpush.bf16.msra.mxu0 0
    %4017 = vmatpush.bf16.msra.mxu0 0
    %4018 = vmatpush.bf16.msra.mxu0 0
    %4019 = vmatpush.bf16.msra.mxu0 0
    %4020 = vmatpush.bf16.msra.mxu0 0
    %4021 = vmatpush.bf16.msra.mxu0 %v3921
    %4022 = vmatmul.bf16.gmra.mxu0 %v2608
    %v4023 = vpop.f32.mrf.mxu0
    %v4024 = vadd.f32 1e-08, %v4023
    %v4025 = vpop.f32.mrf.mxu0
    %4026 = vdwg.mxu0
    %v4027 = vrcp.pop %v3933
    %v4028 = vrcp.pop %v3946
    %v4029 = vrcp.pop %v3959
    %v4030 = vrcp.pop %v3972
    %v4031 = vrcp.pop %v3985
    %v4032 = vrcp.pop %v3998
    %v4033 = vrcp.pop %v4011
    %v4034 = vrcp.pop %v4024
    %v4035 = vmul.f32 %v3933, %v4027
    %v4036 = vmul.f32 %v3946, %v4028
    %v4037 = vmul.f32 %v3959, %v4029
    %v4038 = vmul.f32 %v3972, %v4030
    %v4039 = vmul.f32 %v3985, %v4031
    %v4040 = vmul.f32 %v3998, %v4032
    %v4041 = vmul.f32 %v4011, %v4033
    %v4042 = vmul.f32 %v4024, %v4034
    %v4043 = vsub.f32 2.0, %v4035
    %v4044 = vsub.f32 2.0, %v4036
    %v4045 = vsub.f32 2.0, %v4037
    %v4046 = vsub.f32 2.0, %v4038
    %v4047 = vsub.f32 2.0, %v4039
    %v4048 = vsub.f32 2.0, %v4040
    %v4049 = vsub.f32 2.0, %v4041
    %v4050 = vsub.f32 2.0, %v4042
    %v4051 = vmul.f32 %v4027, %v4043
    %v4052 = vmul.f32 %v4028, %v4044
    %v4053 = vmul.f32 %v4029, %v4045
    %v4054 = vmul.f32 %v4030, %v4046
    %v4055 = vmul.f32 %v4031, %v4047
    %v4056 = vmul.f32 %v4032, %v4048
    %v4057 = vmul.f32 %v4033, %v4049
    %v4058 = vmul.f32 %v4034, %v4050
    %v4059 = vmul.f32 %v3883, %v2496
    %v4060 = vmul.f32 %v3884, %v2509
    %v4061 = vmul.f32 %v3885, %v2522
    %v4062 = vmul.f32 %v3886, %v2535
    %v4063 = vmul.f32 %v3887, %v2548
    %v4064 = vmul.f32 %v3888, %v2561
    %v4065 = vmul.f32 %v3889, %v2574
    %v4066 = vmul.f32 %v3890, %v2587
    %v4067 = vmul.f32 %v4059, %v4051
    %v4068 = vmul.f32 %v4060, %v4052
    %v4069 = vmul.f32 %v4061, %v4053
    %v4070 = vmul.f32 %v4062, %v4054
    %v4071 = vmul.f32 %v4063, %v4055
    %v4072 = vmul.f32 %v4064, %v4056
    %v4073 = vmul.f32 %v4065, %v4057
    %v4074 = vmul.f32 %v4066, %v4058
    %v4075 = vpack.c.bf16 %v4067, %v4067
    %v4076 = vpack.c.bf16 %v4068, %v4068
    %v4077 = vpack.c.bf16 %v4069, %v4069
    %v4078 = vpack.c.bf16 %v4070, %v4070
    %v4079 = vpack.c.bf16 %v4071, %v4071
    %v4080 = vpack.c.bf16 %v4072, %v4072
    %v4081 = vpack.c.bf16 %v4073, %v4073
    %v4082 = vpack.c.bf16 %v4074, %v4074
    %v4084 = vsel %vm2610, %v4075, 0
    %v4087 = vsel %vm2610, %v4076, 0
    %v4090 = vsel %vm2610, %v4077, 0
    %v4093 = vsel %vm2610, %v4078, 0
    %v4096 = vsel %vm2610, %v4079, 0
    %v4099 = vsel %vm2610, %v4080, 0
    %v4102 = vsel %vm2610, %v4081, 0
    %v4105 = vsel %vm2610, %v4082, 0
    %4107 = vmatpush.bf16.msra.mxu0 0
    %4108 = vmatpush.bf16.msra.mxu0 0
    %4109 = vmatpush.bf16.msra.mxu0 0
    %4110 = vmatpush.bf16.msra.mxu0 0
    %4111 = vmatpush.bf16.msra.mxu0 0
    %4112 = vmatpush.bf16.msra.mxu0 0
    %4113 = vmatpush.bf16.msra.mxu0 0
    %4114 = vmatpush.bf16.msra.mxu0 %v4084
    %4115 = vmatmul.bf16.gmra.mxu0 %v2608
    %v4116 = vpop.f32.mrf.mxu0
    %v4117 = vadd.f32 1e-08, %v4116
    %v4118 = vpop.f32.mrf.mxu0
    %4119 = vdwg.mxu0
    %4120 = vmatpush.bf16.msra.mxu0 0
    %4121 = vmatpush.bf16.msra.mxu0 0
    %4122 = vmatpush.bf16.msra.mxu0 0
    %4123 = vmatpush.bf16.msra.mxu0 0
    %4124 = vmatpush.bf16.msra.mxu0 0
    %4125 = vmatpush.bf16.msra.mxu0 0
    %4126 = vmatpush.bf16.msra.mxu0 0
    %4127 = vmatpush.bf16.msra.mxu0 %v4087
    %4128 = vmatmul.bf16.gmra.mxu0 %v2608
    %v4129 = vpop.f32.mrf.mxu0
    %v4130 = vadd.f32 1e-08, %v4129
    %v4131 = vpop.f32.mrf.mxu0
    %4132 = vdwg.mxu0
    %4133 = vmatpush.bf16.msra.mxu0 0
    %4134 = vmatpush.bf16.msra.mxu0 0
    %4135 = vmatpush.bf16.msra.mxu0 0
    %4136 = vmatpush.bf16.msra.mxu0 0
    %4137 = vmatpush.bf16.msra.mxu0 0
    %4138 = vmatpush.bf16.msra.mxu0 0
    %4139 = vmatpush.bf16.msra.mxu0 0
    %4140 = vmatpush.bf16.msra.mxu0 %v4090
    %4141 = vmatmul.bf16.gmra.mxu0 %v2608
    %v4142 = vpop.f32.mrf.mxu0
    %v4143 = vadd.f32 1e-08, %v4142
    %v4144 = vpop.f32.mrf.mxu0
    %4145 = vdwg.mxu0
    %4146 = vmatpush.bf16.msra.mxu0 0
    %4147 = vmatpush.bf16.msra.mxu0 0
    %4148 = vmatpush.bf16.msra.mxu0 0
    %4149 = vmatpush.bf16.msra.mxu0 0
    %4150 = vmatpush.bf16.msra.mxu0 0
    %4151 = vmatpush.bf16.msra.mxu0 0
    %4152 = vmatpush.bf16.msra.mxu0 0
    %4153 = vmatpush.bf16.msra.mxu0 %v4093
    %4154 = vmatmul.bf16.gmra.mxu0 %v2608
    %v4155 = vpop.f32.mrf.mxu0
    %v4156 = vadd.f32 1e-08, %v4155
    %v4157 = vpop.f32.mrf.mxu0
    %4158 = vdwg.mxu0
    %4159 = vmatpush.bf16.msra.mxu0 0
    %4160 = vmatpush.bf16.msra.mxu0 0
    %4161 = vmatpush.bf16.msra.mxu0 0
    %4162 = vmatpush.bf16.msra.mxu0 0
    %4163 = vmatpush.bf16.msra.mxu0 0
    %4164 = vmatpush.bf16.msra.mxu0 0
    %4165 = vmatpush.bf16.msra.mxu0 0
    %4166 = vmatpush.bf16.msra.mxu0 %v4096
    %4167 = vmatmul.bf16.gmra.mxu0 %v2608
    %v4168 = vpop.f32.mrf.mxu0
    %v4169 = vadd.f32 1e-08, %v4168
    %v4170 = vpop.f32.mrf.mxu0
    %4171 = vdwg.mxu0
    %4172 = vmatpush.bf16.msra.mxu0 0
    %4173 = vmatpush.bf16.msra.mxu0 0
    %4174 = vmatpush.bf16.msra.mxu0 0
    %4175 = vmatpush.bf16.msra.mxu0 0
    %4176 = vmatpush.bf16.msra.mxu0 0
    %4177 = vmatpush.bf16.msra.mxu0 0
    %4178 = vmatpush.bf16.msra.mxu0 0
    %4179 = vmatpush.bf16.msra.mxu0 %v4099
    %4180 = vmatmul.bf16.gmra.mxu0 %v2608
    %v4181 = vpop.f32.mrf.mxu0
    %v4182 = vadd.f32 1e-08, %v4181
    %v4183 = vpop.f32.mrf.mxu0
    %4184 = vdwg.mxu0
    %4185 = vmatpush.bf16.msra.mxu0 0
    %4186 = vmatpush.bf16.msra.mxu0 0
    %4187 = vmatpush.bf16.msra.mxu0 0
    %4188 = vmatpush.bf16.msra.mxu0 0
    %4189 = vmatpush.bf16.msra.mxu0 0
    %4190 = vmatpush.bf16.msra.mxu0 0
    %4191 = vmatpush.bf16.msra.mxu0 0
    %4192 = vmatpush.bf16.msra.mxu0 %v4102
    %4193 = vmatmul.bf16.gmra.mxu0 %v2608
    %v4194 = vpop.f32.mrf.mxu0
    %v4195 = vadd.f32 1e-08, %v4194
    %v4196 = vpop.f32.mrf.mxu0
    %4197 = vdwg.mxu0
    %4198 = vmatpush.bf16.msra.mxu0 0
    %4199 = vmatpush.bf16.msra.mxu0 0
    %4200 = vmatpush.bf16.msra.mxu0 0
    %4201 = vmatpush.bf16.msra.mxu0 0
    %4202 = vmatpush.bf16.msra.mxu0 0
    %4203 = vmatpush.bf16.msra.mxu0 0
    %4204 = vmatpush.bf16.msra.mxu0 0
    %4205 = vmatpush.bf16.msra.mxu0 %v4105
    %4206 = vmatmul.bf16.gmra.mxu0 %v2608
    %v4207 = vpop.f32.mrf.mxu0
    %v4208 = vadd.f32 1e-08, %v4207
    %v4209 = vpop.f32.mrf.mxu0
    %4210 = vdwg.mxu0
    %v4211 = vrcp.pop %v4117
    %v4212 = vrcp.pop %v4130
    %v4213 = vrcp.pop %v4143
    %v4214 = vrcp.pop %v4156
    %v4215 = vrcp.pop %v4169
    %v4216 = vrcp.pop %v4182
    %v4217 = vrcp.pop %v4195
    %v4218 = vrcp.pop %v4208
    %v4219 = vmul.f32 %v4117, %v4211
    %v4220 = vmul.f32 %v4130, %v4212
    %v4221 = vmul.f32 %v4143, %v4213
    %v4222 = vmul.f32 %v4156, %v4214
    %v4223 = vmul.f32 %v4169, %v4215
    %v4224 = vmul.f32 %v4182, %v4216
    %v4225 = vmul.f32 %v4195, %v4217
    %v4226 = vmul.f32 %v4208, %v4218
    %v4227 = vsub.f32 2.0, %v4219
    %v4228 = vsub.f32 2.0, %v4220
    %v4229 = vsub.f32 2.0, %v4221
    %v4230 = vsub.f32 2.0, %v4222
    %v4231 = vsub.f32 2.0, %v4223
    %v4232 = vsub.f32 2.0, %v4224
    %v4233 = vsub.f32 2.0, %v4225
    %v4234 = vsub.f32 2.0, %v4226
    %v4235 = vmul.f32 %v4211, %v4227
    %v4236 = vmul.f32 %v4212, %v4228
    %v4237 = vmul.f32 %v4213, %v4229
    %v4238 = vmul.f32 %v4214, %v4230
    %v4239 = vmul.f32 %v4215, %v4231
    %v4240 = vmul.f32 %v4216, %v4232
    %v4241 = vmul.f32 %v4217, %v4233
    %v4242 = vmul.f32 %v4218, %v4234
    %v4243 = vmul.f32 %v4067, %v2496
    %v4244 = vmul.f32 %v4068, %v2509
    %v4245 = vmul.f32 %v4069, %v2522
    %v4246 = vmul.f32 %v4070, %v2535
    %v4247 = vmul.f32 %v4071, %v2548
    %v4248 = vmul.f32 %v4072, %v2561
    %v4249 = vmul.f32 %v4073, %v2574
    %v4250 = vmul.f32 %v4074, %v2587
    %v4251 = vmul.f32 %v4243, %v4235
    %v4252 = vmul.f32 %v4244, %v4236
    %v4253 = vmul.f32 %v4245, %v4237
    %v4254 = vmul.f32 %v4246, %v4238
    %v4255 = vmul.f32 %v4247, %v4239
    %v4256 = vmul.f32 %v4248, %v4240
    %v4257 = vmul.f32 %v4249, %v4241
    %v4258 = vmul.f32 %v4250, %v4242
    %v4259 = vpack.c.bf16 %v4251, %v4251
    %v4260 = vpack.c.bf16 %v4252, %v4252
    %v4261 = vpack.c.bf16 %v4253, %v4253
    %v4262 = vpack.c.bf16 %v4254, %v4254
    %v4263 = vpack.c.bf16 %v4255, %v4255
    %v4264 = vpack.c.bf16 %v4256, %v4256
    %v4265 = vpack.c.bf16 %v4257, %v4257
    %v4266 = vpack.c.bf16 %v4258, %v4258
    %v4268 = vsel %vm2610, %v4259, 0
    %v4271 = vsel %vm2610, %v4260, 0
    %v4274 = vsel %vm2610, %v4261, 0
    %v4277 = vsel %vm2610, %v4262, 0
    %v4280 = vsel %vm2610, %v4263, 0
    %v4283 = vsel %vm2610, %v4264, 0
    %v4286 = vsel %vm2610, %v4265, 0
    %v4289 = vsel %vm2610, %v4266, 0
    %4291 = vmatpush.bf16.msra.mxu0 0
    %4292 = vmatpush.bf16.msra.mxu0 0
    %4293 = vmatpush.bf16.msra.mxu0 0
    %4294 = vmatpush.bf16.msra.mxu0 0
    %4295 = vmatpush.bf16.msra.mxu0 0
    %4296 = vmatpush.bf16.msra.mxu0 0
    %4297 = vmatpush.bf16.msra.mxu0 0
    %4298 = vmatpush.bf16.msra.mxu0 %v4268
    %4299 = vmatmul.bf16.gmra.mxu0 %v2608
    %v4300 = vpop.f32.mrf.mxu0
    %v4301 = vadd.f32 1e-08, %v4300
    %v4302 = vpop.f32.mrf.mxu0
    %4303 = vdwg.mxu0
    %4304 = vmatpush.bf16.msra.mxu0 0
    %4305 = vmatpush.bf16.msra.mxu0 0
    %4306 = vmatpush.bf16.msra.mxu0 0
    %4307 = vmatpush.bf16.msra.mxu0 0
    %4308 = vmatpush.bf16.msra.mxu0 0
    %4309 = vmatpush.bf16.msra.mxu0 0
    %4310 = vmatpush.bf16.msra.mxu0 0
    %4311 = vmatpush.bf16.msra.mxu0 %v4271
    %4312 = vmatmul.bf16.gmra.mxu0 %v2608
    %v4313 = vpop.f32.mrf.mxu0
    %v4314 = vadd.f32 1e-08, %v4313
    %v4315 = vpop.f32.mrf.mxu0
    %4316 = vdwg.mxu0
    %4317 = vmatpush.bf16.msra.mxu0 0
    %4318 = vmatpush.bf16.msra.mxu0 0
    %4319 = vmatpush.bf16.msra.mxu0 0
    %4320 = vmatpush.bf16.msra.mxu0 0
    %4321 = vmatpush.bf16.msra.mxu0 0
    %4322 = vmatpush.bf16.msra.mxu0 0
    %4323 = vmatpush.bf16.msra.mxu0 0
    %4324 = vmatpush.bf16.msra.mxu0 %v4274
    %4325 = vmatmul.bf16.gmra.mxu0 %v2608
    %v4326 = vpop.f32.mrf.mxu0
    %v4327 = vadd.f32 1e-08, %v4326
    %v4328 = vpop.f32.mrf.mxu0
    %4329 = vdwg.mxu0
    %4330 = vmatpush.bf16.msra.mxu0 0
    %4331 = vmatpush.bf16.msra.mxu0 0
    %4332 = vmatpush.bf16.msra.mxu0 0
    %4333 = vmatpush.bf16.msra.mxu0 0
    %4334 = vmatpush.bf16.msra.mxu0 0
    %4335 = vmatpush.bf16.msra.mxu0 0
    %4336 = vmatpush.bf16.msra.mxu0 0
    %4337 = vmatpush.bf16.msra.mxu0 %v4277
    %4338 = vmatmul.bf16.gmra.mxu0 %v2608
    %v4339 = vpop.f32.mrf.mxu0
    %v4340 = vadd.f32 1e-08, %v4339
    %v4341 = vpop.f32.mrf.mxu0
    %4342 = vdwg.mxu0
    %4343 = vmatpush.bf16.msra.mxu0 0
    %4344 = vmatpush.bf16.msra.mxu0 0
    %4345 = vmatpush.bf16.msra.mxu0 0
    %4346 = vmatpush.bf16.msra.mxu0 0
    %4347 = vmatpush.bf16.msra.mxu0 0
    %4348 = vmatpush.bf16.msra.mxu0 0
    %4349 = vmatpush.bf16.msra.mxu0 0
    %4350 = vmatpush.bf16.msra.mxu0 %v4280
    %4351 = vmatmul.bf16.gmra.mxu0 %v2608
    %v4352 = vpop.f32.mrf.mxu0
    %v4353 = vadd.f32 1e-08, %v4352
    %v4354 = vpop.f32.mrf.mxu0
    %4355 = vdwg.mxu0
    %4356 = vmatpush.bf16.msra.mxu0 0
    %4357 = vmatpush.bf16.msra.mxu0 0
    %4358 = vmatpush.bf16.msra.mxu0 0
    %4359 = vmatpush.bf16.msra.mxu0 0
    %4360 = vmatpush.bf16.msra.mxu0 0
    %4361 = vmatpush.bf16.msra.mxu0 0
    %4362 = vmatpush.bf16.msra.mxu0 0
    %4363 = vmatpush.bf16.msra.mxu0 %v4283
    %4364 = vmatmul.bf16.gmra.mxu0 %v2608
    %v4365 = vpop.f32.mrf.mxu0
    %v4366 = vadd.f32 1e-08, %v4365
    %v4367 = vpop.f32.mrf.mxu0
    %4368 = vdwg.mxu0
    %4369 = vmatpush.bf16.msra.mxu0 0
    %4370 = vmatpush.bf16.msra.mxu0 0
    %4371 = vmatpush.bf16.msra.mxu0 0
    %4372 = vmatpush.bf16.msra.mxu0 0
    %4373 = vmatpush.bf16.msra.mxu0 0
    %4374 = vmatpush.bf16.msra.mxu0 0
    %4375 = vmatpush.bf16.msra.mxu0 0
    %4376 = vmatpush.bf16.msra.mxu0 %v4286
    %4377 = vmatmul.bf16.gmra.mxu0 %v2608
    %v4378 = vpop.f32.mrf.mxu0
    %v4379 = vadd.f32 1e-08, %v4378
    %v4380 = vpop.f32.mrf.mxu0
    %4381 = vdwg.mxu0
    %4382 = vmatpush.bf16.msra.mxu0 0
    %4383 = vmatpush.bf16.msra.mxu0 0
    %4384 = vmatpush.bf16.msra.mxu0 0
    %4385 = vmatpush.bf16.msra.mxu0 0
    %4386 = vmatpush.bf16.msra.mxu0 0
    %4387 = vmatpush.bf16.msra.mxu0 0
    %4388 = vmatpush.bf16.msra.mxu0 0
    %4389 = vmatpush.bf16.msra.mxu0 %v4289
    %4390 = vmatmul.bf16.gmra.mxu0 %v2608
    %v4391 = vpop.f32.mrf.mxu0
    %v4392 = vadd.f32 1e-08, %v4391
    %v4393 = vpop.f32.mrf.mxu0
    %4394 = vdwg.mxu0
    %v4395 = vrcp.pop %v4301
    %v4396 = vrcp.pop %v4314
    %v4397 = vrcp.pop %v4327
    %v4398 = vrcp.pop %v4340
    %v4399 = vrcp.pop %v4353
    %v4400 = vrcp.pop %v4366
    %v4401 = vrcp.pop %v4379
    %v4402 = vrcp.pop %v4392
    %v4403 = vmul.f32 %v4301, %v4395
    %v4404 = vmul.f32 %v4314, %v4396
    %v4405 = vmul.f32 %v4327, %v4397
    %v4406 = vmul.f32 %v4340, %v4398
    %v4407 = vmul.f32 %v4353, %v4399
    %v4408 = vmul.f32 %v4366, %v4400
    %v4409 = vmul.f32 %v4379, %v4401
    %v4410 = vmul.f32 %v4392, %v4402
    %v4411 = vsub.f32 2.0, %v4403
    %v4412 = vsub.f32 2.0, %v4404
    %v4413 = vsub.f32 2.0, %v4405
    %v4414 = vsub.f32 2.0, %v4406
    %v4415 = vsub.f32 2.0, %v4407
    %v4416 = vsub.f32 2.0, %v4408
    %v4417 = vsub.f32 2.0, %v4409
    %v4418 = vsub.f32 2.0, %v4410
    %v4419 = vmul.f32 %v4395, %v4411
    %v4420 = vmul.f32 %v4396, %v4412
    %v4421 = vmul.f32 %v4397, %v4413
    %v4422 = vmul.f32 %v4398, %v4414
    %v4423 = vmul.f32 %v4399, %v4415
    %v4424 = vmul.f32 %v4400, %v4416
    %v4425 = vmul.f32 %v4401, %v4417
    %v4426 = vmul.f32 %v4402, %v4418
    %v4427 = vmul.f32 %v4251, %v2496
    %v4428 = vmul.f32 %v4252, %v2509
    %v4429 = vmul.f32 %v4253, %v2522
    %v4430 = vmul.f32 %v4254, %v2535
    %v4431 = vmul.f32 %v4255, %v2548
    %v4432 = vmul.f32 %v4256, %v2561
    %v4433 = vmul.f32 %v4257, %v2574
    %v4434 = vmul.f32 %v4258, %v2587
    %v4435 = vmul.f32 %v4427, %v4419
    %v4436 = vmul.f32 %v4428, %v4420
    %v4437 = vmul.f32 %v4429, %v4421
    %v4438 = vmul.f32 %v4430, %v4422
    %v4439 = vmul.f32 %v4431, %v4423
    %v4440 = vmul.f32 %v4432, %v4424
    %v4441 = vmul.f32 %v4433, %v4425
    %v4442 = vmul.f32 %v4434, %v4426
    %4443 = vst [vmem:[#allocation12] sm:$0xff] %v4435
    %4444 = vst [vmem:[#allocation12 + $0x8] sm:$0xff] %v4436
    %4445 = vst [vmem:[#allocation12 + $0x10] sm:$0xff] %v4437
    %4446 = vst [vmem:[#allocation12 + $0x18] sm:$0xff] %v4438
    %4447 = vst [vmem:[#allocation12 + $0x20] sm:$0xff] %v4439
    %4448 = vst [vmem:[#allocation12 + $0x28] sm:$0xff] %v4440
    %4449 = vst [vmem:[#allocation12 + $0x30] sm:$0xff] %v4441
    %4450 = vst [vmem:[#allocation12 + $0x38] sm:$0xff] %v4442
    // Predicated region
    $region42: #{tpu_custom_call.1} parent=1 // pred_check
      _
    $region43: #{tpu_custom_call.1} parent=1 // pred_check_branch
      %4452 = sbr.rel (0) target = $region45
    $region44: #{tpu_custom_call.1} parent=1 // pred_region
      %4454 = vsyncadd [#allocation4], 0
      %s4455 = sshll.u32 [#allocation11], 4
      %s4456 = int_to_ptr.vmem [resolvable:$true] %s4455
      %s4457 = sshll.u32 %s5, 4
      %s4458 = int_to_ptr.hbm [resolvable:$true] %s4457
      %4463 = dma.vmem_to_hbm [thread:$0]  %s4456, 2048, %s4458, [#allocation4], 1024, 1024, 64
    $region45: #{tpu_custom_call.1} parent=1 // pred_fallthru
      _
    // Predicated region
    $region46: #{tpu_custom_call.1} parent=1 // pred_check
      _
    $region47: #{tpu_custom_call.1} parent=1 // pred_check_branch
      %4465 = sbr.rel (0) target = $region49
    $region48: #{tpu_custom_call.1} parent=1 // pred_region
      %4467 = vsyncadd [#allocation13], 0
      %s4469 = sshll.u32 [#allocation12], 4
      %s4470 = int_to_ptr.vmem [resolvable:$true] %s4469
      %s4471 = sshll.u32 %s6, 4
      %s4472 = int_to_ptr.hbm [resolvable:$true] %s4471
      %4474 = dma.vmem_to_hbm [thread:$0]  %s4470, 1024, %s4472, [#allocation13]
    $region49: #{tpu_custom_call.1} parent=1 // pred_fallthru
      _
    // Predicated region
    $region50: #{tpu_custom_call.1} parent=1 // pred_check
      _
    $region51: #{tpu_custom_call.1} parent=1 // pred_check_branch
      %4476 = sbr.rel (0) target = $region53
    $region52: #{tpu_custom_call.1} parent=1 // pred_region
      %4478 = dma.done [#allocation4], 2048
    $region53: #{tpu_custom_call.1} parent=1 // pred_fallthru
      _
    // Predicated region
    $region54: #{tpu_custom_call.1} parent=1 // pred_check
      _
    $region55: #{tpu_custom_call.1} parent=1 // pred_check_branch
      %4480 = sbr.rel (0) target = $region57
    $region56: #{tpu_custom_call.1} parent=1 // pred_region
      %4482 = dma.done [#allocation13], 1024
    $region57: #{tpu_custom_call.1} parent=1 // pred_fallthru
      _
    %4483 = vsyncpa [#allocation3], 1
    %4484 = vsyncpa [#allocation6], 1
    %4485 = vsyncpa [#allocation9], 1
    %4486 = vsyncpa [#allocation4], 1
    %4487 = vsyncpa [#allocation13], 1

</llo_original>
